<compile_context>
chip_gen: v5e
topology: v5e:2x2
jax: 0.10.0
libtpu: 0.0.40
codegen_flags: <defaults>
</compile_context>

<pallas_src>
import functools

import jax
import jax.numpy as jnp
from jax.experimental import pallas as pl
from jax.experimental.pallas import tpu as pltpu

LANE = 128   # channel / node padding target (lane-dense layouts)
MIB = 1 << 20


def _round_up(x, m):
    return ((x + m - 1) // m) * m


# -----------------------------------------------------------------------------
# Shared in-kernel helpers (used by both the fused and the row-tiled path)
# -----------------------------------------------------------------------------
def _layernorm_relu(y, aff, cout):
    """LayerNorm over the real `cout` channels + ReLU, single-pass E[y^2]-mean^2.

    Padded lanes of y are exactly 0 (zero-padded weight columns / biases), so sums
    over all 128 lanes equal sums over the real lanes; gamma/beta are zero-padded,
    so padded lanes of the result stay exactly 0 for the next layer."""
    inv_c = 1.0 / float(cout)
    mean = jnp.sum(y, axis=-1, keepdims=True) * inv_c
    var = jnp.maximum(jnp.sum(y * y, axis=-1, keepdims=True) * inv_c - mean * mean, 0.0)
    yn = (y - mean) * jax.lax.rsqrt(var + 1e-5) * aff[1:2, :] + aff[2:3, :]
    # ReLU; dropout is identity in eval mode.
    return jnp.maximum(yn, 0.0).astype(jnp.bfloat16)


def _link_head(pool_f32, lp, cp, w1, w2, maff):
    """pool_f32: (2*lp, cp) mean-pooled graph embeddings, rows [:lp]=src, [lp:]=tgt.
    Linear -> ReLU -> Linear -> ReLU -> Linear(.,1) as VPU row-dot -> sigmoid."""
    emb = pool_f32.astype(jnp.bfloat16)
    h1 = (jnp.dot(emb[:lp], w1[:cp], preferred_element_type=jnp.float32)
          + jnp.dot(emb[lp:], w1[cp:], preferred_element_type=jnp.float32)
          + maff[0:1, :])
    h1 = jnp.maximum(h1, 0.0)
    h2 = jnp.dot(h1.astype(jnp.bfloat16), w2,
                 preferred_element_type=jnp.float32) + maff[1:2, :]
    h2 = jnp.maximum(h2, 0.0)
    # final Linear(out//2, 1) as VPU mul + lane reduction (no 1-column matmul)
    logit = jnp.sum(h2 * maff[2:3, :], axis=-1, keepdims=True) + maff[3:4, :]
    return jax.nn.sigmoid(logit)        # lane-dense (lp, cp)


# -----------------------------------------------------------------------------
# Kernels
# -----------------------------------------------------------------------------
def make_fused_kernel(channel_dims, lp, cp):
    """Whole forward in one kernel (graph resident in VMEM)."""

    def kernel(a_ref, x_ref,
               w1_ref, w2_ref, w3_ref, w4_ref,
               aff1_ref, aff2_ref, aff3_ref, aff4_ref,
               plinks_ref, invcnt_ref, mlp_w1_ref, mlp_w2_ref, mlp_aff_ref,
               o_ref):
        a = a_ref[...]                      # (Np, Np) bf16, resident for all 4 layers
        h = x_ref[...]                      # (Np, Cp) bf16, padded lanes exactly 0

        for w_ref, aff_ref, cout in zip((w1_ref, w2_ref, w3_ref, w4_ref),
                                        (aff1_ref, aff2_ref, aff3_ref, aff4_ref),
                                        channel_dims):
            aff = aff_ref[...]
            # Merged conv + residual projection: one (Np,Cp)@(Cp,2Cp) bf16 MXU op.
            xw_cat = jnp.dot(h, w_ref[...], preferred_element_type=jnp.float32)
            # GCN aggregation: A_hat @ (X Wc)
            agg = jnp.dot(a, xw_cat[:, :cp].astype(jnp.bfloat16),
                          preferred_element_type=jnp.float32)
            # conv bias + residual bias folded into aff row 0
            y = agg + xw_cat[:, cp:] + aff[0:1, :]
            h = _layernorm_relu(y, aff, cout)

        # Fused mean-pool + link-endpoint gather: exact one-hot selection matmul,
        # 1/|graph| applied afterwards in f32 (no bf16 rounding of pool weights).
        pool = jnp.dot(plinks_ref[...], h, preferred_element_type=jnp.float32)
        pool = pool * invcnt_ref[...]
        o_ref[...] = _link_head(pool, lp, cp, mlp_w1_ref[...], mlp_w2_ref[...],
                                mlp_aff_ref[...])

    return kernel


def make_layer_kernel(cout, cp):
    """One GCN layer on a row tile of A (megacore/scaling path).

    Uses (A @ h) @ Wc ordering so nothing outside the tile's rows is recomputed:
    the dominant (TM,Np)@(Np,Cp) matmul streams only this tile's A rows."""

    def kernel(a_ref, hfull_ref, hrow_ref, w_ref, aff_ref, o_ref):
        aff = aff_ref[...]
        w = w_ref[...]
        ah = jnp.dot(a_ref[...], hfull_ref[...], preferred_element_type=jnp.float32)
        agg = jnp.dot(ah.astype(jnp.bfloat16), w[:, :cp],
                      preferred_element_type=jnp.float32)
        xr = jnp.dot(hrow_ref[...], w[:, cp:], preferred_element_type=jnp.float32)
        y = agg + xr + aff[0:1, :]
        o_ref[...] = _layernorm_relu(y, aff, cout)

    return kernel


def make_head_kernel(lp, cp):
    """Mean-pool + link gather + link MLP (used by the row-tiled path)."""

    def kernel(plinks_ref, invcnt_ref, h_ref, w1_ref, w2_ref, maff_ref, o_ref):
        pool = jnp.dot(plinks_ref[...], h_ref[...], preferred_element_type=jnp.float32)
        pool = pool * invcnt_ref[...]
        o_ref[...] = _link_head(pool, lp, cp, w1_ref[...], w2_ref[...], maff_ref[...])

    return kernel


# -----------------------------------------------------------------------------
# Wrapper-side prep: adjacency, pooling selection, parameter init / padding
# -----------------------------------------------------------------------------
def build_padded_adjacency(edge_index, n, np_):
    """D^-1/2 (A + I) D^-1/2 (PyG GCNConv normalization, self-loops deduplicated),
    built directly into the 128-padded buffer (single Np^2 buffer, single cast)."""
    a = jnp.zeros((np_, np_), jnp.float32)
    a = a.at[edge_index[1], edge_index[0]].set(1.0)          # message flows src -> dst
    idx = jnp.arange(n)
    a = a.at[idx, idx].max(jnp.ones((n,), jnp.float32))      # add self-loops, no doubling
    deg = jnp.sum(a, axis=1)
    dinv = jnp.where(deg > 0, jax.lax.rsqrt(deg), 0.0)
    return (dinv[:, None] * a * dinv[None, :]).astype(jnp.bfloat16)


def build_link_pool_inputs(batch, link_indices, num_graphs, n, np_, l, lp, cp):
    """Exact 0/1 selection matrix (rows [:lp] pick src-graph nodes, [lp:] tgt-graph
    nodes) plus per-row 1/|graph| factors kept in f32 (applied inside the kernel)."""
    counts = jnp.zeros((num_graphs,), jnp.float32).at[batch].add(1.0)
    inv = 1.0 / jnp.maximum(counts, 1.0)
    sel_src = (batch[None, :] == link_indices[0][:, None]).astype(jnp.float32)   # (L, N)
    sel_tgt = (batch[None, :] == link_indices[1][:, None]).astype(jnp.float32)
    plinks = jnp.zeros((2 * lp, np_), jnp.float32)
    plinks = plinks.at[:l, :n].set(sel_src).at[lp:lp + l, :n].set(sel_tgt)
    plinks = plinks.astype(jnp.bfloat16)          # entries are exactly 0/1 -> no rounding
    inv_rows = jnp.zeros((2 * lp,), jnp.float32)
    inv_rows = inv_rows.at[:l].set(inv[link_indices[0]]).at[lp:lp + l].set(inv[link_indices[1]])
    invcnt = jnp.broadcast_to(inv_rows[:, None], (2 * lp, cp))   # lane-dense f32
    return plinks, invcnt


def init_params(key, in_channels, hidden_channels, out_channels):
    h2 = hidden_channels // 2
    h3 = hidden_channels // 4
    dims = [(in_channels, hidden_channels), (hidden_channels, h2),
            (h2, h3), (h3, out_channels)]
    params = {}
    keys = jax.random.split(key, 32)
    ki = 0
    for li, (cin, cout) in enumerate(dims, start=1):
        s = 1.0 / jnp.sqrt(jnp.float32(cin))
        params[f"conv{li}_w"] = jax.random.uniform(keys[ki], (cin, cout), jnp.float32, -s, s); ki += 1
        params[f"conv{li}_b"] = jax.random.uniform(keys[ki], (cout,), jnp.float32, -s, s); ki += 1
        params[f"res{li}_w"] = jax.random.uniform(keys[ki], (cin, cout), jnp.float32, -s, s); ki += 1
        params[f"res{li}_b"] = jax.random.uniform(keys[ki], (cout,), jnp.float32, -s, s); ki += 1
        params[f"ln{li}_g"] = jnp.ones((cout,), jnp.float32)
        params[f"ln{li}_b"] = jnp.zeros((cout,), jnp.float32)
    # torch: res1 is identity when in_channels == hidden_channels
    if in_channels == hidden_channels:
        params["res1_w"] = jnp.eye(in_channels, dtype=jnp.float32)
        params["res1_b"] = jnp.zeros((hidden_channels,), jnp.float32)
    # link MLP: 2*out -> out -> out//2 -> 1
    mlp_dims = [(2 * out_channels, out_channels),
                (out_channels, out_channels // 2),
                (out_channels // 2, 1)]
    for mi, (cin, cout) in enumerate(mlp_dims, start=1):
        s = 1.0 / jnp.sqrt(jnp.float32(cin))
        params[f"mlp{mi}_w"] = jax.random.uniform(keys[ki], (cin, cout), jnp.float32, -s, s); ki += 1
        params[f"mlp{mi}_b"] = jax.random.uniform(keys[ki], (cout,), jnp.float32, -s, s); ki += 1
    return params


def prepare_padded_params(params, in_channels, hidden_channels, out_channels, cp=LANE):
    """Pad weights to 128-lane layouts once (outside jit): merged conv/res weights,
    folded biases, packed affine rows.  bf16 for MXU operands, f32 for affine rows."""
    h2 = hidden_channels // 2
    h3 = hidden_channels // 4
    dims = [(in_channels, hidden_channels), (hidden_channels, h2),
            (h2, h3), (h3, out_channels)]
    padded = {}
    for li, (cin, cout) in enumerate(dims, start=1):
        wcat = jnp.zeros((cp, 2 * cp), jnp.float32)
        wcat = wcat.at[:cin, :cout].set(params[f"conv{li}_w"])
        wcat = wcat.at[:cin, cp:cp + cout].set(params[f"res{li}_w"])
        padded[f"wcat{li}"] = wcat.astype(jnp.bfloat16)
        aff = jnp.zeros((3, cp), jnp.float32)
        aff = aff.at[0, :cout].set(params[f"conv{li}_b"] + params[f"res{li}_b"])
        aff = aff.at[1, :cout].set(params[f"ln{li}_g"])
        aff = aff.at[2, :cout].set(params[f"ln{li}_b"])
        padded[f"aff{li}"] = aff

    oc, oc2 = out_channels, out_channels // 2
    # mlp1: src half of the weight maps rows [0:cp], tgt half rows [cp:2cp]
    mw1 = jnp.zeros((2 * cp, cp), jnp.float32)
    mw1 = mw1.at[:oc, :oc].set(params["mlp1_w"][:oc, :])
    mw1 = mw1.at[cp:cp + oc, :oc].set(params["mlp1_w"][oc:, :])
    padded["mlp_w1"] = mw1.astype(jnp.bfloat16)
    mw2 = jnp.zeros((cp, cp), jnp.float32)
    mw2 = mw2.at[:oc, :oc2].set(params["mlp2_w"])
    padded["mlp_w2"] = mw2.astype(jnp.bfloat16)
    maff = jnp.zeros((4, cp), jnp.float32)
    maff = maff.at[0, :oc].set(params["mlp1_b"])
    maff = maff.at[1, :oc2].set(params["mlp2_b"])
    maff = maff.at[2, :oc2].set(params["mlp3_w"][:, 0])
    maff = maff.at[3, :].set(params["mlp3_b"][0])          # b3 broadcast over all lanes
    padded["mlp_aff"] = maff
    return padded


# -----------------------------------------------------------------------------
# Forward
# -----------------------------------------------------------------------------
@functools.partial(jax.jit,
                   static_argnames=("num_graphs", "channel_dims", "row_tile"))
def improved_seal_forward(padded_params, x, edge_index, batch, link_indices,
                          num_graphs, channel_dims, row_tile=None):
    n, cin = x.shape
    l = link_indices.shape[1]
    cp = LANE
    np_ = max(LANE, _round_up(n, LANE))     # node dim padded -> lane-dense A_hat
    lp = max(8, _round_up(l, 8))            # link dim padded -> sublane aligned

    a_pad = build_padded_adjacency(edge_index, n, np_)
    x_pad = jnp.zeros((np_, cp), jnp.float32).at[:n, :cin].set(x).astype(jnp.bfloat16)
    plinks, invcnt = build_link_pool_inputs(batch, link_indices, num_graphs,
                                            n, np_, l, lp, cp)

    param_bytes = sum(int(v.size) * v.dtype.itemsize for v in padded_params.values())

    if row_tile is None:
        # ---- fused single-kernel path (graph resident in VMEM) ----
        flops = 0
        for _cout in channel_dims:
            flops += 2 * np_ * cp * (2 * cp) + 2 * np_ * np_ * cp
        flops += 2 * (2 * lp) * np_ * cp + 4 * lp * cp * cp + 2 * lp * cp * cp + 2 * lp * cp
        io_bytes = (2 * np_ * np_ + 2 * np_ * cp + 2 * (2 * lp) * np_
                    + 4 * (2 * lp) * cp + param_bytes + 4 * lp * cp)
        vmem = (io_bytes + 24 * np_ * cp * 4 + 8 * (2 * lp) * cp * 4)
        vmem = min(max(int(vmem * 1.25) + 2 * MIB, 32 * MIB), 100 * MIB)

        out = pl.pallas_call(
            make_fused_kernel(channel_dims, lp, cp),
            out_shape=jax.ShapeDtypeStruct((lp, cp), jnp.float32),
            compiler_params=pltpu.CompilerParams(vmem_limit_bytes=vmem),
            cost_estimate=pl.CostEstimate(
                flops=int(flops),
                transcendentals=int(len(channel_dims) * np_ + lp * cp),
                bytes_accessed=int(io_bytes)),
        )(a_pad, x_pad,
          padded_params["wcat1"], padded_params["wcat2"],
          padded_params["wcat3"], padded_params["wcat4"],
          padded_params["aff1"], padded_params["aff2"],
          padded_params["aff3"], padded_params["aff4"],
          plinks, invcnt,
          padded_params["mlp_w1"], padded_params["mlp_w2"], padded_params["mlp_aff"])
        return out[:l, 0]                   # (L,) link probabilities

    # ---- row-tiled megacore/scaling path ----
    # Grid over A row tiles marked "parallel" (v7x megacore shards the row axis);
    # h round-trips HBM between layers (4 * Np*128*2 B, negligible vs Np^2 A traffic).
    tm = row_tile
    assert tm % 8 == 0 and np_ % tm == 0, "row_tile must be a multiple of 8 dividing padded N"

    h = x_pad
    for li, cout in enumerate(channel_dims, start=1):
        vmem = (2 * 2 * tm * np_            # double-buffered bf16 A row tile
                + 2 * np_ * cp              # resident full h (bf16)
                + 4 * 2 * tm * cp           # h row tile + out tile (bf16, dbl-buffered)
                + 2 * cp * 2 * cp + 4 * 3 * cp
                + 16 * tm * cp * 4)         # f32 working set
        vmem = min(max(int(vmem * 1.5) + 2 * MIB, 32 * MIB), 100 * MIB)
        h = pl.pallas_call(
            make_layer_kernel(cout, cp),
            out_shape=jax.ShapeDtypeStruct((np_, cp), jnp.bfloat16),
            grid_spec=pltpu.PrefetchScalarGridSpec(
                num_scalar_prefetch=0,
                grid=(np_ // tm,),
                in_specs=[pl.BlockSpec((tm, np_), lambda i: (i, 0)),   # A row tile
                          pl.BlockSpec((np_, cp), lambda i: (0, 0)),   # full h (resident)
                          pl.BlockSpec((tm, cp), lambda i: (i, 0)),    # h row tile (residual)
                          pl.BlockSpec((cp, 2 * cp), lambda i: (0, 0)),
                          pl.BlockSpec((3, cp), lambda i: (0, 0))],
                out_specs=pl.BlockSpec((tm, cp), lambda i: (i, 0))),
            compiler_params=pltpu.CompilerParams(
                dimension_semantics=("parallel",),
                vmem_limit_bytes=vmem),
        )(a_pad, h, h, padded_params[f"wcat{li}"], padded_params[f"aff{li}"])

    out = pl.pallas_call(
        make_head_kernel(lp, cp),
        out_shape=jax.ShapeDtypeStruct((lp, cp), jnp.float32),
        compiler_params=pltpu.CompilerParams(vmem_limit_bytes=32 * MIB),
    )(plinks, invcnt, h,
      padded_params["mlp_w1"], padded_params["mlp_w2"], padded_params["mlp_aff"])
    return out[:l, 0]


if __name__ == "__main__":
    in_channels, hidden_channels, out_channels = 8, 32, 8
    num_nodes, num_graphs, num_links = 16, 2, 4
    channel_dims = (hidden_channels, hidden_channels // 2,
                    hidden_channels // 4, out_channels)

    key = jax.random.PRNGKey(0)
    k_x, k_p = jax.random.split(key)

    # node features (N, C_in)
    x = jax.random.normal(k_x, (num_nodes, in_channels), jnp.float32)

    # two 8-node ring graphs (directed edges both ways), nodes 0-7 and 8-15
    edges = []
    for base in (0, 8):
        for i in range(8):
            a, b = base + i, base + (i + 1) % 8
            edges.append((a, b))
            edges.append((b, a))
    edge_index = jnp.array(edges, jnp.int32).T            # (2, E)

    batch = jnp.array([0] * 8 + [1] * 8, jnp.int32)        # node -> graph id
    link_indices = jnp.array([[0, 1, 0, 1],
                              [1, 0, 0, 1]], jnp.int32)    # (2, L) graph-id pairs

    params = init_params(k_p, in_channels, hidden_channels, out_channels)
    padded_params = prepare_padded_params(params, in_channels, hidden_channels,
                                          out_channels)

    # Fused single-kernel path (default)
    out_fused = improved_seal_forward(padded_params, x, edge_index, batch, link_indices,
                                      num_graphs=num_graphs, channel_dims=channel_dims)
    out_fused = jax.block_until_ready(out_fused)
    assert out_fused.shape == (num_links,)
    assert bool(jnp.all(jnp.isfinite(out_fused)))
    assert bool(jnp.all((out_fused >= 0.0) & (out_fused <= 1.0)))

    # Row-tiled megacore/scaling path (exercises the grid with 16 row tiles of 8)
    out_tiled = improved_seal_forward(padded_params, x, edge_index, batch, link_indices,
                                      num_graphs=num_graphs, channel_dims=channel_dims,
                                      row_tile=8)
    out_tiled = jax.block_until_ready(out_tiled)
    assert out_tiled.shape == (num_links,)
    assert bool(jnp.all(jnp.isfinite(out_tiled)))
    assert bool(jnp.all((out_tiled >= 0.0) & (out_tiled <= 1.0)))

    # Paths differ only in bf16 rounding order of the aggregation matmuls.
    assert bool(jnp.allclose(out_fused, out_tiled, atol=0.1))

    print("KERNEL_OK")
</pallas_src>

<mosaic_0001>
module attributes {stable_mosaic.version = 11 : i64} {
  func.func @kernel(%arg0: memref<128x128xbf16, #tpu.memory_space<vmem>>, %arg1: memref<128x128xbf16, #tpu.memory_space<vmem>>, %arg2: memref<128x256xbf16, #tpu.memory_space<vmem>>, %arg3: memref<128x256xbf16, #tpu.memory_space<vmem>>, %arg4: memref<128x256xbf16, #tpu.memory_space<vmem>>, %arg5: memref<128x256xbf16, #tpu.memory_space<vmem>>, %arg6: memref<3x128xf32, #tpu.memory_space<vmem>>, %arg7: memref<3x128xf32, #tpu.memory_space<vmem>>, %arg8: memref<3x128xf32, #tpu.memory_space<vmem>>, %arg9: memref<3x128xf32, #tpu.memory_space<vmem>>, %arg10: memref<16x128xbf16, #tpu.memory_space<vmem>>, %arg11: memref<16x128xf32, #tpu.memory_space<vmem>>, %arg12: memref<256x128xbf16, #tpu.memory_space<vmem>>, %arg13: memref<128x128xbf16, #tpu.memory_space<vmem>>, %arg14: memref<4x128xf32, #tpu.memory_space<vmem>>, %arg15: memref<8x128xf32, #tpu.memory_space<vmem>>) attributes {dimension_semantics = [], scalar_prefetch = 0 : i64, scratch_operands = 0 : i64, tpu.core_type = #tpu.core_type<tc>} {
    %c0 = arith.constant 0 : index
    %c0_0 = arith.constant 0 : index
    %0 = vector.load %arg0[%c0, %c0_0] : memref<128x128xbf16, #tpu.memory_space<vmem>>, vector<128x128xbf16>
    %c0_1 = arith.constant 0 : index
    %c0_2 = arith.constant 0 : index
    %1 = vector.load %arg1[%c0_1, %c0_2] : memref<128x128xbf16, #tpu.memory_space<vmem>>, vector<128x128xbf16>
    %c0_3 = arith.constant 0 : index
    %c0_4 = arith.constant 0 : index
    %2 = vector.load %arg6[%c0_3, %c0_4] : memref<3x128xf32, #tpu.memory_space<vmem>>, vector<3x128xf32>
    %c0_5 = arith.constant 0 : index
    %c0_6 = arith.constant 0 : index
    %3 = vector.load %arg2[%c0_5, %c0_6] : memref<128x256xbf16, #tpu.memory_space<vmem>>, vector<128x256xbf16>
    %cst = arith.constant dense<0.000000e+00> : vector<128x256xf32>
    %4 = tpu.matmul %1, %3, %cst {dimension_numbers = #tpu.dot_dimension_numbers<[1], [0], [0], [1], [0, 0, 1, 1], [], []>} : vector<128x128xbf16>, vector<128x256xbf16>, vector<128x256xf32> -> vector<128x256xf32>
    %5 = vector.extract_strided_slice %4 {offsets = [0, 0], sizes = [128, 128], strides = [1, 1]} : vector<128x256xf32> to vector<128x128xf32>
    %6 = arith.truncf %5 : vector<128x128xf32> to vector<128x128xbf16>
    %cst_7 = arith.constant dense<0.000000e+00> : vector<128x128xf32>
    %7 = tpu.matmul %0, %6, %cst_7 {dimension_numbers = #tpu.dot_dimension_numbers<[1], [0], [0], [1], [0, 0, 1, 1], [], []>} : vector<128x128xbf16>, vector<128x128xbf16>, vector<128x128xf32> -> vector<128x128xf32>
    %8 = vector.extract_strided_slice %4 {offsets = [0, 128], sizes = [128, 128], strides = [1, 1]} : vector<128x256xf32> to vector<128x128xf32>
    %9 = arith.addf %7, %8 : vector<128x128xf32>
    %10 = vector.extract_strided_slice %2 {offsets = [0, 0], sizes = [1, 128], strides = [1, 1]} : vector<3x128xf32> to vector<1x128xf32>
    %11 = vector.broadcast %10 : vector<1x128xf32> to vector<128x128xf32>
    %12 = arith.addf %9, %11 : vector<128x128xf32>
    %cst_8 = arith.constant dense<0.000000e+00> : vector<128xf32>
    %13 = vector.multi_reduction <add>, %12, %cst_8 [1] : vector<128x128xf32> to vector<128xf32>
    %14 = vector.shape_cast %13 : vector<128xf32> to vector<128x1xf32>
    %cst_9 = arith.constant 3.125000e-02 : f32
    %15 = vector.broadcast %cst_9 : f32 to vector<128x1xf32>
    %16 = arith.mulf %14, %15 : vector<128x1xf32>
    %17 = arith.mulf %12, %12 : vector<128x128xf32>
    %cst_10 = arith.constant dense<0.000000e+00> : vector<128xf32>
    %18 = vector.multi_reduction <add>, %17, %cst_10 [1] : vector<128x128xf32> to vector<128xf32>
    %19 = vector.shape_cast %18 : vector<128xf32> to vector<128x1xf32>
    %cst_11 = arith.constant 3.125000e-02 : f32
    %20 = vector.broadcast %cst_11 : f32 to vector<128x1xf32>
    %21 = arith.mulf %19, %20 : vector<128x1xf32>
    %22 = arith.mulf %16, %16 : vector<128x1xf32>
    %23 = arith.subf %21, %22 : vector<128x1xf32>
    %cst_12 = arith.constant 0.000000e+00 : f32
    %24 = vector.broadcast %cst_12 : f32 to vector<128x1xf32>
    %25 = arith.maximumf %23, %24 : vector<128x1xf32>
    %26 = vector.broadcast %16 : vector<128x1xf32> to vector<128x128xf32>
    %27 = arith.subf %12, %26 : vector<128x128xf32>
    %cst_13 = arith.constant 9.99999974E-6 : f32
    %28 = vector.broadcast %cst_13 : f32 to vector<128x1xf32>
    %29 = arith.addf %25, %28 : vector<128x1xf32>
    %30 = math.rsqrt %29 : vector<128x1xf32>
    %31 = vector.broadcast %30 : vector<128x1xf32> to vector<128x128xf32>
    %32 = arith.mulf %27, %31 : vector<128x128xf32>
    %33 = vector.extract_strided_slice %2 {offsets = [1, 0], sizes = [1, 128], strides = [1, 1]} : vector<3x128xf32> to vector<1x128xf32>
    %34 = vector.broadcast %33 : vector<1x128xf32> to vector<128x128xf32>
    %35 = arith.mulf %32, %34 : vector<128x128xf32>
    %36 = vector.extract_strided_slice %2 {offsets = [2, 0], sizes = [1, 128], strides = [1, 1]} : vector<3x128xf32> to vector<1x128xf32>
    %37 = vector.broadcast %36 : vector<1x128xf32> to vector<128x128xf32>
    %38 = arith.addf %35, %37 : vector<128x128xf32>
    %cst_14 = arith.constant 0.000000e+00 : f32
    %39 = vector.broadcast %cst_14 : f32 to vector<128x128xf32>
    %40 = arith.maximumf %38, %39 : vector<128x128xf32>
    %41 = arith.truncf %40 : vector<128x128xf32> to vector<128x128xbf16>
    %c0_15 = arith.constant 0 : index
    %c0_16 = arith.constant 0 : index
    %42 = vector.load %arg7[%c0_15, %c0_16] : memref<3x128xf32, #tpu.memory_space<vmem>>, vector<3x128xf32>
    %c0_17 = arith.constant 0 : index
    %c0_18 = arith.constant 0 : index
    %43 = vector.load %arg3[%c0_17, %c0_18] : memref<128x256xbf16, #tpu.memory_space<vmem>>, vector<128x256xbf16>
    %cst_19 = arith.constant dense<0.000000e+00> : vector<128x256xf32>
    %44 = tpu.matmul %41, %43, %cst_19 {dimension_numbers = #tpu.dot_dimension_numbers<[1], [0], [0], [1], [0, 0, 1, 1], [], []>} : vector<128x128xbf16>, vector<128x256xbf16>, vector<128x256xf32> -> vector<128x256xf32>
    %45 = vector.extract_strided_slice %44 {offsets = [0, 0], sizes = [128, 128], strides = [1, 1]} : vector<128x256xf32> to vector<128x128xf32>
    %46 = arith.truncf %45 : vector<128x128xf32> to vector<128x128xbf16>
    %cst_20 = arith.constant dense<0.000000e+00> : vector<128x128xf32>
    %47 = tpu.matmul %0, %46, %cst_20 {dimension_numbers = #tpu.dot_dimension_numbers<[1], [0], [0], [1], [0, 0, 1, 1], [], []>} : vector<128x128xbf16>, vector<128x128xbf16>, vector<128x128xf32> -> vector<128x128xf32>
    %48 = vector.extract_strided_slice %44 {offsets = [0, 128], sizes = [128, 128], strides = [1, 1]} : vector<128x256xf32> to vector<128x128xf32>
    %49 = arith.addf %47, %48 : vector<128x128xf32>
    %50 = vector.extract_strided_slice %42 {offsets = [0, 0], sizes = [1, 128], strides = [1, 1]} : vector<3x128xf32> to vector<1x128xf32>
    %51 = vector.broadcast %50 : vector<1x128xf32> to vector<128x128xf32>
    %52 = arith.addf %49, %51 : vector<128x128xf32>
    %cst_21 = arith.constant dense<0.000000e+00> : vector<128xf32>
    %53 = vector.multi_reduction <add>, %52, %cst_21 [1] : vector<128x128xf32> to vector<128xf32>
    %54 = vector.shape_cast %53 : vector<128xf32> to vector<128x1xf32>
    %cst_22 = arith.constant 6.250000e-02 : f32
    %55 = vector.broadcast %cst_22 : f32 to vector<128x1xf32>
    %56 = arith.mulf %54, %55 : vector<128x1xf32>
    %57 = arith.mulf %52, %52 : vector<128x128xf32>
    %cst_23 = arith.constant dense<0.000000e+00> : vector<128xf32>
    %58 = vector.multi_reduction <add>, %57, %cst_23 [1] : vector<128x128xf32> to vector<128xf32>
    %59 = vector.shape_cast %58 : vector<128xf32> to vector<128x1xf32>
    %cst_24 = arith.constant 6.250000e-02 : f32
    %60 = vector.broadcast %cst_24 : f32 to vector<128x1xf32>
    %61 = arith.mulf %59, %60 : vector<128x1xf32>
    %62 = arith.mulf %56, %56 : vector<128x1xf32>
    %63 = arith.subf %61, %62 : vector<128x1xf32>
    %cst_25 = arith.constant 0.000000e+00 : f32
    %64 = vector.broadcast %cst_25 : f32 to vector<128x1xf32>
    %65 = arith.maximumf %63, %64 : vector<128x1xf32>
    %66 = vector.broadcast %56 : vector<128x1xf32> to vector<128x128xf32>
    %67 = arith.subf %52, %66 : vector<128x128xf32>
    %cst_26 = arith.constant 9.99999974E-6 : f32
    %68 = vector.broadcast %cst_26 : f32 to vector<128x1xf32>
    %69 = arith.addf %65, %68 : vector<128x1xf32>
    %70 = math.rsqrt %69 : vector<128x1xf32>
    %71 = vector.broadcast %70 : vector<128x1xf32> to vector<128x128xf32>
    %72 = arith.mulf %67, %71 : vector<128x128xf32>
    %73 = vector.extract_strided_slice %42 {offsets = [1, 0], sizes = [1, 128], strides = [1, 1]} : vector<3x128xf32> to vector<1x128xf32>
    %74 = vector.broadcast %73 : vector<1x128xf32> to vector<128x128xf32>
    %75 = arith.mulf %72, %74 : vector<128x128xf32>
    %76 = vector.extract_strided_slice %42 {offsets = [2, 0], sizes = [1, 128], strides = [1, 1]} : vector<3x128xf32> to vector<1x128xf32>
    %77 = vector.broadcast %76 : vector<1x128xf32> to vector<128x128xf32>
    %78 = arith.addf %75, %77 : vector<128x128xf32>
    %cst_27 = arith.constant 0.000000e+00 : f32
    %79 = vector.broadcast %cst_27 : f32 to vector<128x128xf32>
    %80 = arith.maximumf %78, %79 : vector<128x128xf32>
    %81 = arith.truncf %80 : vector<128x128xf32> to vector<128x128xbf16>
    %c0_28 = arith.constant 0 : index
    %c0_29 = arith.constant 0 : index
    %82 = vector.load %arg8[%c0_28, %c0_29] : memref<3x128xf32, #tpu.memory_space<vmem>>, vector<3x128xf32>
    %c0_30 = arith.constant 0 : index
    %c0_31 = arith.constant 0 : index
    %83 = vector.load %arg4[%c0_30, %c0_31] : memref<128x256xbf16, #tpu.memory_space<vmem>>, vector<128x256xbf16>
    %cst_32 = arith.constant dense<0.000000e+00> : vector<128x256xf32>
    %84 = tpu.matmul %81, %83, %cst_32 {dimension_numbers = #tpu.dot_dimension_numbers<[1], [0], [0], [1], [0, 0, 1, 1], [], []>} : vector<128x128xbf16>, vector<128x256xbf16>, vector<128x256xf32> -> vector<128x256xf32>
    %85 = vector.extract_strided_slice %84 {offsets = [0, 0], sizes = [128, 128], strides = [1, 1]} : vector<128x256xf32> to vector<128x128xf32>
    %86 = arith.truncf %85 : vector<128x128xf32> to vector<128x128xbf16>
    %cst_33 = arith.constant dense<0.000000e+00> : vector<128x128xf32>
    %87 = tpu.matmul %0, %86, %cst_33 {dimension_numbers = #tpu.dot_dimension_numbers<[1], [0], [0], [1], [0, 0, 1, 1], [], []>} : vector<128x128xbf16>, vector<128x128xbf16>, vector<128x128xf32> -> vector<128x128xf32>
    %88 = vector.extract_strided_slice %84 {offsets = [0, 128], sizes = [128, 128], strides = [1, 1]} : vector<128x256xf32> to vector<128x128xf32>
    %89 = arith.addf %87, %88 : vector<128x128xf32>
    %90 = vector.extract_strided_slice %82 {offsets = [0, 0], sizes = [1, 128], strides = [1, 1]} : vector<3x128xf32> to vector<1x128xf32>
    %91 = vector.broadcast %90 : vector<1x128xf32> to vector<128x128xf32>
    %92 = arith.addf %89, %91 : vector<128x128xf32>
    %cst_34 = arith.constant dense<0.000000e+00> : vector<128xf32>
    %93 = vector.multi_reduction <add>, %92, %cst_34 [1] : vector<128x128xf32> to vector<128xf32>
    %94 = vector.shape_cast %93 : vector<128xf32> to vector<128x1xf32>
    %cst_35 = arith.constant 1.250000e-01 : f32
    %95 = vector.broadcast %cst_35 : f32 to vector<128x1xf32>
    %96 = arith.mulf %94, %95 : vector<128x1xf32>
    %97 = arith.mulf %92, %92 : vector<128x128xf32>
    %cst_36 = arith.constant dense<0.000000e+00> : vector<128xf32>
    %98 = vector.multi_reduction <add>, %97, %cst_36 [1] : vector<128x128xf32> to vector<128xf32>
    %99 = vector.shape_cast %98 : vector<128xf32> to vector<128x1xf32>
    %cst_37 = arith.constant 1.250000e-01 : f32
    %100 = vector.broadcast %cst_37 : f32 to vector<128x1xf32>
    %101 = arith.mulf %99, %100 : vector<128x1xf32>
    %102 = arith.mulf %96, %96 : vector<128x1xf32>
    %103 = arith.subf %101, %102 : vector<128x1xf32>
    %cst_38 = arith.constant 0.000000e+00 : f32
    %104 = vector.broadcast %cst_38 : f32 to vector<128x1xf32>
    %105 = arith.maximumf %103, %104 : vector<128x1xf32>
    %106 = vector.broadcast %96 : vector<128x1xf32> to vector<128x128xf32>
    %107 = arith.subf %92, %106 : vector<128x128xf32>
    %cst_39 = arith.constant 9.99999974E-6 : f32
    %108 = vector.broadcast %cst_39 : f32 to vector<128x1xf32>
    %109 = arith.addf %105, %108 : vector<128x1xf32>
    %110 = math.rsqrt %109 : vector<128x1xf32>
    %111 = vector.broadcast %110 : vector<128x1xf32> to vector<128x128xf32>
    %112 = arith.mulf %107, %111 : vector<128x128xf32>
    %113 = vector.extract_strided_slice %82 {offsets = [1, 0], sizes = [1, 128], strides = [1, 1]} : vector<3x128xf32> to vector<1x128xf32>
    %114 = vector.broadcast %113 : vector<1x128xf32> to vector<128x128xf32>
    %115 = arith.mulf %112, %114 : vector<128x128xf32>
    %116 = vector.extract_strided_slice %82 {offsets = [2, 0], sizes = [1, 128], strides = [1, 1]} : vector<3x128xf32> to vector<1x128xf32>
    %117 = vector.broadcast %116 : vector<1x128xf32> to vector<128x128xf32>
    %118 = arith.addf %115, %117 : vector<128x128xf32>
    %cst_40 = arith.constant 0.000000e+00 : f32
    %119 = vector.broadcast %cst_40 : f32 to vector<128x128xf32>
    %120 = arith.maximumf %118, %119 : vector<128x128xf32>
    %121 = arith.truncf %120 : vector<128x128xf32> to vector<128x128xbf16>
    %c0_41 = arith.constant 0 : index
    %c0_42 = arith.constant 0 : index
    %122 = vector.load %arg9[%c0_41, %c0_42] : memref<3x128xf32, #tpu.memory_space<vmem>>, vector<3x128xf32>
    %c0_43 = arith.constant 0 : index
    %c0_44 = arith.constant 0 : index
    %123 = vector.load %arg5[%c0_43, %c0_44] : memref<128x256xbf16, #tpu.memory_space<vmem>>, vector<128x256xbf16>
    %cst_45 = arith.constant dense<0.000000e+00> : vector<128x256xf32>
    %124 = tpu.matmul %121, %123, %cst_45 {dimension_numbers = #tpu.dot_dimension_numbers<[1], [0], [0], [1], [0, 0, 1, 1], [], []>} : vector<128x128xbf16>, vector<128x256xbf16>, vector<128x256xf32> -> vector<128x256xf32>
    %125 = vector.extract_strided_slice %124 {offsets = [0, 0], sizes = [128, 128], strides = [1, 1]} : vector<128x256xf32> to vector<128x128xf32>
    %126 = arith.truncf %125 : vector<128x128xf32> to vector<128x128xbf16>
    %cst_46 = arith.constant dense<0.000000e+00> : vector<128x128xf32>
    %127 = tpu.matmul %0, %126, %cst_46 {dimension_numbers = #tpu.dot_dimension_numbers<[1], [0], [0], [1], [0, 0, 1, 1], [], []>} : vector<128x128xbf16>, vector<128x128xbf16>, vector<128x128xf32> -> vector<128x128xf32>
    %128 = vector.extract_strided_slice %124 {offsets = [0, 128], sizes = [128, 128], strides = [1, 1]} : vector<128x256xf32> to vector<128x128xf32>
    %129 = arith.addf %127, %128 : vector<128x128xf32>
    %130 = vector.extract_strided_slice %122 {offsets = [0, 0], sizes = [1, 128], strides = [1, 1]} : vector<3x128xf32> to vector<1x128xf32>
    %131 = vector.broadcast %130 : vector<1x128xf32> to vector<128x128xf32>
    %132 = arith.addf %129, %131 : vector<128x128xf32>
    %cst_47 = arith.constant dense<0.000000e+00> : vector<128xf32>
    %133 = vector.multi_reduction <add>, %132, %cst_47 [1] : vector<128x128xf32> to vector<128xf32>
    %134 = vector.shape_cast %133 : vector<128xf32> to vector<128x1xf32>
    %cst_48 = arith.constant 1.250000e-01 : f32
    %135 = vector.broadcast %cst_48 : f32 to vector<128x1xf32>
    %136 = arith.mulf %134, %135 : vector<128x1xf32>
    %137 = arith.mulf %132, %132 : vector<128x128xf32>
    %cst_49 = arith.constant dense<0.000000e+00> : vector<128xf32>
    %138 = vector.multi_reduction <add>, %137, %cst_49 [1] : vector<128x128xf32> to vector<128xf32>
    %139 = vector.shape_cast %138 : vector<128xf32> to vector<128x1xf32>
    %cst_50 = arith.constant 1.250000e-01 : f32
    %140 = vector.broadcast %cst_50 : f32 to vector<128x1xf32>
    %141 = arith.mulf %139, %140 : vector<128x1xf32>
    %142 = arith.mulf %136, %136 : vector<128x1xf32>
    %143 = arith.subf %141, %142 : vector<128x1xf32>
    %cst_51 = arith.constant 0.000000e+00 : f32
    %144 = vector.broadcast %cst_51 : f32 to vector<128x1xf32>
    %145 = arith.maximumf %143, %144 : vector<128x1xf32>
    %146 = vector.broadcast %136 : vector<128x1xf32> to vector<128x128xf32>
    %147 = arith.subf %132, %146 : vector<128x128xf32>
    %cst_52 = arith.constant 9.99999974E-6 : f32
    %148 = vector.broadcast %cst_52 : f32 to vector<128x1xf32>
    %149 = arith.addf %145, %148 : vector<128x1xf32>
    %150 = math.rsqrt %149 : vector<128x1xf32>
    %151 = vector.broadcast %150 : vector<128x1xf32> to vector<128x128xf32>
    %152 = arith.mulf %147, %151 : vector<128x128xf32>
    %153 = vector.extract_strided_slice %122 {offsets = [1, 0], sizes = [1, 128], strides = [1, 1]} : vector<3x128xf32> to vector<1x128xf32>
    %154 = vector.broadcast %153 : vector<1x128xf32> to vector<128x128xf32>
    %155 = arith.mulf %152, %154 : vector<128x128xf32>
    %156 = vector.extract_strided_slice %122 {offsets = [2, 0], sizes = [1, 128], strides = [1, 1]} : vector<3x128xf32> to vector<1x128xf32>
    %157 = vector.broadcast %156 : vector<1x128xf32> to vector<128x128xf32>
    %158 = arith.addf %155, %157 : vector<128x128xf32>
    %cst_53 = arith.constant 0.000000e+00 : f32
    %159 = vector.broadcast %cst_53 : f32 to vector<128x128xf32>
    %160 = arith.maximumf %158, %159 : vector<128x128xf32>
    %161 = arith.truncf %160 : vector<128x128xf32> to vector<128x128xbf16>
    %c0_54 = arith.constant 0 : index
    %c0_55 = arith.constant 0 : index
    %162 = vector.load %arg10[%c0_54, %c0_55] : memref<16x128xbf16, #tpu.memory_space<vmem>>, vector<16x128xbf16>
    %cst_56 = arith.constant dense<0.000000e+00> : vector<16x128xf32>
    %163 = tpu.matmul %162, %161, %cst_56 {dimension_numbers = #tpu.dot_dimension_numbers<[1], [0], [0], [1], [0, 0, 1, 1], [], []>} : vector<16x128xbf16>, vector<128x128xbf16>, vector<16x128xf32> -> vector<16x128xf32>
    %c0_57 = arith.constant 0 : index
    %c0_58 = arith.constant 0 : index
    %164 = vector.load %arg11[%c0_57, %c0_58] : memref<16x128xf32, #tpu.memory_space<vmem>>, vector<16x128xf32>
    %165 = arith.mulf %163, %164 : vector<16x128xf32>
    %c0_59 = arith.constant 0 : index
    %c0_60 = arith.constant 0 : index
    %166 = vector.load %arg12[%c0_59, %c0_60] : memref<256x128xbf16, #tpu.memory_space<vmem>>, vector<256x128xbf16>
    %c0_61 = arith.constant 0 : index
    %c0_62 = arith.constant 0 : index
    %167 = vector.load %arg13[%c0_61, %c0_62] : memref<128x128xbf16, #tpu.memory_space<vmem>>, vector<128x128xbf16>
    %c0_63 = arith.constant 0 : index
    %c0_64 = arith.constant 0 : index
    %168 = vector.load %arg14[%c0_63, %c0_64] : memref<4x128xf32, #tpu.memory_space<vmem>>, vector<4x128xf32>
    %169 = arith.truncf %165 : vector<16x128xf32> to vector<16x128xbf16>
    %170 = vector.extract_strided_slice %169 {offsets = [0, 0], sizes = [8, 128], strides = [1, 1]} : vector<16x128xbf16> to vector<8x128xbf16>
    %171 = vector.extract_strided_slice %166 {offsets = [0, 0], sizes = [128, 128], strides = [1, 1]} : vector<256x128xbf16> to vector<128x128xbf16>
    %cst_65 = arith.constant dense<0.000000e+00> : vector<8x128xf32>
    %172 = tpu.matmul %170, %171, %cst_65 {dimension_numbers = #tpu.dot_dimension_numbers<[1], [0], [0], [1], [0, 0, 1, 1], [], []>} : vector<8x128xbf16>, vector<128x128xbf16>, vector<8x128xf32> -> vector<8x128xf32>
    %173 = vector.extract_strided_slice %169 {offsets = [8, 0], sizes = [8, 128], strides = [1, 1]} : vector<16x128xbf16> to vector<8x128xbf16>
    %174 = vector.extract_strided_slice %166 {offsets = [128, 0], sizes = [128, 128], strides = [1, 1]} : vector<256x128xbf16> to vector<128x128xbf16>
    %cst_66 = arith.constant dense<0.000000e+00> : vector<8x128xf32>
    %175 = tpu.matmul %173, %174, %cst_66 {dimension_numbers = #tpu.dot_dimension_numbers<[1], [0], [0], [1], [0, 0, 1, 1], [], []>} : vector<8x128xbf16>, vector<128x128xbf16>, vector<8x128xf32> -> vector<8x128xf32>
    %176 = arith.addf %172, %175 : vector<8x128xf32>
    %177 = vector.extract_strided_slice %168 {offsets = [0, 0], sizes = [1, 128], strides = [1, 1]} : vector<4x128xf32> to vector<1x128xf32>
    %178 = vector.broadcast %177 : vector<1x128xf32> to vector<8x128xf32>
    %179 = arith.addf %176, %178 : vector<8x128xf32>
    %cst_67 = arith.constant 0.000000e+00 : f32
    %180 = vector.broadcast %cst_67 : f32 to vector<8x128xf32>
    %181 = arith.maximumf %179, %180 : vector<8x128xf32>
    %182 = arith.truncf %181 : vector<8x128xf32> to vector<8x128xbf16>
    %cst_68 = arith.constant dense<0.000000e+00> : vector<8x128xf32>
    %183 = tpu.matmul %182, %167, %cst_68 {dimension_numbers = #tpu.dot_dimension_numbers<[1], [0], [0], [1], [0, 0, 1, 1], [], []>} : vector<8x128xbf16>, vector<128x128xbf16>, vector<8x128xf32> -> vector<8x128xf32>
    %184 = vector.extract_strided_slice %168 {offsets = [1, 0], sizes = [1, 128], strides = [1, 1]} : vector<4x128xf32> to vector<1x128xf32>
    %185 = vector.broadcast %184 : vector<1x128xf32> to vector<8x128xf32>
    %186 = arith.addf %183, %185 : vector<8x128xf32>
    %cst_69 = arith.constant 0.000000e+00 : f32
    %187 = vector.broadcast %cst_69 : f32 to vector<8x128xf32>
    %188 = arith.maximumf %186, %187 : vector<8x128xf32>
    %189 = vector.extract_strided_slice %168 {offsets = [2, 0], sizes = [1, 128], strides = [1, 1]} : vector<4x128xf32> to vector<1x128xf32>
    %190 = vector.broadcast %189 : vector<1x128xf32> to vector<8x128xf32>
    %191 = arith.mulf %188, %190 : vector<8x128xf32>
    %cst_70 = arith.constant dense<0.000000e+00> : vector<8xf32>
    %192 = vector.multi_reduction <add>, %191, %cst_70 [1] : vector<8x128xf32> to vector<8xf32>
    %193 = vector.shape_cast %192 : vector<8xf32> to vector<8x1xf32>
    %194 = vector.extract_strided_slice %168 {offsets = [3, 0], sizes = [1, 128], strides = [1, 1]} : vector<4x128xf32> to vector<1x128xf32>
    %195 = vector.broadcast %193 : vector<8x1xf32> to vector<8x128xf32>
    %196 = vector.broadcast %194 : vector<1x128xf32> to vector<8x128xf32>
    %197 = arith.addf %195, %196 : vector<8x128xf32>
    %198 = arith.negf %197 : vector<8x128xf32>
    %199 = math.exp %198 : vector<8x128xf32>
    %cst_71 = arith.constant 1.000000e+00 : f32
    %200 = vector.broadcast %cst_71 : f32 to vector<8x128xf32>
    %201 = arith.addf %200, %199 : vector<8x128xf32>
    %202 = arith.divf %200, %201 : vector<8x128xf32>
    %c0_72 = arith.constant 0 : index
    %c0_73 = arith.constant 0 : index
    %203 = vector.load %arg15[%c0_72, %c0_73] : memref<8x128xf32, #tpu.memory_space<vmem>>, vector<8x128xf32>
    tpu.vector_store %arg15[%c0_72, %c0_73], %202 {strides = array<i32>} : memref<8x128xf32, #tpu.memory_space<vmem>>, vector<8x128xf32>,
    return
  }
}

</mosaic_0001>

<llo_original>
// kernel: improved_seal_forward.1
$region0: #{improved_seal_forward.1}
  #allocation0 [shape = 'u32[]', space=smem, size = 0x4, offset = 0x4, fixed_abs, tag = 'smem constant byte address 0x4 - core index']
  #allocation1 [shape = 'u32[72,128]{1,0:T(1,128)}', space=vmem, size = 0x9000, scoped, tag = 'internal scratch']
  %s0 = inlined_call_operand.vmem [shape: bf16[128,128], index: 0, kind: input, shape index: {}]
  %s1 = inlined_call_operand.vmem [shape: bf16[128,128], index: 1, kind: input, shape index: {}]
  %s2 = inlined_call_operand.vmem [shape: bf16[128,256], index: 2, kind: input, shape index: {}]
  %s3 = inlined_call_operand.vmem [shape: bf16[128,256], index: 3, kind: input, shape index: {}]
  %s4 = inlined_call_operand.vmem [shape: bf16[128,256], index: 4, kind: input, shape index: {}]
  %s5 = inlined_call_operand.vmem [shape: bf16[128,256], index: 5, kind: input, shape index: {}]
  %s6 = inlined_call_operand.vmem [shape: f32[3,128], index: 6, kind: input, shape index: {}]
  %s7 = inlined_call_operand.vmem [shape: f32[3,128], index: 7, kind: input, shape index: {}]
  %s8 = inlined_call_operand.vmem [shape: f32[3,128], index: 8, kind: input, shape index: {}]
  %s9 = inlined_call_operand.vmem [shape: f32[3,128], index: 9, kind: input, shape index: {}]
  %s10 = inlined_call_operand.vmem [shape: bf16[16,128], index: 10, kind: input, shape index: {}]
  %s11 = inlined_call_operand.vmem [shape: f32[16,128], index: 11, kind: input, shape index: {}]
  %s12 = inlined_call_operand.vmem [shape: bf16[256,128], index: 12, kind: input, shape index: {}]
  %s13 = inlined_call_operand.vmem [shape: bf16[128,128], index: 13, kind: input, shape index: {}]
  %s14 = inlined_call_operand.vmem [shape: f32[4,128], index: 14, kind: input, shape index: {}]
  %s15 = inlined_call_operand.vmem [shape: f32[8,128], index: 15, kind: output, shape index: {}]
  %s16 = sld [smem:[#allocation0]]
  $region70: #{improved_seal_forward.1} parent=0
    _
  %s18 = ssub.s32 1, %s16
  %s19 = scalar_select 0, %s18, %s16
  // Predicated region
  $region2: #{improved_seal_forward.1} parent=0 // pred_check
    _
  $region3: #{improved_seal_forward.1} parent=0 // pred_check_branch
    %21 = sbr.rel (0) target = $region5
  $region4: #{improved_seal_forward.1} parent=0 // pred_region
    _
  $region5: #{improved_seal_forward.1} parent=0 // pred_fallthru
    _
  // Predicated region
  $region6: #{improved_seal_forward.1} parent=0 // pred_check
    _
  $region7: #{improved_seal_forward.1} parent=0 // pred_check_branch
    %23 = sbr.rel (0) target = $region9
  $region8: #{improved_seal_forward.1} parent=0 // pred_region
    _
  $region9: #{improved_seal_forward.1} parent=0 // pred_fallthru
    _
  // Predicated region
  $region10: #{improved_seal_forward.1} parent=0 // pred_check
    _
  $region11: #{improved_seal_forward.1} parent=0 // pred_check_branch
    %25 = sbr.rel (0) target = $region13
  $region12: #{improved_seal_forward.1} parent=0 // pred_region
    _
  $region13: #{improved_seal_forward.1} parent=0 // pred_fallthru
    _
  // Predicated region
  $region14: #{improved_seal_forward.1} parent=0 // pred_check
    _
  $region15: #{improved_seal_forward.1} parent=0 // pred_check_branch
    %27 = sbr.rel (0) target = $region17
  $region16: #{improved_seal_forward.1} parent=0 // pred_region
    _
  $region17: #{improved_seal_forward.1} parent=0 // pred_fallthru
    _
  // Predicated region
  $region18: #{improved_seal_forward.1} parent=0 // pred_check
    _
  $region19: #{improved_seal_forward.1} parent=0 // pred_check_branch
    %29 = sbr.rel (0) target = $region21
  $region20: #{improved_seal_forward.1} parent=0 // pred_region
    _
  $region21: #{improved_seal_forward.1} parent=0 // pred_fallthru
    _
  // Predicated region
  $region22: #{improved_seal_forward.1} parent=0 // pred_check
    _
  $region23: #{improved_seal_forward.1} parent=0 // pred_check_branch
    %31 = sbr.rel (0) target = $region25
  $region24: #{improved_seal_forward.1} parent=0 // pred_region
    _
  $region25: #{improved_seal_forward.1} parent=0 // pred_fallthru
    _
  // Predicated region
  $region26: #{improved_seal_forward.1} parent=0 // pred_check
    _
  $region27: #{improved_seal_forward.1} parent=0 // pred_check_branch
    %33 = sbr.rel (0) target = $region29
  $region28: #{improved_seal_forward.1} parent=0 // pred_region
    _
  $region29: #{improved_seal_forward.1} parent=0 // pred_fallthru
    _
  // Predicated region
  $region30: #{improved_seal_forward.1} parent=0 // pred_check
    _
  $region31: #{improved_seal_forward.1} parent=0 // pred_check_branch
    %35 = sbr.rel (0) target = $region33
  $region32: #{improved_seal_forward.1} parent=0 // pred_region
    _
  $region33: #{improved_seal_forward.1} parent=0 // pred_fallthru
    _
  // Predicated region
  $region34: #{improved_seal_forward.1} parent=0 // pred_check
    _
  $region35: #{improved_seal_forward.1} parent=0 // pred_check_branch
    %37 = sbr.rel (0) target = $region37
  $region36: #{improved_seal_forward.1} parent=0 // pred_region
    _
  $region37: #{improved_seal_forward.1} parent=0 // pred_fallthru
    _
  // Predicated region
  $region38: #{improved_seal_forward.1} parent=0 // pred_check
    _
  $region39: #{improved_seal_forward.1} parent=0 // pred_check_branch
    %39 = sbr.rel (0) target = $region41
  $region40: #{improved_seal_forward.1} parent=0 // pred_region
    _
  $region41: #{improved_seal_forward.1} parent=0 // pred_fallthru
    _
  // Predicated region
  $region42: #{improved_seal_forward.1} parent=0 // pred_check
    _
  $region43: #{improved_seal_forward.1} parent=0 // pred_check_branch
    %41 = sbr.rel (0) target = $region45
  $region44: #{improved_seal_forward.1} parent=0 // pred_region
    _
  $region45: #{improved_seal_forward.1} parent=0 // pred_fallthru
    _
  // Predicated region
  $region46: #{improved_seal_forward.1} parent=0 // pred_check
    _
  $region47: #{improved_seal_forward.1} parent=0 // pred_check_branch
    %43 = sbr.rel (0) target = $region49
  $region48: #{improved_seal_forward.1} parent=0 // pred_region
    _
  $region49: #{improved_seal_forward.1} parent=0 // pred_fallthru
    _
  // Predicated region
  $region50: #{improved_seal_forward.1} parent=0 // pred_check
    _
  $region51: #{improved_seal_forward.1} parent=0 // pred_check_branch
    %45 = sbr.rel (0) target = $region53
  $region52: #{improved_seal_forward.1} parent=0 // pred_region
    _
  $region53: #{improved_seal_forward.1} parent=0 // pred_fallthru
    _
  // Predicated region
  $region54: #{improved_seal_forward.1} parent=0 // pred_check
    _
  $region55: #{improved_seal_forward.1} parent=0 // pred_check_branch
    %47 = sbr.rel (0) target = $region57
  $region56: #{improved_seal_forward.1} parent=0 // pred_region
    _
  $region57: #{improved_seal_forward.1} parent=0 // pred_fallthru
    _
  // Predicated region
  $region58: #{improved_seal_forward.1} parent=0 // pred_check
    _
  $region59: #{improved_seal_forward.1} parent=0 // pred_check_branch
    %49 = sbr.rel (0) target = $region61
  $region60: #{improved_seal_forward.1} parent=0 // pred_region
    _
  $region61: #{improved_seal_forward.1} parent=0 // pred_fallthru
    _
  %v50 = vld [vmem:[%s0] sm:$0xf]
  %v51 = vld [vmem:[%s0 + $0x4] sm:$0xf]
  %v52 = vld [vmem:[%s0 + $0x8] sm:$0xf]
  %v53 = vld [vmem:[%s0 + $0xc] sm:$0xf]
  %v54 = vld [vmem:[%s0 + $0x10] sm:$0xf]
  %v55 = vld [vmem:[%s0 + $0x14] sm:$0xf]
  %v56 = vld [vmem:[%s0 + $0x18] sm:$0xf]
  %v57 = vld [vmem:[%s0 + $0x1c] sm:$0xf]
  %v58 = vld [vmem:[%s0 + $0x20] sm:$0xf]
  %v59 = vld [vmem:[%s0 + $0x24] sm:$0xf]
  %v60 = vld [vmem:[%s0 + $0x28] sm:$0xf]
  %v61 = vld [vmem:[%s0 + $0x2c] sm:$0xf]
  %v62 = vld [vmem:[%s0 + $0x30] sm:$0xf]
  %v63 = vld [vmem:[%s0 + $0x34] sm:$0xf]
  %v64 = vld [vmem:[%s0 + $0x38] sm:$0xf]
  %v65 = vld [vmem:[%s0 + $0x3c] sm:$0xf]
  %v66 = vld [vmem:[%s1] sm:$0xf]
  %v67 = vld [vmem:[%s1 + $0x4] sm:$0xf]
  %v68 = vld [vmem:[%s1 + $0x8] sm:$0xf]
  %v69 = vld [vmem:[%s1 + $0xc] sm:$0xf]
  %v70 = vld [vmem:[%s1 + $0x10] sm:$0xf]
  %v71 = vld [vmem:[%s1 + $0x14] sm:$0xf]
  %v72 = vld [vmem:[%s1 + $0x18] sm:$0xf]
  %v73 = vld [vmem:[%s1 + $0x1c] sm:$0xf]
  %v74 = vld [vmem:[%s1 + $0x20] sm:$0xf]
  %v75 = vld [vmem:[%s1 + $0x24] sm:$0xf]
  %v76 = vld [vmem:[%s1 + $0x28] sm:$0xf]
  %v77 = vld [vmem:[%s1 + $0x2c] sm:$0xf]
  %v78 = vld [vmem:[%s1 + $0x30] sm:$0xf]
  %v79 = vld [vmem:[%s1 + $0x34] sm:$0xf]
  %v80 = vld [vmem:[%s1 + $0x38] sm:$0xf]
  %v81 = vld [vmem:[%s1 + $0x3c] sm:$0xf]
  %v82 = vld [vmem:[%s6] sm:$0x7]
  %v83 = vld [vmem:[%s2] sm:$0xff]
  %v84 = vld [vmem:[%s2 + $0x8] sm:$0xff]
  %v85 = vld [vmem:[%s2 + $0x10] sm:$0xff]
  %v86 = vld [vmem:[%s2 + $0x18] sm:$0xff]
  %v87 = vld [vmem:[%s2 + $0x20] sm:$0xff]
  %v88 = vld [vmem:[%s2 + $0x28] sm:$0xff]
  %v89 = vld [vmem:[%s2 + $0x30] sm:$0xff]
  %v90 = vld [vmem:[%s2 + $0x38] sm:$0xff]
  %v91 = vld [vmem:[%s2 + $0x40] sm:$0xff]
  %v92 = vld [vmem:[%s2 + $0x48] sm:$0xff]
  %v93 = vld [vmem:[%s2 + $0x50] sm:$0xff]
  %v94 = vld [vmem:[%s2 + $0x58] sm:$0xff]
  %v95 = vld [vmem:[%s2 + $0x60] sm:$0xff]
  %v96 = vld [vmem:[%s2 + $0x68] sm:$0xff]
  %v97 = vld [vmem:[%s2 + $0x70] sm:$0xff]
  %v98 = vld [vmem:[%s2 + $0x78] sm:$0xff]
  %v115 = vunpack.c.l.b16 %v66
  %v116 = vunpack.c.l.b16 %v67
  %v117 = vunpack.c.l.b16 %v68
  %v118 = vunpack.c.l.b16 %v69
  %v119 = vunpack.c.l.b16 %v70
  %v120 = vunpack.c.l.b16 %v71
  %v121 = vunpack.c.l.b16 %v72
  %v122 = vunpack.c.l.b16 %v73
  %v123 = vunpack.c.l.b16 %v74
  %v124 = vunpack.c.l.b16 %v75
  %v125 = vunpack.c.l.b16 %v76
  %v126 = vunpack.c.l.b16 %v77
  %v127 = vunpack.c.l.b16 %v78
  %v128 = vunpack.c.l.b16 %v79
  %v129 = vunpack.c.l.b16 %v80
  %v130 = vunpack.c.l.b16 %v81
  %v131 = vpack.c.b16 %v116, %v115
  %v132 = vpack.c.b16 %v118, %v117
  %v133 = vpack.c.b16 %v120, %v119
  %v134 = vpack.c.b16 %v122, %v121
  %v135 = vpack.c.b16 %v124, %v123
  %v136 = vpack.c.b16 %v126, %v125
  %v137 = vpack.c.b16 %v128, %v127
  %v138 = vpack.c.b16 %v130, %v129
  %v163 = vunpack.c.l.b16 %v83
  %v164 = vunpack.c.h.b16 %v83
  %v165 = vunpack.c.l.b16 %v84
  %v166 = vunpack.c.h.b16 %v84
  %v167 = vunpack.c.l.b16 %v85
  %v168 = vunpack.c.h.b16 %v85
  %v169 = vunpack.c.l.b16 %v86
  %v170 = vunpack.c.h.b16 %v86
  %v171 = vunpack.c.l.b16 %v87
  %v172 = vunpack.c.h.b16 %v87
  %v173 = vunpack.c.l.b16 %v88
  %v174 = vunpack.c.h.b16 %v88
  %v175 = vunpack.c.l.b16 %v89
  %v176 = vunpack.c.h.b16 %v89
  %v177 = vunpack.c.l.b16 %v90
  %v178 = vunpack.c.h.b16 %v90
  %v179 = vunpack.c.l.b16 %v91
  %v180 = vunpack.c.h.b16 %v91
  %v181 = vunpack.c.l.b16 %v92
  %v182 = vunpack.c.h.b16 %v92
  %v183 = vunpack.c.l.b16 %v93
  %v184 = vunpack.c.h.b16 %v93
  %v185 = vunpack.c.l.b16 %v94
  %v186 = vunpack.c.h.b16 %v94
  %v187 = vunpack.c.l.b16 %v95
  %v188 = vunpack.c.h.b16 %v95
  %v189 = vunpack.c.l.b16 %v96
  %v190 = vunpack.c.h.b16 %v96
  %v191 = vunpack.c.l.b16 %v97
  %v192 = vunpack.c.h.b16 %v97
  %v193 = vunpack.c.l.b16 %v98
  %v194 = vunpack.c.h.b16 %v98
  %v195 = vpack.c.b16 %v165, %v163
  %v196 = vpack.c.b16 %v166, %v164
  %v197 = vpack.c.b16 %v169, %v167
  %v198 = vpack.c.b16 %v170, %v168
  %v199 = vpack.c.b16 %v173, %v171
  %v200 = vpack.c.b16 %v174, %v172
  %v201 = vpack.c.b16 %v177, %v175
  %v202 = vpack.c.b16 %v178, %v176
  %v203 = vpack.c.b16 %v181, %v179
  %v204 = vpack.c.b16 %v182, %v180
  %v205 = vpack.c.b16 %v185, %v183
  %v206 = vpack.c.b16 %v186, %v184
  %v207 = vpack.c.b16 %v189, %v187
  %v208 = vpack.c.b16 %v190, %v188
  %v209 = vpack.c.b16 %v193, %v191
  %v210 = vpack.c.b16 %v194, %v192
  %227 = vmatpush.bf16.msra.mxu0 %v209
  %228 = vmatpush.bf16.msra.mxu0 %v207
  %229 = vmatpush.bf16.msra.mxu0 %v205
  %230 = vmatpush.bf16.msra.mxu0 %v203
  %231 = vmatpush.bf16.msra.mxu0 %v201
  %232 = vmatpush.bf16.msra.mxu0 %v199
  %233 = vmatpush.bf16.msra.mxu0 %v197
  %234 = vmatpush.bf16.msra.mxu0 %v195
  %235 = vmatmul.bf16.gmra.mxu0 %v131
  %v236 = vpop.f32.mrf.mxu0
  %v237 = vadd.f32 0.0, %v236
  %v238 = vpop.f32.mrf.mxu0
  %v239 = vadd.f32 0.0, %v238
  %240 = vmatmul.bf16.gmra.mxu0 %v132
  %v241 = vpop.f32.mrf.mxu0
  %v242 = vadd.f32 0.0, %v241
  %v243 = vpop.f32.mrf.mxu0
  %v244 = vadd.f32 0.0, %v243
  %245 = vmatmul.bf16.gmra.mxu0 %v133
  %v246 = vpop.f32.mrf.mxu0
  %v247 = vadd.f32 0.0, %v246
  %v248 = vpop.f32.mrf.mxu0
  %v249 = vadd.f32 0.0, %v248
  %250 = vmatmul.bf16.gmra.mxu0 %v134
  %v251 = vpop.f32.mrf.mxu0
  %v252 = vadd.f32 0.0, %v251
  %v253 = vpop.f32.mrf.mxu0
  %v254 = vadd.f32 0.0, %v253
  %255 = vmatmul.bf16.gmra.mxu0 %v135
  %v256 = vpop.f32.mrf.mxu0
  %v257 = vadd.f32 0.0, %v256
  %v258 = vpop.f32.mrf.mxu0
  %v259 = vadd.f32 0.0, %v258
  %260 = vmatmul.bf16.gmra.mxu0 %v136
  %v261 = vpop.f32.mrf.mxu0
  %v262 = vadd.f32 0.0, %v261
  %v263 = vpop.f32.mrf.mxu0
  %v264 = vadd.f32 0.0, %v263
  %265 = vmatmul.bf16.gmra.mxu0 %v137
  %v266 = vpop.f32.mrf.mxu0
  %v267 = vadd.f32 0.0, %v266
  %v268 = vpop.f32.mrf.mxu0
  %v269 = vadd.f32 0.0, %v268
  %270 = vmatmul.bf16.gmra.mxu0 %v138
  %v271 = vpop.f32.mrf.mxu0
  %v272 = vadd.f32 0.0, %v271
  %v273 = vpop.f32.mrf.mxu0
  %v274 = vadd.f32 0.0, %v273
  %275 = vdwg.mxu0
  %276 = vmatpush.bf16.msra.mxu0 %v210
  %277 = vmatpush.bf16.msra.mxu0 %v208
  %278 = vmatpush.bf16.msra.mxu0 %v206
  %279 = vmatpush.bf16.msra.mxu0 %v204
  %280 = vmatpush.bf16.msra.mxu0 %v202
  %281 = vmatpush.bf16.msra.mxu0 %v200
  %282 = vmatpush.bf16.msra.mxu0 %v198
  %283 = vmatpush.bf16.msra.mxu0 %v196
  %284 = vmatmul.bf16.gmra.mxu0 %v131
  %v285 = vpop.f32.mrf.mxu0
  %v286 = vadd.f32 0.0, %v285
  %v287 = vpop.f32.mrf.mxu0
  %v288 = vadd.f32 0.0, %v287
  %289 = vmatmul.bf16.gmra.mxu0 %v132
  %v290 = vpop.f32.mrf.mxu0
  %v291 = vadd.f32 0.0, %v290
  %v292 = vpop.f32.mrf.mxu0
  %v293 = vadd.f32 0.0, %v292
  %294 = vmatmul.bf16.gmra.mxu0 %v133
  %v295 = vpop.f32.mrf.mxu0
  %v296 = vadd.f32 0.0, %v295
  %v297 = vpop.f32.mrf.mxu0
  %v298 = vadd.f32 0.0, %v297
  %299 = vmatmul.bf16.gmra.mxu0 %v134
  %v300 = vpop.f32.mrf.mxu0
  %v301 = vadd.f32 0.0, %v300
  %v302 = vpop.f32.mrf.mxu0
  %v303 = vadd.f32 0.0, %v302
  %304 = vmatmul.bf16.gmra.mxu0 %v135
  %v305 = vpop.f32.mrf.mxu0
  %v306 = vadd.f32 0.0, %v305
  %v307 = vpop.f32.mrf.mxu0
  %v308 = vadd.f32 0.0, %v307
  %309 = vmatmul.bf16.gmra.mxu0 %v136
  %v310 = vpop.f32.mrf.mxu0
  %v311 = vadd.f32 0.0, %v310
  %v312 = vpop.f32.mrf.mxu0
  %v313 = vadd.f32 0.0, %v312
  %314 = vmatmul.bf16.gmra.mxu0 %v137
  %v315 = vpop.f32.mrf.mxu0
  %v316 = vadd.f32 0.0, %v315
  %v317 = vpop.f32.mrf.mxu0
  %v318 = vadd.f32 0.0, %v317
  %319 = vmatmul.bf16.gmra.mxu0 %v138
  %v320 = vpop.f32.mrf.mxu0
  %v321 = vadd.f32 0.0, %v320
  %v322 = vpop.f32.mrf.mxu0
  %v323 = vadd.f32 0.0, %v322
  %324 = vdwg.mxu0
  %v325 = vpack.c.bf16 %v239, %v237
  %v326 = vpack.c.bf16 %v244, %v242
  %v327 = vpack.c.bf16 %v249, %v247
  %v328 = vpack.c.bf16 %v254, %v252
  %v329 = vpack.c.bf16 %v259, %v257
  %v330 = vpack.c.bf16 %v264, %v262
  %v331 = vpack.c.bf16 %v269, %v267
  %v332 = vpack.c.bf16 %v274, %v272
  %v349 = vunpack.c.l.b16 %v50
  %v350 = vunpack.c.l.b16 %v51
  %v351 = vunpack.c.l.b16 %v52
  %v352 = vunpack.c.l.b16 %v53
  %v353 = vunpack.c.l.b16 %v54
  %v354 = vunpack.c.l.b16 %v55
  %v355 = vunpack.c.l.b16 %v56
  %v356 = vunpack.c.l.b16 %v57
  %v357 = vunpack.c.l.b16 %v58
  %v358 = vunpack.c.l.b16 %v59
  %v359 = vunpack.c.l.b16 %v60
  %v360 = vunpack.c.l.b16 %v61
  %v361 = vunpack.c.l.b16 %v62
  %v362 = vunpack.c.l.b16 %v63
  %v363 = vunpack.c.l.b16 %v64
  %v364 = vunpack.c.l.b16 %v65
  %v365 = vpack.c.b16 %v350, %v349
  %v366 = vpack.c.b16 %v352, %v351
  %v367 = vpack.c.b16 %v354, %v353
  %v368 = vpack.c.b16 %v356, %v355
  %v369 = vpack.c.b16 %v358, %v357
  %v370 = vpack.c.b16 %v360, %v359
  %v371 = vpack.c.b16 %v362, %v361
  %v372 = vpack.c.b16 %v364, %v363
  %381 = vmatpush.bf16.msra.mxu0 %v332
  %382 = vmatpush.bf16.msra.mxu0 %v331
  %383 = vmatpush.bf16.msra.mxu0 %v330
  %384 = vmatpush.bf16.msra.mxu0 %v329
  %385 = vmatpush.bf16.msra.mxu0 %v328
  %386 = vmatpush.bf16.msra.mxu0 %v327
  %387 = vmatpush.bf16.msra.mxu0 %v326
  %388 = vmatpush.bf16.msra.mxu0 %v325
  %389 = vmatmul.bf16.gmra.mxu0 %v365
  %v390 = vpop.f32.mrf.mxu0
  %v391 = vadd.f32 %v286, %v390
  %v392 = vpop.f32.mrf.mxu0
  %v393 = vadd.f32 %v288, %v392
  %394 = vmatmul.bf16.gmra.mxu0 %v366
  %v395 = vpop.f32.mrf.mxu0
  %v396 = vadd.f32 %v291, %v395
  %v397 = vpop.f32.mrf.mxu0
  %v398 = vadd.f32 %v293, %v397
  %399 = vmatmul.bf16.gmra.mxu0 %v367
  %v400 = vpop.f32.mrf.mxu0
  %v401 = vadd.f32 %v296, %v400
  %v402 = vpop.f32.mrf.mxu0
  %v403 = vadd.f32 %v298, %v402
  %404 = vmatmul.bf16.gmra.mxu0 %v368
  %v405 = vpop.f32.mrf.mxu0
  %v406 = vadd.f32 %v301, %v405
  %v407 = vpop.f32.mrf.mxu0
  %v408 = vadd.f32 %v303, %v407
  %409 = vmatmul.bf16.gmra.mxu0 %v369
  %v410 = vpop.f32.mrf.mxu0
  %v411 = vadd.f32 %v306, %v410
  %v412 = vpop.f32.mrf.mxu0
  %v413 = vadd.f32 %v308, %v412
  %414 = vmatmul.bf16.gmra.mxu0 %v370
  %v415 = vpop.f32.mrf.mxu0
  %v416 = vadd.f32 %v311, %v415
  %v417 = vpop.f32.mrf.mxu0
  %v418 = vadd.f32 %v313, %v417
  %419 = vmatmul.bf16.gmra.mxu0 %v371
  %v420 = vpop.f32.mrf.mxu0
  %v421 = vadd.f32 %v316, %v420
  %v422 = vpop.f32.mrf.mxu0
  %v423 = vadd.f32 %v318, %v422
  %424 = vmatmul.bf16.gmra.mxu0 %v372
  %v425 = vpop.f32.mrf.mxu0
  %v426 = vadd.f32 %v321, %v425
  %v427 = vpop.f32.mrf.mxu0
  %v428 = vadd.f32 %v323, %v427
  %429 = vdwg.mxu0
  %v430 = vperm.slane %v82, 0
  %v431 = vadd.f32 %v391, %v430
  %v432 = vadd.f32 %v393, %v430
  %v433 = vadd.f32 %v396, %v430
  %v434 = vadd.f32 %v398, %v430
  %v435 = vadd.f32 %v401, %v430
  %v436 = vadd.f32 %v403, %v430
  %v437 = vadd.f32 %v406, %v430
  %v438 = vadd.f32 %v408, %v430
  %v439 = vadd.f32 %v411, %v430
  %v440 = vadd.f32 %v413, %v430
  %v441 = vadd.f32 %v416, %v430
  %v442 = vadd.f32 %v418, %v430
  %v443 = vadd.f32 %v421, %v430
  %v444 = vadd.f32 %v423, %v430
  %v445 = vadd.f32 %v426, %v430
  %v446 = vadd.f32 %v428, %v430
  %447 = vadd.xlane.f32.xlu0 %v431
  %v448 = vpop.xlane.xlu0 %447
  %449 = vadd.xlane.f32.xlu0 %v432
  %v450 = vpop.xlane.xlu0 %449
  %451 = vadd.xlane.f32.xlu0 %v433
  %v452 = vpop.xlane.xlu0 %451
  %453 = vadd.xlane.f32.xlu0 %v434
  %v454 = vpop.xlane.xlu0 %453
  %455 = vadd.xlane.f32.xlu0 %v435
  %v456 = vpop.xlane.xlu0 %455
  %457 = vadd.xlane.f32.xlu0 %v436
  %v458 = vpop.xlane.xlu0 %457
  %459 = vadd.xlane.f32.xlu0 %v437
  %v460 = vpop.xlane.xlu0 %459
  %461 = vadd.xlane.f32.xlu0 %v438
  %v462 = vpop.xlane.xlu0 %461
  %463 = vadd.xlane.f32.xlu0 %v439
  %v464 = vpop.xlane.xlu0 %463
  %465 = vadd.xlane.f32.xlu0 %v440
  %v466 = vpop.xlane.xlu0 %465
  %467 = vadd.xlane.f32.xlu0 %v441
  %v468 = vpop.xlane.xlu0 %467
  %469 = vadd.xlane.f32.xlu0 %v442
  %v470 = vpop.xlane.xlu0 %469
  %471 = vadd.xlane.f32.xlu0 %v443
  %v472 = vpop.xlane.xlu0 %471
  %473 = vadd.xlane.f32.xlu0 %v444
  %v474 = vpop.xlane.xlu0 %473
  %475 = vadd.xlane.f32.xlu0 %v445
  %v476 = vpop.xlane.xlu0 %475
  %477 = vadd.xlane.f32.xlu0 %v446
  %v478 = vpop.xlane.xlu0 %477
  %v479 = vmul.f32 %v448, 0.03125
  %v480 = vmul.f32 %v450, 0.03125
  %v481 = vmul.f32 %v452, 0.03125
  %v482 = vmul.f32 %v454, 0.03125
  %v483 = vmul.f32 %v456, 0.03125
  %v484 = vmul.f32 %v458, 0.03125
  %v485 = vmul.f32 %v460, 0.03125
  %v486 = vmul.f32 %v462, 0.03125
  %v487 = vmul.f32 %v464, 0.03125
  %v488 = vmul.f32 %v466, 0.03125
  %v489 = vmul.f32 %v468, 0.03125
  %v490 = vmul.f32 %v470, 0.03125
  %v491 = vmul.f32 %v472, 0.03125
  %v492 = vmul.f32 %v474, 0.03125
  %v493 = vmul.f32 %v476, 0.03125
  %v494 = vmul.f32 %v478, 0.03125
  %v495 = vmul.f32 %v431, %v431
  %v496 = vmul.f32 %v432, %v432
  %v497 = vmul.f32 %v433, %v433
  %v498 = vmul.f32 %v434, %v434
  %v499 = vmul.f32 %v435, %v435
  %v500 = vmul.f32 %v436, %v436
  %v501 = vmul.f32 %v437, %v437
  %v502 = vmul.f32 %v438, %v438
  %v503 = vmul.f32 %v439, %v439
  %v504 = vmul.f32 %v440, %v440
  %v505 = vmul.f32 %v441, %v441
  %v506 = vmul.f32 %v442, %v442
  %v507 = vmul.f32 %v443, %v443
  %v508 = vmul.f32 %v444, %v444
  %v509 = vmul.f32 %v445, %v445
  %v510 = vmul.f32 %v446, %v446
  %511 = vadd.xlane.f32.xlu0 %v495
  %v512 = vpop.xlane.xlu0 %511
  %513 = vadd.xlane.f32.xlu0 %v496
  %v514 = vpop.xlane.xlu0 %513
  %515 = vadd.xlane.f32.xlu0 %v497
  %v516 = vpop.xlane.xlu0 %515
  %517 = vadd.xlane.f32.xlu0 %v498
  %v518 = vpop.xlane.xlu0 %517
  %519 = vadd.xlane.f32.xlu0 %v499
  %v520 = vpop.xlane.xlu0 %519
  %521 = vadd.xlane.f32.xlu0 %v500
  %v522 = vpop.xlane.xlu0 %521
  %523 = vadd.xlane.f32.xlu0 %v501
  %v524 = vpop.xlane.xlu0 %523
  %525 = vadd.xlane.f32.xlu0 %v502
  %v526 = vpop.xlane.xlu0 %525
  %527 = vadd.xlane.f32.xlu0 %v503
  %v528 = vpop.xlane.xlu0 %527
  %529 = vadd.xlane.f32.xlu0 %v504
  %v530 = vpop.xlane.xlu0 %529
  %531 = vadd.xlane.f32.xlu0 %v505
  %v532 = vpop.xlane.xlu0 %531
  %533 = vadd.xlane.f32.xlu0 %v506
  %v534 = vpop.xlane.xlu0 %533
  %535 = vadd.xlane.f32.xlu0 %v507
  %v536 = vpop.xlane.xlu0 %535
  %537 = vadd.xlane.f32.xlu0 %v508
  %v538 = vpop.xlane.xlu0 %537
  %539 = vadd.xlane.f32.xlu0 %v509
  %v540 = vpop.xlane.xlu0 %539
  %541 = vadd.xlane.f32.xlu0 %v510
  %v542 = vpop.xlane.xlu0 %541
  %v543 = vmul.f32 %v512, 0.03125
  %v544 = vmul.f32 %v514, 0.03125
  %v545 = vmul.f32 %v516, 0.03125
  %v546 = vmul.f32 %v518, 0.03125
  %v547 = vmul.f32 %v520, 0.03125
  %v548 = vmul.f32 %v522, 0.03125
  %v549 = vmul.f32 %v524, 0.03125
  %v550 = vmul.f32 %v526, 0.03125
  %v551 = vmul.f32 %v528, 0.03125
  %v552 = vmul.f32 %v530, 0.03125
  %v553 = vmul.f32 %v532, 0.03125
  %v554 = vmul.f32 %v534, 0.03125
  %v555 = vmul.f32 %v536, 0.03125
  %v556 = vmul.f32 %v538, 0.03125
  %v557 = vmul.f32 %v540, 0.03125
  %v558 = vmul.f32 %v542, 0.03125
  %v559 = vmul.f32 %v479, %v479
  %v560 = vmul.f32 %v480, %v480
  %v561 = vmul.f32 %v481, %v481
  %v562 = vmul.f32 %v482, %v482
  %v563 = vmul.f32 %v483, %v483
  %v564 = vmul.f32 %v484, %v484
  %v565 = vmul.f32 %v485, %v485
  %v566 = vmul.f32 %v486, %v486
  %v567 = vmul.f32 %v487, %v487
  %v568 = vmul.f32 %v488, %v488
  %v569 = vmul.f32 %v489, %v489
  %v570 = vmul.f32 %v490, %v490
  %v571 = vmul.f32 %v491, %v491
  %v572 = vmul.f32 %v492, %v492
  %v573 = vmul.f32 %v493, %v493
  %v574 = vmul.f32 %v494, %v494
  %v575 = vsub.f32 %v543, %v559
  %v576 = vsub.f32 %v544, %v560
  %v577 = vsub.f32 %v545, %v561
  %v578 = vsub.f32 %v546, %v562
  %v579 = vsub.f32 %v547, %v563
  %v580 = vsub.f32 %v548, %v564
  %v581 = vsub.f32 %v549, %v565
  %v582 = vsub.f32 %v550, %v566
  %v583 = vsub.f32 %v551, %v567
  %v584 = vsub.f32 %v552, %v568
  %v585 = vsub.f32 %v553, %v569
  %v586 = vsub.f32 %v554, %v570
  %v587 = vsub.f32 %v555, %v571
  %v588 = vsub.f32 %v556, %v572
  %v589 = vsub.f32 %v557, %v573
  %v590 = vsub.f32 %v558, %v574
  %v591 = vmax.f32 %v575, 0.0
  %v592 = vmax.f32 %v576, 0.0
  %v593 = vmax.f32 %v577, 0.0
  %v594 = vmax.f32 %v578, 0.0
  %v595 = vmax.f32 %v579, 0.0
  %v596 = vmax.f32 %v580, 0.0
  %v597 = vmax.f32 %v581, 0.0
  %v598 = vmax.f32 %v582, 0.0
  %v599 = vmax.f32 %v583, 0.0
  %v600 = vmax.f32 %v584, 0.0
  %v601 = vmax.f32 %v585, 0.0
  %v602 = vmax.f32 %v586, 0.0
  %v603 = vmax.f32 %v587, 0.0
  %v604 = vmax.f32 %v588, 0.0
  %v605 = vmax.f32 %v589, 0.0
  %v606 = vmax.f32 %v590, 0.0
  %v607 = vsub.f32 %v431, %v479
  %v608 = vsub.f32 %v432, %v480
  %v609 = vsub.f32 %v433, %v481
  %v610 = vsub.f32 %v434, %v482
  %v611 = vsub.f32 %v435, %v483
  %v612 = vsub.f32 %v436, %v484
  %v613 = vsub.f32 %v437, %v485
  %v614 = vsub.f32 %v438, %v486
  %v615 = vsub.f32 %v439, %v487
  %v616 = vsub.f32 %v440, %v488
  %v617 = vsub.f32 %v441, %v489
  %v618 = vsub.f32 %v442, %v490
  %v619 = vsub.f32 %v443, %v491
  %v620 = vsub.f32 %v444, %v492
  %v621 = vsub.f32 %v445, %v493
  %v622 = vsub.f32 %v446, %v494
  %v623 = vadd.f32 %v591, 1e-05
  %v624 = vadd.f32 %v592, 1e-05
  %v625 = vadd.f32 %v593, 1e-05
  %v626 = vadd.f32 %v594, 1e-05
  %v627 = vadd.f32 %v595, 1e-05
  %v628 = vadd.f32 %v596, 1e-05
  %v629 = vadd.f32 %v597, 1e-05
  %v630 = vadd.f32 %v598, 1e-05
  %v631 = vadd.f32 %v599, 1e-05
  %v632 = vadd.f32 %v600, 1e-05
  %v633 = vadd.f32 %v601, 1e-05
  %v634 = vadd.f32 %v602, 1e-05
  %v635 = vadd.f32 %v603, 1e-05
  %v636 = vadd.f32 %v604, 1e-05
  %v637 = vadd.f32 %v605, 1e-05
  %v638 = vadd.f32 %v606, 1e-05
  %v639 = vrsqrt.pop %v623
  %v640 = vmul.f32 %v639, %v623
  %v641 = vmul.f32 %v640, %v639
  %v642 = vmul.f32 0.5, %v641
  %v643 = vsub.f32 1.5, %v642
  %v644 = vmul.f32 %v639, %v643
  %vm645 = vweird.f32 %v623
  %vm646 = vweird.f32 %v639
  %vm647 = vmor %vm645, %vm646
  %v648 = vsel %vm647, %v639, %v644
  %v649 = vrsqrt.pop %v624
  %v650 = vmul.f32 %v649, %v624
  %v651 = vmul.f32 %v650, %v649
  %v652 = vmul.f32 0.5, %v651
  %v653 = vsub.f32 1.5, %v652
  %v654 = vmul.f32 %v649, %v653
  %vm655 = vweird.f32 %v624
  %vm656 = vweird.f32 %v649
  %vm657 = vmor %vm655, %vm656
  %v658 = vsel %vm657, %v649, %v654
  %v659 = vrsqrt.pop %v625
  %v660 = vmul.f32 %v659, %v625
  %v661 = vmul.f32 %v660, %v659
  %v662 = vmul.f32 0.5, %v661
  %v663 = vsub.f32 1.5, %v662
  %v664 = vmul.f32 %v659, %v663
  %vm665 = vweird.f32 %v625
  %vm666 = vweird.f32 %v659
  %vm667 = vmor %vm665, %vm666
  %v668 = vsel %vm667, %v659, %v664
  %v669 = vrsqrt.pop %v626
  %v670 = vmul.f32 %v669, %v626
  %v671 = vmul.f32 %v670, %v669
  %v672 = vmul.f32 0.5, %v671
  %v673 = vsub.f32 1.5, %v672
  %v674 = vmul.f32 %v669, %v673
  %vm675 = vweird.f32 %v626
  %vm676 = vweird.f32 %v669
  %vm677 = vmor %vm675, %vm676
  %v678 = vsel %vm677, %v669, %v674
  %v679 = vrsqrt.pop %v627
  %v680 = vmul.f32 %v679, %v627
  %v681 = vmul.f32 %v680, %v679
  %v682 = vmul.f32 0.5, %v681
  %v683 = vsub.f32 1.5, %v682
  %v684 = vmul.f32 %v679, %v683
  %vm685 = vweird.f32 %v627
  %vm686 = vweird.f32 %v679
  %vm687 = vmor %vm685, %vm686
  %v688 = vsel %vm687, %v679, %v684
  %v689 = vrsqrt.pop %v628
  %v690 = vmul.f32 %v689, %v628
  %v691 = vmul.f32 %v690, %v689
  %v692 = vmul.f32 0.5, %v691
  %v693 = vsub.f32 1.5, %v692
  %v694 = vmul.f32 %v689, %v693
  %vm695 = vweird.f32 %v628
  %vm696 = vweird.f32 %v689
  %vm697 = vmor %vm695, %vm696
  %v698 = vsel %vm697, %v689, %v694
  %v699 = vrsqrt.pop %v629
  %v700 = vmul.f32 %v699, %v629
  %v701 = vmul.f32 %v700, %v699
  %v702 = vmul.f32 0.5, %v701
  %v703 = vsub.f32 1.5, %v702
  %v704 = vmul.f32 %v699, %v703
  %vm705 = vweird.f32 %v629
  %vm706 = vweird.f32 %v699
  %vm707 = vmor %vm705, %vm706
  %v708 = vsel %vm707, %v699, %v704
  %v709 = vrsqrt.pop %v630
  %v710 = vmul.f32 %v709, %v630
  %v711 = vmul.f32 %v710, %v709
  %v712 = vmul.f32 0.5, %v711
  %v713 = vsub.f32 1.5, %v712
  %v714 = vmul.f32 %v709, %v713
  %vm715 = vweird.f32 %v630
  %vm716 = vweird.f32 %v709
  %vm717 = vmor %vm715, %vm716
  %v718 = vsel %vm717, %v709, %v714
  %v719 = vrsqrt.pop %v631
  %v720 = vmul.f32 %v719, %v631
  %v721 = vmul.f32 %v720, %v719
  %v722 = vmul.f32 0.5, %v721
  %v723 = vsub.f32 1.5, %v722
  %v724 = vmul.f32 %v719, %v723
  %vm725 = vweird.f32 %v631
  %vm726 = vweird.f32 %v719
  %vm727 = vmor %vm725, %vm726
  %v728 = vsel %vm727, %v719, %v724
  %v729 = vrsqrt.pop %v632
  %v730 = vmul.f32 %v729, %v632
  %v731 = vmul.f32 %v730, %v729
  %v732 = vmul.f32 0.5, %v731
  %v733 = vsub.f32 1.5, %v732
  %v734 = vmul.f32 %v729, %v733
  %vm735 = vweird.f32 %v632
  %vm736 = vweird.f32 %v729
  %vm737 = vmor %vm735, %vm736
  %v738 = vsel %vm737, %v729, %v734
  %v739 = vrsqrt.pop %v633
  %v740 = vmul.f32 %v739, %v633
  %v741 = vmul.f32 %v740, %v739
  %v742 = vmul.f32 0.5, %v741
  %v743 = vsub.f32 1.5, %v742
  %v744 = vmul.f32 %v739, %v743
  %vm745 = vweird.f32 %v633
  %vm746 = vweird.f32 %v739
  %vm747 = vmor %vm745, %vm746
  %v748 = vsel %vm747, %v739, %v744
  %v749 = vrsqrt.pop %v634
  %v750 = vmul.f32 %v749, %v634
  %v751 = vmul.f32 %v750, %v749
  %v752 = vmul.f32 0.5, %v751
  %v753 = vsub.f32 1.5, %v752
  %v754 = vmul.f32 %v749, %v753
  %vm755 = vweird.f32 %v634
  %vm756 = vweird.f32 %v749
  %vm757 = vmor %vm755, %vm756
  %v758 = vsel %vm757, %v749, %v754
  %v759 = vrsqrt.pop %v635
  %v760 = vmul.f32 %v759, %v635
  %v761 = vmul.f32 %v760, %v759
  %v762 = vmul.f32 0.5, %v761
  %v763 = vsub.f32 1.5, %v762
  %v764 = vmul.f32 %v759, %v763
  %vm765 = vweird.f32 %v635
  %vm766 = vweird.f32 %v759
  %vm767 = vmor %vm765, %vm766
  %v768 = vsel %vm767, %v759, %v764
  %v769 = vrsqrt.pop %v636
  %v770 = vmul.f32 %v769, %v636
  %v771 = vmul.f32 %v770, %v769
  %v772 = vmul.f32 0.5, %v771
  %v773 = vsub.f32 1.5, %v772
  %v774 = vmul.f32 %v769, %v773
  %vm775 = vweird.f32 %v636
  %vm776 = vweird.f32 %v769
  %vm777 = vmor %vm775, %vm776
  %v778 = vsel %vm777, %v769, %v774
  %v779 = vrsqrt.pop %v637
  %v780 = vmul.f32 %v779, %v637
  %v781 = vmul.f32 %v780, %v779
  %v782 = vmul.f32 0.5, %v781
  %v783 = vsub.f32 1.5, %v782
  %v784 = vmul.f32 %v779, %v783
  %vm785 = vweird.f32 %v637
  %vm786 = vweird.f32 %v779
  %vm787 = vmor %vm785, %vm786
  %v788 = vsel %vm787, %v779, %v784
  %v789 = vrsqrt.pop %v638
  %v790 = vmul.f32 %v789, %v638
  %v791 = vmul.f32 %v790, %v789
  %v792 = vmul.f32 0.5, %v791
  %v793 = vsub.f32 1.5, %v792
  %v794 = vmul.f32 %v789, %v793
  %vm795 = vweird.f32 %v638
  %vm796 = vweird.f32 %v789
  %vm797 = vmor %vm795, %vm796
  %v798 = vsel %vm797, %v789, %v794
  %v799 = vmul.f32 %v607, %v648
  %v800 = vmul.f32 %v608, %v658
  %v801 = vmul.f32 %v609, %v668
  %v802 = vmul.f32 %v610, %v678
  %v803 = vmul.f32 %v611, %v688
  %v804 = vmul.f32 %v612, %v698
  %v805 = vmul.f32 %v613, %v708
  %v806 = vmul.f32 %v614, %v718
  %v807 = vmul.f32 %v615, %v728
  %v808 = vmul.f32 %v616, %v738
  %v809 = vmul.f32 %v617, %v748
  %v810 = vmul.f32 %v618, %v758
  %v811 = vmul.f32 %v619, %v768
  %v812 = vmul.f32 %v620, %v778
  %v813 = vmul.f32 %v621, %v788
  %v814 = vmul.f32 %v622, %v798
  %v815 = vperm.slane %v82, 1
  %v816 = vmul.f32 %v799, %v815
  %v817 = vmul.f32 %v800, %v815
  %v818 = vmul.f32 %v801, %v815
  %v819 = vmul.f32 %v802, %v815
  %v820 = vmul.f32 %v803, %v815
  %v821 = vmul.f32 %v804, %v815
  %v822 = vmul.f32 %v805, %v815
  %v823 = vmul.f32 %v806, %v815
  %v824 = vmul.f32 %v807, %v815
  %v825 = vmul.f32 %v808, %v815
  %v826 = vmul.f32 %v809, %v815
  %v827 = vmul.f32 %v810, %v815
  %v828 = vmul.f32 %v811, %v815
  %v829 = vmul.f32 %v812, %v815
  %v830 = vmul.f32 %v813, %v815
  %v831 = vmul.f32 %v814, %v815
  %v832 = vperm.slane %v82, 2
  %v833 = vadd.f32 %v816, %v832
  %v834 = vadd.f32 %v817, %v832
  %v835 = vadd.f32 %v818, %v832
  %v836 = vadd.f32 %v819, %v832
  %v837 = vadd.f32 %v820, %v832
  %v838 = vadd.f32 %v821, %v832
  %v839 = vadd.f32 %v822, %v832
  %v840 = vadd.f32 %v823, %v832
  %v841 = vadd.f32 %v824, %v832
  %v842 = vadd.f32 %v825, %v832
  %v843 = vadd.f32 %v826, %v832
  %v844 = vadd.f32 %v827, %v832
  %v845 = vadd.f32 %v828, %v832
  %v846 = vadd.f32 %v829, %v832
  %v847 = vadd.f32 %v830, %v832
  %v848 = vadd.f32 %v831, %v832
  %v849 = vmax.f32 %v833, 0.0
  %v850 = vmax.f32 %v834, 0.0
  %v851 = vmax.f32 %v835, 0.0
  %v852 = vmax.f32 %v836, 0.0
  %v853 = vmax.f32 %v837, 0.0
  %v854 = vmax.f32 %v838, 0.0
  %v855 = vmax.f32 %v839, 0.0
  %v856 = vmax.f32 %v840, 0.0
  %v857 = vmax.f32 %v841, 0.0
  %v858 = vmax.f32 %v842, 0.0
  %v859 = vmax.f32 %v843, 0.0
  %v860 = vmax.f32 %v844, 0.0
  %v861 = vmax.f32 %v845, 0.0
  %v862 = vmax.f32 %v846, 0.0
  %v863 = vmax.f32 %v847, 0.0
  %v864 = vmax.f32 %v848, 0.0
  %v865 = vpack.c.bf16 %v850, %v849
  %v866 = vpack.c.bf16 %v852, %v851
  %v867 = vpack.c.bf16 %v854, %v853
  %v868 = vpack.c.bf16 %v856, %v855
  %v869 = vpack.c.bf16 %v858, %v857
  %v870 = vpack.c.bf16 %v860, %v859
  %v871 = vpack.c.bf16 %v862, %v861
  %v872 = vpack.c.bf16 %v864, %v863
  %v873 = vld [vmem:[%s7] sm:$0x7]
  %v874 = vld [vmem:[%s3] sm:$0xff]
  %v875 = vld [vmem:[%s3 + $0x8] sm:$0xff]
  %v876 = vld [vmem:[%s3 + $0x10] sm:$0xff]
  %v877 = vld [vmem:[%s3 + $0x18] sm:$0xff]
  %v878 = vld [vmem:[%s3 + $0x20] sm:$0xff]
  %v879 = vld [vmem:[%s3 + $0x28] sm:$0xff]
  %v880 = vld [vmem:[%s3 + $0x30] sm:$0xff]
  %v881 = vld [vmem:[%s3 + $0x38] sm:$0xff]
  %v882 = vld [vmem:[%s3 + $0x40] sm:$0xff]
  %v883 = vld [vmem:[%s3 + $0x48] sm:$0xff]
  %v884 = vld [vmem:[%s3 + $0x50] sm:$0xff]
  %v885 = vld [vmem:[%s3 + $0x58] sm:$0xff]
  %v886 = vld [vmem:[%s3 + $0x60] sm:$0xff]
  %v887 = vld [vmem:[%s3 + $0x68] sm:$0xff]
  %v888 = vld [vmem:[%s3 + $0x70] sm:$0xff]
  %v889 = vld [vmem:[%s3 + $0x78] sm:$0xff]
  %v906 = vunpack.c.l.b16 %v874
  %v907 = vunpack.c.h.b16 %v874
  %v908 = vunpack.c.l.b16 %v875
  %v909 = vunpack.c.h.b16 %v875
  %v910 = vunpack.c.l.b16 %v876
  %v911 = vunpack.c.h.b16 %v876
  %v912 = vunpack.c.l.b16 %v877
  %v913 = vunpack.c.h.b16 %v877
  %v914 = vunpack.c.l.b16 %v878
  %v915 = vunpack.c.h.b16 %v878
  %v916 = vunpack.c.l.b16 %v879
  %v917 = vunpack.c.h.b16 %v879
  %v918 = vunpack.c.l.b16 %v880
  %v919 = vunpack.c.h.b16 %v880
  %v920 = vunpack.c.l.b16 %v881
  %v921 = vunpack.c.h.b16 %v881
  %v922 = vunpack.c.l.b16 %v882
  %v923 = vunpack.c.h.b16 %v882
  %v924 = vunpack.c.l.b16 %v883
  %v925 = vunpack.c.h.b16 %v883
  %v926 = vunpack.c.l.b16 %v884
  %v927 = vunpack.c.h.b16 %v884
  %v928 = vunpack.c.l.b16 %v885
  %v929 = vunpack.c.h.b16 %v885
  %v930 = vunpack.c.l.b16 %v886
  %v931 = vunpack.c.h.b16 %v886
  %v932 = vunpack.c.l.b16 %v887
  %v933 = vunpack.c.h.b16 %v887
  %v934 = vunpack.c.l.b16 %v888
  %v935 = vunpack.c.h.b16 %v888
  %v936 = vunpack.c.l.b16 %v889
  %v937 = vunpack.c.h.b16 %v889
  %v938 = vpack.c.b16 %v908, %v906
  %v939 = vpack.c.b16 %v909, %v907
  %v940 = vpack.c.b16 %v912, %v910
  %v941 = vpack.c.b16 %v913, %v911
  %v942 = vpack.c.b16 %v916, %v914
  %v943 = vpack.c.b16 %v917, %v915
  %v944 = vpack.c.b16 %v920, %v918
  %v945 = vpack.c.b16 %v921, %v919
  %v946 = vpack.c.b16 %v924, %v922
  %v947 = vpack.c.b16 %v925, %v923
  %v948 = vpack.c.b16 %v928, %v926
  %v949 = vpack.c.b16 %v929, %v927
  %v950 = vpack.c.b16 %v932, %v930
  %v951 = vpack.c.b16 %v933, %v931
  %v952 = vpack.c.b16 %v936, %v934
  %v953 = vpack.c.b16 %v937, %v935
  %970 = vmatpush.bf16.msra.mxu0 %v952
  %971 = vmatpush.bf16.msra.mxu0 %v950
  %972 = vmatpush.bf16.msra.mxu0 %v948
  %973 = vmatpush.bf16.msra.mxu0 %v946
  %974 = vmatpush.bf16.msra.mxu0 %v944
  %975 = vmatpush.bf16.msra.mxu0 %v942
  %976 = vmatpush.bf16.msra.mxu0 %v940
  %977 = vmatpush.bf16.msra.mxu0 %v938
  %978 = vmatmul.bf16.gmra.mxu0 %v865
  %v979 = vpop.f32.mrf.mxu0
  %v980 = vadd.f32 0.0, %v979
  %v981 = vpop.f32.mrf.mxu0
  %v982 = vadd.f32 0.0, %v981
  %983 = vmatmul.bf16.gmra.mxu0 %v866
  %v984 = vpop.f32.mrf.mxu0
  %v985 = vadd.f32 0.0, %v984
  %v986 = vpop.f32.mrf.mxu0
  %v987 = vadd.f32 0.0, %v986
  %988 = vmatmul.bf16.gmra.mxu0 %v867
  %v989 = vpop.f32.mrf.mxu0
  %v990 = vadd.f32 0.0, %v989
  %v991 = vpop.f32.mrf.mxu0
  %v992 = vadd.f32 0.0, %v991
  %993 = vmatmul.bf16.gmra.mxu0 %v868
  %v994 = vpop.f32.mrf.mxu0
  %v995 = vadd.f32 0.0, %v994
  %v996 = vpop.f32.mrf.mxu0
  %v997 = vadd.f32 0.0, %v996
  %998 = vmatmul.bf16.gmra.mxu0 %v869
  %v999 = vpop.f32.mrf.mxu0
  %v1000 = vadd.f32 0.0, %v999
  %v1001 = vpop.f32.mrf.mxu0
  %v1002 = vadd.f32 0.0, %v1001
  %1003 = vmatmul.bf16.gmra.mxu0 %v870
  %v1004 = vpop.f32.mrf.mxu0
  %v1005 = vadd.f32 0.0, %v1004
  %v1006 = vpop.f32.mrf.mxu0
  %v1007 = vadd.f32 0.0, %v1006
  %1008 = vmatmul.bf16.gmra.mxu0 %v871
  %v1009 = vpop.f32.mrf.mxu0
  %v1010 = vadd.f32 0.0, %v1009
  %v1011 = vpop.f32.mrf.mxu0
  %v1012 = vadd.f32 0.0, %v1011
  %1013 = vmatmul.bf16.gmra.mxu0 %v872
  %v1014 = vpop.f32.mrf.mxu0
  %v1015 = vadd.f32 0.0, %v1014
  %v1016 = vpop.f32.mrf.mxu0
  %v1017 = vadd.f32 0.0, %v1016
  %1018 = vdwg.mxu0
  %1019 = vmatpush.bf16.msra.mxu0 %v953
  %1020 = vmatpush.bf16.msra.mxu0 %v951
  %1021 = vmatpush.bf16.msra.mxu0 %v949
  %1022 = vmatpush.bf16.msra.mxu0 %v947
  %1023 = vmatpush.bf16.msra.mxu0 %v945
  %1024 = vmatpush.bf16.msra.mxu0 %v943
  %1025 = vmatpush.bf16.msra.mxu0 %v941
  %1026 = vmatpush.bf16.msra.mxu0 %v939
  %1027 = vmatmul.bf16.gmra.mxu0 %v865
  %v1028 = vpop.f32.mrf.mxu0
  %v1029 = vadd.f32 0.0, %v1028
  %v1030 = vpop.f32.mrf.mxu0
  %v1031 = vadd.f32 0.0, %v1030
  %1032 = vmatmul.bf16.gmra.mxu0 %v866
  %v1033 = vpop.f32.mrf.mxu0
  %v1034 = vadd.f32 0.0, %v1033
  %v1035 = vpop.f32.mrf.mxu0
  %v1036 = vadd.f32 0.0, %v1035
  %1037 = vmatmul.bf16.gmra.mxu0 %v867
  %v1038 = vpop.f32.mrf.mxu0
  %v1039 = vadd.f32 0.0, %v1038
  %v1040 = vpop.f32.mrf.mxu0
  %v1041 = vadd.f32 0.0, %v1040
  %1042 = vmatmul.bf16.gmra.mxu0 %v868
  %v1043 = vpop.f32.mrf.mxu0
  %v1044 = vadd.f32 0.0, %v1043
  %v1045 = vpop.f32.mrf.mxu0
  %v1046 = vadd.f32 0.0, %v1045
  %1047 = vmatmul.bf16.gmra.mxu0 %v869
  %v1048 = vpop.f32.mrf.mxu0
  %v1049 = vadd.f32 0.0, %v1048
  %v1050 = vpop.f32.mrf.mxu0
  %v1051 = vadd.f32 0.0, %v1050
  %1052 = vmatmul.bf16.gmra.mxu0 %v870
  %v1053 = vpop.f32.mrf.mxu0
  %v1054 = vadd.f32 0.0, %v1053
  %v1055 = vpop.f32.mrf.mxu0
  %v1056 = vadd.f32 0.0, %v1055
  %1057 = vmatmul.bf16.gmra.mxu0 %v871
  %v1058 = vpop.f32.mrf.mxu0
  %v1059 = vadd.f32 0.0, %v1058
  %v1060 = vpop.f32.mrf.mxu0
  %v1061 = vadd.f32 0.0, %v1060
  %1062 = vmatmul.bf16.gmra.mxu0 %v872
  %v1063 = vpop.f32.mrf.mxu0
  %v1064 = vadd.f32 0.0, %v1063
  %v1065 = vpop.f32.mrf.mxu0
  %v1066 = vadd.f32 0.0, %v1065
  %1067 = vdwg.mxu0
  %v1068 = vpack.c.bf16 %v982, %v980
  %v1069 = vpack.c.bf16 %v987, %v985
  %v1070 = vpack.c.bf16 %v992, %v990
  %v1071 = vpack.c.bf16 %v997, %v995
  %v1072 = vpack.c.bf16 %v1002, %v1000
  %v1073 = vpack.c.bf16 %v1007, %v1005
  %v1074 = vpack.c.bf16 %v1012, %v1010
  %v1075 = vpack.c.bf16 %v1017, %v1015
  %1076 = vmatpush.bf16.msra.mxu0 %v1075
  %1077 = vmatpush.bf16.msra.mxu0 %v1074
  %1078 = vmatpush.bf16.msra.mxu0 %v1073
  %1079 = vmatpush.bf16.msra.mxu0 %v1072
  %1080 = vmatpush.bf16.msra.mxu0 %v1071
  %1081 = vmatpush.bf16.msra.mxu0 %v1070
  %1082 = vmatpush.bf16.msra.mxu0 %v1069
  %1083 = vmatpush.bf16.msra.mxu0 %v1068
  %1084 = vmatmul.bf16.gmra.mxu0 %v365
  %v1085 = vpop.f32.mrf.mxu0
  %v1086 = vadd.f32 %v1029, %v1085
  %v1087 = vpop.f32.mrf.mxu0
  %v1088 = vadd.f32 %v1031, %v1087
  %1089 = vmatmul.bf16.gmra.mxu0 %v366
  %v1090 = vpop.f32.mrf.mxu0
  %v1091 = vadd.f32 %v1034, %v1090
  %v1092 = vpop.f32.mrf.mxu0
  %v1093 = vadd.f32 %v1036, %v1092
  %1094 = vmatmul.bf16.gmra.mxu0 %v367
  %v1095 = vpop.f32.mrf.mxu0
  %v1096 = vadd.f32 %v1039, %v1095
  %v1097 = vpop.f32.mrf.mxu0
  %v1098 = vadd.f32 %v1041, %v1097
  %1099 = vmatmul.bf16.gmra.mxu0 %v368
  %v1100 = vpop.f32.mrf.mxu0
  %v1101 = vadd.f32 %v1044, %v1100
  %v1102 = vpop.f32.mrf.mxu0
  %v1103 = vadd.f32 %v1046, %v1102
  %1104 = vmatmul.bf16.gmra.mxu0 %v369
  %v1105 = vpop.f32.mrf.mxu0
  %v1106 = vadd.f32 %v1049, %v1105
  %v1107 = vpop.f32.mrf.mxu0
  %v1108 = vadd.f32 %v1051, %v1107
  %1109 = vmatmul.bf16.gmra.mxu0 %v370
  %v1110 = vpop.f32.mrf.mxu0
  %v1111 = vadd.f32 %v1054, %v1110
  %v1112 = vpop.f32.mrf.mxu0
  %v1113 = vadd.f32 %v1056, %v1112
  %1114 = vmatmul.bf16.gmra.mxu0 %v371
  %v1115 = vpop.f32.mrf.mxu0
  %v1116 = vadd.f32 %v1059, %v1115
  %v1117 = vpop.f32.mrf.mxu0
  %v1118 = vadd.f32 %v1061, %v1117
  %1119 = vmatmul.bf16.gmra.mxu0 %v372
  %v1120 = vpop.f32.mrf.mxu0
  %v1121 = vadd.f32 %v1064, %v1120
  %v1122 = vpop.f32.mrf.mxu0
  %v1123 = vadd.f32 %v1066, %v1122
  %1124 = vdwg.mxu0
  %v1125 = vperm.slane %v873, 0
  %v1126 = vadd.f32 %v1086, %v1125
  %v1127 = vadd.f32 %v1088, %v1125
  %v1128 = vadd.f32 %v1091, %v1125
  %v1129 = vadd.f32 %v1093, %v1125
  %v1130 = vadd.f32 %v1096, %v1125
  %v1131 = vadd.f32 %v1098, %v1125
  %v1132 = vadd.f32 %v1101, %v1125
  %v1133 = vadd.f32 %v1103, %v1125
  %v1134 = vadd.f32 %v1106, %v1125
  %v1135 = vadd.f32 %v1108, %v1125
  %v1136 = vadd.f32 %v1111, %v1125
  %v1137 = vadd.f32 %v1113, %v1125
  %v1138 = vadd.f32 %v1116, %v1125
  %v1139 = vadd.f32 %v1118, %v1125
  %v1140 = vadd.f32 %v1121, %v1125
  %v1141 = vadd.f32 %v1123, %v1125
  %1142 = vadd.xlane.f32.xlu0 %v1126
  %v1143 = vpop.xlane.xlu0 %1142
  %1144 = vadd.xlane.f32.xlu0 %v1127
  %v1145 = vpop.xlane.xlu0 %1144
  %1146 = vadd.xlane.f32.xlu0 %v1128
  %v1147 = vpop.xlane.xlu0 %1146
  %1148 = vadd.xlane.f32.xlu0 %v1129
  %v1149 = vpop.xlane.xlu0 %1148
  %1150 = vadd.xlane.f32.xlu0 %v1130
  %v1151 = vpop.xlane.xlu0 %1150
  %1152 = vadd.xlane.f32.xlu0 %v1131
  %v1153 = vpop.xlane.xlu0 %1152
  %1154 = vadd.xlane.f32.xlu0 %v1132
  %v1155 = vpop.xlane.xlu0 %1154
  %1156 = vadd.xlane.f32.xlu0 %v1133
  %v1157 = vpop.xlane.xlu0 %1156
  %1158 = vadd.xlane.f32.xlu0 %v1134
  %v1159 = vpop.xlane.xlu0 %1158
  %1160 = vadd.xlane.f32.xlu0 %v1135
  %v1161 = vpop.xlane.xlu0 %1160
  %1162 = vadd.xlane.f32.xlu0 %v1136
  %v1163 = vpop.xlane.xlu0 %1162
  %1164 = vadd.xlane.f32.xlu0 %v1137
  %v1165 = vpop.xlane.xlu0 %1164
  %1166 = vadd.xlane.f32.xlu0 %v1138
  %v1167 = vpop.xlane.xlu0 %1166
  %1168 = vadd.xlane.f32.xlu0 %v1139
  %v1169 = vpop.xlane.xlu0 %1168
  %1170 = vadd.xlane.f32.xlu0 %v1140
  %v1171 = vpop.xlane.xlu0 %1170
  %1172 = vadd.xlane.f32.xlu0 %v1141
  %v1173 = vpop.xlane.xlu0 %1172
  %v1174 = vmul.f32 %v1143, 0.0625
  %v1175 = vmul.f32 %v1145, 0.0625
  %v1176 = vmul.f32 %v1147, 0.0625
  %v1177 = vmul.f32 %v1149, 0.0625
  %v1178 = vmul.f32 %v1151, 0.0625
  %v1179 = vmul.f32 %v1153, 0.0625
  %v1180 = vmul.f32 %v1155, 0.0625
  %v1181 = vmul.f32 %v1157, 0.0625
  %v1182 = vmul.f32 %v1159, 0.0625
  %v1183 = vmul.f32 %v1161, 0.0625
  %v1184 = vmul.f32 %v1163, 0.0625
  %v1185 = vmul.f32 %v1165, 0.0625
  %v1186 = vmul.f32 %v1167, 0.0625
  %v1187 = vmul.f32 %v1169, 0.0625
  %v1188 = vmul.f32 %v1171, 0.0625
  %v1189 = vmul.f32 %v1173, 0.0625
  %v1190 = vmul.f32 %v1126, %v1126
  %v1191 = vmul.f32 %v1127, %v1127
  %v1192 = vmul.f32 %v1128, %v1128
  %v1193 = vmul.f32 %v1129, %v1129
  %v1194 = vmul.f32 %v1130, %v1130
  %v1195 = vmul.f32 %v1131, %v1131
  %v1196 = vmul.f32 %v1132, %v1132
  %v1197 = vmul.f32 %v1133, %v1133
  %v1198 = vmul.f32 %v1134, %v1134
  %v1199 = vmul.f32 %v1135, %v1135
  %v1200 = vmul.f32 %v1136, %v1136
  %v1201 = vmul.f32 %v1137, %v1137
  %v1202 = vmul.f32 %v1138, %v1138
  %v1203 = vmul.f32 %v1139, %v1139
  %v1204 = vmul.f32 %v1140, %v1140
  %v1205 = vmul.f32 %v1141, %v1141
  %1206 = vadd.xlane.f32.xlu0 %v1190
  %v1207 = vpop.xlane.xlu0 %1206
  %1208 = vadd.xlane.f32.xlu0 %v1191
  %v1209 = vpop.xlane.xlu0 %1208
  %1210 = vadd.xlane.f32.xlu0 %v1192
  %v1211 = vpop.xlane.xlu0 %1210
  %1212 = vadd.xlane.f32.xlu0 %v1193
  %v1213 = vpop.xlane.xlu0 %1212
  %1214 = vadd.xlane.f32.xlu0 %v1194
  %v1215 = vpop.xlane.xlu0 %1214
  %1216 = vadd.xlane.f32.xlu0 %v1195
  %v1217 = vpop.xlane.xlu0 %1216
  %1218 = vadd.xlane.f32.xlu0 %v1196
  %v1219 = vpop.xlane.xlu0 %1218
  %1220 = vadd.xlane.f32.xlu0 %v1197
  %v1221 = vpop.xlane.xlu0 %1220
  %1222 = vadd.xlane.f32.xlu0 %v1198
  %v1223 = vpop.xlane.xlu0 %1222
  %1224 = vadd.xlane.f32.xlu0 %v1199
  %v1225 = vpop.xlane.xlu0 %1224
  %1226 = vadd.xlane.f32.xlu0 %v1200
  %v1227 = vpop.xlane.xlu0 %1226
  %1228 = vadd.xlane.f32.xlu0 %v1201
  %v1229 = vpop.xlane.xlu0 %1228
  %1230 = vadd.xlane.f32.xlu0 %v1202
  %v1231 = vpop.xlane.xlu0 %1230
  %1232 = vadd.xlane.f32.xlu0 %v1203
  %v1233 = vpop.xlane.xlu0 %1232
  %1234 = vadd.xlane.f32.xlu0 %v1204
  %v1235 = vpop.xlane.xlu0 %1234
  %1236 = vadd.xlane.f32.xlu0 %v1205
  %v1237 = vpop.xlane.xlu0 %1236
  %v1238 = vmul.f32 %v1207, 0.0625
  %v1239 = vmul.f32 %v1209, 0.0625
  %v1240 = vmul.f32 %v1211, 0.0625
  %v1241 = vmul.f32 %v1213, 0.0625
  %v1242 = vmul.f32 %v1215, 0.0625
  %v1243 = vmul.f32 %v1217, 0.0625
  %v1244 = vmul.f32 %v1219, 0.0625
  %v1245 = vmul.f32 %v1221, 0.0625
  %v1246 = vmul.f32 %v1223, 0.0625
  %v1247 = vmul.f32 %v1225, 0.0625
  %v1248 = vmul.f32 %v1227, 0.0625
  %v1249 = vmul.f32 %v1229, 0.0625
  %v1250 = vmul.f32 %v1231, 0.0625
  %v1251 = vmul.f32 %v1233, 0.0625
  %v1252 = vmul.f32 %v1235, 0.0625
  %v1253 = vmul.f32 %v1237, 0.0625
  %v1254 = vmul.f32 %v1174, %v1174
  %v1255 = vmul.f32 %v1175, %v1175
  %v1256 = vmul.f32 %v1176, %v1176
  %v1257 = vmul.f32 %v1177, %v1177
  %v1258 = vmul.f32 %v1178, %v1178
  %v1259 = vmul.f32 %v1179, %v1179
  %v1260 = vmul.f32 %v1180, %v1180
  %v1261 = vmul.f32 %v1181, %v1181
  %v1262 = vmul.f32 %v1182, %v1182
  %v1263 = vmul.f32 %v1183, %v1183
  %v1264 = vmul.f32 %v1184, %v1184
  %v1265 = vmul.f32 %v1185, %v1185
  %v1266 = vmul.f32 %v1186, %v1186
  %v1267 = vmul.f32 %v1187, %v1187
  %v1268 = vmul.f32 %v1188, %v1188
  %v1269 = vmul.f32 %v1189, %v1189
  %v1270 = vsub.f32 %v1238, %v1254
  %v1271 = vsub.f32 %v1239, %v1255
  %v1272 = vsub.f32 %v1240, %v1256
  %v1273 = vsub.f32 %v1241, %v1257
  %v1274 = vsub.f32 %v1242, %v1258
  %v1275 = vsub.f32 %v1243, %v1259
  %v1276 = vsub.f32 %v1244, %v1260
  %v1277 = vsub.f32 %v1245, %v1261
  %v1278 = vsub.f32 %v1246, %v1262
  %v1279 = vsub.f32 %v1247, %v1263
  %v1280 = vsub.f32 %v1248, %v1264
  %v1281 = vsub.f32 %v1249, %v1265
  %v1282 = vsub.f32 %v1250, %v1266
  %v1283 = vsub.f32 %v1251, %v1267
  %v1284 = vsub.f32 %v1252, %v1268
  %v1285 = vsub.f32 %v1253, %v1269
  %v1286 = vmax.f32 %v1270, 0.0
  %v1287 = vmax.f32 %v1271, 0.0
  %v1288 = vmax.f32 %v1272, 0.0
  %v1289 = vmax.f32 %v1273, 0.0
  %v1290 = vmax.f32 %v1274, 0.0
  %v1291 = vmax.f32 %v1275, 0.0
  %v1292 = vmax.f32 %v1276, 0.0
  %v1293 = vmax.f32 %v1277, 0.0
  %v1294 = vmax.f32 %v1278, 0.0
  %v1295 = vmax.f32 %v1279, 0.0
  %v1296 = vmax.f32 %v1280, 0.0
  %v1297 = vmax.f32 %v1281, 0.0
  %v1298 = vmax.f32 %v1282, 0.0
  %v1299 = vmax.f32 %v1283, 0.0
  %v1300 = vmax.f32 %v1284, 0.0
  %v1301 = vmax.f32 %v1285, 0.0
  %v1302 = vsub.f32 %v1126, %v1174
  %v1303 = vsub.f32 %v1127, %v1175
  %v1304 = vsub.f32 %v1128, %v1176
  %v1305 = vsub.f32 %v1129, %v1177
  %v1306 = vsub.f32 %v1130, %v1178
  %v1307 = vsub.f32 %v1131, %v1179
  %v1308 = vsub.f32 %v1132, %v1180
  %v1309 = vsub.f32 %v1133, %v1181
  %v1310 = vsub.f32 %v1134, %v1182
  %v1311 = vsub.f32 %v1135, %v1183
  %v1312 = vsub.f32 %v1136, %v1184
  %v1313 = vsub.f32 %v1137, %v1185
  %v1314 = vsub.f32 %v1138, %v1186
  %v1315 = vsub.f32 %v1139, %v1187
  %v1316 = vsub.f32 %v1140, %v1188
  %v1317 = vsub.f32 %v1141, %v1189
  %v1318 = vadd.f32 %v1286, 1e-05
  %v1319 = vadd.f32 %v1287, 1e-05
  %v1320 = vadd.f32 %v1288, 1e-05
  %v1321 = vadd.f32 %v1289, 1e-05
  %v1322 = vadd.f32 %v1290, 1e-05
  %v1323 = vadd.f32 %v1291, 1e-05
  %v1324 = vadd.f32 %v1292, 1e-05
  %v1325 = vadd.f32 %v1293, 1e-05
  %v1326 = vadd.f32 %v1294, 1e-05
  %v1327 = vadd.f32 %v1295, 1e-05
  %v1328 = vadd.f32 %v1296, 1e-05
  %v1329 = vadd.f32 %v1297, 1e-05
  %v1330 = vadd.f32 %v1298, 1e-05
  %v1331 = vadd.f32 %v1299, 1e-05
  %v1332 = vadd.f32 %v1300, 1e-05
  %v1333 = vadd.f32 %v1301, 1e-05
  %v1334 = vrsqrt.pop %v1318
  %v1335 = vmul.f32 %v1334, %v1318
  %v1336 = vmul.f32 %v1335, %v1334
  %v1337 = vmul.f32 0.5, %v1336
  %v1338 = vsub.f32 1.5, %v1337
  %v1339 = vmul.f32 %v1334, %v1338
  %vm1340 = vweird.f32 %v1318
  %vm1341 = vweird.f32 %v1334
  %vm1342 = vmor %vm1340, %vm1341
  %v1343 = vsel %vm1342, %v1334, %v1339
  %v1344 = vrsqrt.pop %v1319
  %v1345 = vmul.f32 %v1344, %v1319
  %v1346 = vmul.f32 %v1345, %v1344
  %v1347 = vmul.f32 0.5, %v1346
  %v1348 = vsub.f32 1.5, %v1347
  %v1349 = vmul.f32 %v1344, %v1348
  %vm1350 = vweird.f32 %v1319
  %vm1351 = vweird.f32 %v1344
  %vm1352 = vmor %vm1350, %vm1351
  %v1353 = vsel %vm1352, %v1344, %v1349
  %v1354 = vrsqrt.pop %v1320
  %v1355 = vmul.f32 %v1354, %v1320
  %v1356 = vmul.f32 %v1355, %v1354
  %v1357 = vmul.f32 0.5, %v1356
  %v1358 = vsub.f32 1.5, %v1357
  %v1359 = vmul.f32 %v1354, %v1358
  %vm1360 = vweird.f32 %v1320
  %vm1361 = vweird.f32 %v1354
  %vm1362 = vmor %vm1360, %vm1361
  %v1363 = vsel %vm1362, %v1354, %v1359
  %v1364 = vrsqrt.pop %v1321
  %v1365 = vmul.f32 %v1364, %v1321
  %v1366 = vmul.f32 %v1365, %v1364
  %v1367 = vmul.f32 0.5, %v1366
  %v1368 = vsub.f32 1.5, %v1367
  %v1369 = vmul.f32 %v1364, %v1368
  %vm1370 = vweird.f32 %v1321
  %vm1371 = vweird.f32 %v1364
  %vm1372 = vmor %vm1370, %vm1371
  %v1373 = vsel %vm1372, %v1364, %v1369
  %v1374 = vrsqrt.pop %v1322
  %v1375 = vmul.f32 %v1374, %v1322
  %v1376 = vmul.f32 %v1375, %v1374
  %v1377 = vmul.f32 0.5, %v1376
  %v1378 = vsub.f32 1.5, %v1377
  %v1379 = vmul.f32 %v1374, %v1378
  %vm1380 = vweird.f32 %v1322
  %vm1381 = vweird.f32 %v1374
  %vm1382 = vmor %vm1380, %vm1381
  %v1383 = vsel %vm1382, %v1374, %v1379
  %v1384 = vrsqrt.pop %v1323
  %v1385 = vmul.f32 %v1384, %v1323
  %v1386 = vmul.f32 %v1385, %v1384
  %v1387 = vmul.f32 0.5, %v1386
  %v1388 = vsub.f32 1.5, %v1387
  %v1389 = vmul.f32 %v1384, %v1388
  %vm1390 = vweird.f32 %v1323
  %vm1391 = vweird.f32 %v1384
  %vm1392 = vmor %vm1390, %vm1391
  %v1393 = vsel %vm1392, %v1384, %v1389
  %v1394 = vrsqrt.pop %v1324
  %v1395 = vmul.f32 %v1394, %v1324
  %v1396 = vmul.f32 %v1395, %v1394
  %v1397 = vmul.f32 0.5, %v1396
  %v1398 = vsub.f32 1.5, %v1397
  %v1399 = vmul.f32 %v1394, %v1398
  %vm1400 = vweird.f32 %v1324
  %vm1401 = vweird.f32 %v1394
  %vm1402 = vmor %vm1400, %vm1401
  %v1403 = vsel %vm1402, %v1394, %v1399
  %v1404 = vrsqrt.pop %v1325
  %v1405 = vmul.f32 %v1404, %v1325
  %v1406 = vmul.f32 %v1405, %v1404
  %v1407 = vmul.f32 0.5, %v1406
  %v1408 = vsub.f32 1.5, %v1407
  %v1409 = vmul.f32 %v1404, %v1408
  %vm1410 = vweird.f32 %v1325
  %vm1411 = vweird.f32 %v1404
  %vm1412 = vmor %vm1410, %vm1411
  %v1413 = vsel %vm1412, %v1404, %v1409
  %v1414 = vrsqrt.pop %v1326
  %v1415 = vmul.f32 %v1414, %v1326
  %v1416 = vmul.f32 %v1415, %v1414
  %v1417 = vmul.f32 0.5, %v1416
  %v1418 = vsub.f32 1.5, %v1417
  %v1419 = vmul.f32 %v1414, %v1418
  %vm1420 = vweird.f32 %v1326
  %vm1421 = vweird.f32 %v1414
  %vm1422 = vmor %vm1420, %vm1421
  %v1423 = vsel %vm1422, %v1414, %v1419
  %v1424 = vrsqrt.pop %v1327
  %v1425 = vmul.f32 %v1424, %v1327
  %v1426 = vmul.f32 %v1425, %v1424
  %v1427 = vmul.f32 0.5, %v1426
  %v1428 = vsub.f32 1.5, %v1427
  %v1429 = vmul.f32 %v1424, %v1428
  %vm1430 = vweird.f32 %v1327
  %vm1431 = vweird.f32 %v1424
  %vm1432 = vmor %vm1430, %vm1431
  %v1433 = vsel %vm1432, %v1424, %v1429
  %v1434 = vrsqrt.pop %v1328
  %v1435 = vmul.f32 %v1434, %v1328
  %v1436 = vmul.f32 %v1435, %v1434
  %v1437 = vmul.f32 0.5, %v1436
  %v1438 = vsub.f32 1.5, %v1437
  %v1439 = vmul.f32 %v1434, %v1438
  %vm1440 = vweird.f32 %v1328
  %vm1441 = vweird.f32 %v1434
  %vm1442 = vmor %vm1440, %vm1441
  %v1443 = vsel %vm1442, %v1434, %v1439
  %v1444 = vrsqrt.pop %v1329
  %v1445 = vmul.f32 %v1444, %v1329
  %v1446 = vmul.f32 %v1445, %v1444
  %v1447 = vmul.f32 0.5, %v1446
  %v1448 = vsub.f32 1.5, %v1447
  %v1449 = vmul.f32 %v1444, %v1448
  %vm1450 = vweird.f32 %v1329
  %vm1451 = vweird.f32 %v1444
  %vm1452 = vmor %vm1450, %vm1451
  %v1453 = vsel %vm1452, %v1444, %v1449
  %v1454 = vrsqrt.pop %v1330
  %v1455 = vmul.f32 %v1454, %v1330
  %v1456 = vmul.f32 %v1455, %v1454
  %v1457 = vmul.f32 0.5, %v1456
  %v1458 = vsub.f32 1.5, %v1457
  %v1459 = vmul.f32 %v1454, %v1458
  %vm1460 = vweird.f32 %v1330
  %vm1461 = vweird.f32 %v1454
  %vm1462 = vmor %vm1460, %vm1461
  %v1463 = vsel %vm1462, %v1454, %v1459
  %v1464 = vrsqrt.pop %v1331
  %v1465 = vmul.f32 %v1464, %v1331
  %v1466 = vmul.f32 %v1465, %v1464
  %v1467 = vmul.f32 0.5, %v1466
  %v1468 = vsub.f32 1.5, %v1467
  %v1469 = vmul.f32 %v1464, %v1468
  %vm1470 = vweird.f32 %v1331
  %vm1471 = vweird.f32 %v1464
  %vm1472 = vmor %vm1470, %vm1471
  %v1473 = vsel %vm1472, %v1464, %v1469
  %v1474 = vrsqrt.pop %v1332
  %v1475 = vmul.f32 %v1474, %v1332
  %v1476 = vmul.f32 %v1475, %v1474
  %v1477 = vmul.f32 0.5, %v1476
  %v1478 = vsub.f32 1.5, %v1477
  %v1479 = vmul.f32 %v1474, %v1478
  %vm1480 = vweird.f32 %v1332
  %vm1481 = vweird.f32 %v1474
  %vm1482 = vmor %vm1480, %vm1481
  %v1483 = vsel %vm1482, %v1474, %v1479
  %v1484 = vrsqrt.pop %v1333
  %v1485 = vmul.f32 %v1484, %v1333
  %v1486 = vmul.f32 %v1485, %v1484
  %v1487 = vmul.f32 0.5, %v1486
  %v1488 = vsub.f32 1.5, %v1487
  %v1489 = vmul.f32 %v1484, %v1488
  %vm1490 = vweird.f32 %v1333
  %vm1491 = vweird.f32 %v1484
  %vm1492 = vmor %vm1490, %vm1491
  %v1493 = vsel %vm1492, %v1484, %v1489
  %v1494 = vmul.f32 %v1302, %v1343
  %v1495 = vmul.f32 %v1303, %v1353
  %v1496 = vmul.f32 %v1304, %v1363
  %v1497 = vmul.f32 %v1305, %v1373
  %v1498 = vmul.f32 %v1306, %v1383
  %v1499 = vmul.f32 %v1307, %v1393
  %v1500 = vmul.f32 %v1308, %v1403
  %v1501 = vmul.f32 %v1309, %v1413
  %v1502 = vmul.f32 %v1310, %v1423
  %v1503 = vmul.f32 %v1311, %v1433
  %v1504 = vmul.f32 %v1312, %v1443
  %v1505 = vmul.f32 %v1313, %v1453
  %v1506 = vmul.f32 %v1314, %v1463
  %v1507 = vmul.f32 %v1315, %v1473
  %v1508 = vmul.f32 %v1316, %v1483
  %v1509 = vmul.f32 %v1317, %v1493
  %v1510 = vperm.slane %v873, 1
  %v1511 = vmul.f32 %v1494, %v1510
  %v1512 = vmul.f32 %v1495, %v1510
  %v1513 = vmul.f32 %v1496, %v1510
  %v1514 = vmul.f32 %v1497, %v1510
  %v1515 = vmul.f32 %v1498, %v1510
  %v1516 = vmul.f32 %v1499, %v1510
  %v1517 = vmul.f32 %v1500, %v1510
  %v1518 = vmul.f32 %v1501, %v1510
  %v1519 = vmul.f32 %v1502, %v1510
  %v1520 = vmul.f32 %v1503, %v1510
  %v1521 = vmul.f32 %v1504, %v1510
  %v1522 = vmul.f32 %v1505, %v1510
  %v1523 = vmul.f32 %v1506, %v1510
  %v1524 = vmul.f32 %v1507, %v1510
  %v1525 = vmul.f32 %v1508, %v1510
  %v1526 = vmul.f32 %v1509, %v1510
  %v1527 = vperm.slane %v873, 2
  %v1528 = vadd.f32 %v1511, %v1527
  %v1529 = vadd.f32 %v1512, %v1527
  %v1530 = vadd.f32 %v1513, %v1527
  %v1531 = vadd.f32 %v1514, %v1527
  %v1532 = vadd.f32 %v1515, %v1527
  %v1533 = vadd.f32 %v1516, %v1527
  %v1534 = vadd.f32 %v1517, %v1527
  %v1535 = vadd.f32 %v1518, %v1527
  %v1536 = vadd.f32 %v1519, %v1527
  %v1537 = vadd.f32 %v1520, %v1527
  %v1538 = vadd.f32 %v1521, %v1527
  %v1539 = vadd.f32 %v1522, %v1527
  %v1540 = vadd.f32 %v1523, %v1527
  %v1541 = vadd.f32 %v1524, %v1527
  %v1542 = vadd.f32 %v1525, %v1527
  %v1543 = vadd.f32 %v1526, %v1527
  %v1544 = vmax.f32 %v1528, 0.0
  %v1545 = vmax.f32 %v1529, 0.0
  %v1546 = vmax.f32 %v1530, 0.0
  %v1547 = vmax.f32 %v1531, 0.0
  %v1548 = vmax.f32 %v1532, 0.0
  %v1549 = vmax.f32 %v1533, 0.0
  %v1550 = vmax.f32 %v1534, 0.0
  %v1551 = vmax.f32 %v1535, 0.0
  %v1552 = vmax.f32 %v1536, 0.0
  %v1553 = vmax.f32 %v1537, 0.0
  %v1554 = vmax.f32 %v1538, 0.0
  %v1555 = vmax.f32 %v1539, 0.0
  %v1556 = vmax.f32 %v1540, 0.0
  %v1557 = vmax.f32 %v1541, 0.0
  %v1558 = vmax.f32 %v1542, 0.0
  %v1559 = vmax.f32 %v1543, 0.0
  %v1560 = vpack.c.bf16 %v1545, %v1544
  %v1561 = vpack.c.bf16 %v1547, %v1546
  %v1562 = vpack.c.bf16 %v1549, %v1548
  %v1563 = vpack.c.bf16 %v1551, %v1550
  %v1564 = vpack.c.bf16 %v1553, %v1552
  %v1565 = vpack.c.bf16 %v1555, %v1554
  %v1566 = vpack.c.bf16 %v1557, %v1556
  %v1567 = vpack.c.bf16 %v1559, %v1558
  %v1568 = vld [vmem:[%s8] sm:$0x7]
  %v1569 = vld [vmem:[%s4] sm:$0xff]
  %v1570 = vld [vmem:[%s4 + $0x8] sm:$0xff]
  %v1571 = vld [vmem:[%s4 + $0x10] sm:$0xff]
  %v1572 = vld [vmem:[%s4 + $0x18] sm:$0xff]
  %v1573 = vld [vmem:[%s4 + $0x20] sm:$0xff]
  %v1574 = vld [vmem:[%s4 + $0x28] sm:$0xff]
  %v1575 = vld [vmem:[%s4 + $0x30] sm:$0xff]
  %v1576 = vld [vmem:[%s4 + $0x38] sm:$0xff]
  %v1577 = vld [vmem:[%s4 + $0x40] sm:$0xff]
  %v1578 = vld [vmem:[%s4 + $0x48] sm:$0xff]
  %v1579 = vld [vmem:[%s4 + $0x50] sm:$0xff]
  %v1580 = vld [vmem:[%s4 + $0x58] sm:$0xff]
  %v1581 = vld [vmem:[%s4 + $0x60] sm:$0xff]
  %v1582 = vld [vmem:[%s4 + $0x68] sm:$0xff]
  %v1583 = vld [vmem:[%s4 + $0x70] sm:$0xff]
  %v1584 = vld [vmem:[%s4 + $0x78] sm:$0xff]
  %v1601 = vunpack.c.l.b16 %v1569
  %v1602 = vunpack.c.h.b16 %v1569
  %v1603 = vunpack.c.l.b16 %v1570
  %v1604 = vunpack.c.h.b16 %v1570
  %v1605 = vunpack.c.l.b16 %v1571
  %v1606 = vunpack.c.h.b16 %v1571
  %v1607 = vunpack.c.l.b16 %v1572
  %v1608 = vunpack.c.h.b16 %v1572
  %v1609 = vunpack.c.l.b16 %v1573
  %v1610 = vunpack.c.h.b16 %v1573
  %v1611 = vunpack.c.l.b16 %v1574
  %v1612 = vunpack.c.h.b16 %v1574
  %v1613 = vunpack.c.l.b16 %v1575
  %v1614 = vunpack.c.h.b16 %v1575
  %v1615 = vunpack.c.l.b16 %v1576
  %v1616 = vunpack.c.h.b16 %v1576
  %v1617 = vunpack.c.l.b16 %v1577
  %v1618 = vunpack.c.h.b16 %v1577
  %v1619 = vunpack.c.l.b16 %v1578
  %v1620 = vunpack.c.h.b16 %v1578
  %v1621 = vunpack.c.l.b16 %v1579
  %v1622 = vunpack.c.h.b16 %v1579
  %v1623 = vunpack.c.l.b16 %v1580
  %v1624 = vunpack.c.h.b16 %v1580
  %v1625 = vunpack.c.l.b16 %v1581
  %v1626 = vunpack.c.h.b16 %v1581
  %v1627 = vunpack.c.l.b16 %v1582
  %v1628 = vunpack.c.h.b16 %v1582
  %v1629 = vunpack.c.l.b16 %v1583
  %v1630 = vunpack.c.h.b16 %v1583
  %v1631 = vunpack.c.l.b16 %v1584
  %v1632 = vunpack.c.h.b16 %v1584
  %v1633 = vpack.c.b16 %v1603, %v1601
  %v1634 = vpack.c.b16 %v1604, %v1602
  %v1635 = vpack.c.b16 %v1607, %v1605
  %v1636 = vpack.c.b16 %v1608, %v1606
  %v1637 = vpack.c.b16 %v1611, %v1609
  %v1638 = vpack.c.b16 %v1612, %v1610
  %v1639 = vpack.c.b16 %v1615, %v1613
  %v1640 = vpack.c.b16 %v1616, %v1614
  %v1641 = vpack.c.b16 %v1619, %v1617
  %v1642 = vpack.c.b16 %v1620, %v1618
  %v1643 = vpack.c.b16 %v1623, %v1621
  %v1644 = vpack.c.b16 %v1624, %v1622
  %v1645 = vpack.c.b16 %v1627, %v1625
  %v1646 = vpack.c.b16 %v1628, %v1626
  %v1647 = vpack.c.b16 %v1631, %v1629
  %v1648 = vpack.c.b16 %v1632, %v1630
  %1665 = vmatpush.bf16.msra.mxu0 %v1647
  %1666 = vmatpush.bf16.msra.mxu0 %v1645
  %1667 = vmatpush.bf16.msra.mxu0 %v1643
  %1668 = vmatpush.bf16.msra.mxu0 %v1641
  %1669 = vmatpush.bf16.msra.mxu0 %v1639
  %1670 = vmatpush.bf16.msra.mxu0 %v1637
  %1671 = vmatpush.bf16.msra.mxu0 %v1635
  %1672 = vmatpush.bf16.msra.mxu0 %v1633
  %1673 = vmatmul.bf16.gmra.mxu0 %v1560
  %v1674 = vpop.f32.mrf.mxu0
  %v1675 = vadd.f32 0.0, %v1674
  %v1676 = vpop.f32.mrf.mxu0
  %v1677 = vadd.f32 0.0, %v1676
  %1678 = vmatmul.bf16.gmra.mxu0 %v1561
  %v1679 = vpop.f32.mrf.mxu0
  %v1680 = vadd.f32 0.0, %v1679
  %v1681 = vpop.f32.mrf.mxu0
  %v1682 = vadd.f32 0.0, %v1681
  %1683 = vmatmul.bf16.gmra.mxu0 %v1562
  %v1684 = vpop.f32.mrf.mxu0
  %v1685 = vadd.f32 0.0, %v1684
  %v1686 = vpop.f32.mrf.mxu0
  %v1687 = vadd.f32 0.0, %v1686
  %1688 = vmatmul.bf16.gmra.mxu0 %v1563
  %v1689 = vpop.f32.mrf.mxu0
  %v1690 = vadd.f32 0.0, %v1689
  %v1691 = vpop.f32.mrf.mxu0
  %v1692 = vadd.f32 0.0, %v1691
  %1693 = vmatmul.bf16.gmra.mxu0 %v1564
  %v1694 = vpop.f32.mrf.mxu0
  %v1695 = vadd.f32 0.0, %v1694
  %v1696 = vpop.f32.mrf.mxu0
  %v1697 = vadd.f32 0.0, %v1696
  %1698 = vmatmul.bf16.gmra.mxu0 %v1565
  %v1699 = vpop.f32.mrf.mxu0
  %v1700 = vadd.f32 0.0, %v1699
  %v1701 = vpop.f32.mrf.mxu0
  %v1702 = vadd.f32 0.0, %v1701
  %1703 = vmatmul.bf16.gmra.mxu0 %v1566
  %v1704 = vpop.f32.mrf.mxu0
  %v1705 = vadd.f32 0.0, %v1704
  %v1706 = vpop.f32.mrf.mxu0
  %v1707 = vadd.f32 0.0, %v1706
  %1708 = vmatmul.bf16.gmra.mxu0 %v1567
  %v1709 = vpop.f32.mrf.mxu0
  %v1710 = vadd.f32 0.0, %v1709
  %v1711 = vpop.f32.mrf.mxu0
  %v1712 = vadd.f32 0.0, %v1711
  %1713 = vdwg.mxu0
  %1714 = vmatpush.bf16.msra.mxu0 %v1648
  %1715 = vmatpush.bf16.msra.mxu0 %v1646
  %1716 = vmatpush.bf16.msra.mxu0 %v1644
  %1717 = vmatpush.bf16.msra.mxu0 %v1642
  %1718 = vmatpush.bf16.msra.mxu0 %v1640
  %1719 = vmatpush.bf16.msra.mxu0 %v1638
  %1720 = vmatpush.bf16.msra.mxu0 %v1636
  %1721 = vmatpush.bf16.msra.mxu0 %v1634
  %1722 = vmatmul.bf16.gmra.mxu0 %v1560
  %v1723 = vpop.f32.mrf.mxu0
  %v1724 = vadd.f32 0.0, %v1723
  %v1725 = vpop.f32.mrf.mxu0
  %v1726 = vadd.f32 0.0, %v1725
  %1727 = vmatmul.bf16.gmra.mxu0 %v1561
  %v1728 = vpop.f32.mrf.mxu0
  %v1729 = vadd.f32 0.0, %v1728
  %v1730 = vpop.f32.mrf.mxu0
  %v1731 = vadd.f32 0.0, %v1730
  %1732 = vmatmul.bf16.gmra.mxu0 %v1562
  %v1733 = vpop.f32.mrf.mxu0
  %v1734 = vadd.f32 0.0, %v1733
  %v1735 = vpop.f32.mrf.mxu0
  %v1736 = vadd.f32 0.0, %v1735
  %1737 = vmatmul.bf16.gmra.mxu0 %v1563
  %v1738 = vpop.f32.mrf.mxu0
  %v1739 = vadd.f32 0.0, %v1738
  %v1740 = vpop.f32.mrf.mxu0
  %v1741 = vadd.f32 0.0, %v1740
  %1742 = vmatmul.bf16.gmra.mxu0 %v1564
  %v1743 = vpop.f32.mrf.mxu0
  %v1744 = vadd.f32 0.0, %v1743
  %v1745 = vpop.f32.mrf.mxu0
  %v1746 = vadd.f32 0.0, %v1745
  %1747 = vmatmul.bf16.gmra.mxu0 %v1565
  %v1748 = vpop.f32.mrf.mxu0
  %v1749 = vadd.f32 0.0, %v1748
  %v1750 = vpop.f32.mrf.mxu0
  %v1751 = vadd.f32 0.0, %v1750
  %1752 = vmatmul.bf16.gmra.mxu0 %v1566
  %v1753 = vpop.f32.mrf.mxu0
  %v1754 = vadd.f32 0.0, %v1753
  %v1755 = vpop.f32.mrf.mxu0
  %v1756 = vadd.f32 0.0, %v1755
  %1757 = vmatmul.bf16.gmra.mxu0 %v1567
  %v1758 = vpop.f32.mrf.mxu0
  %v1759 = vadd.f32 0.0, %v1758
  %v1760 = vpop.f32.mrf.mxu0
  %v1761 = vadd.f32 0.0, %v1760
  %1762 = vdwg.mxu0
  %v1763 = vpack.c.bf16 %v1677, %v1675
  %v1764 = vpack.c.bf16 %v1682, %v1680
  %v1765 = vpack.c.bf16 %v1687, %v1685
  %v1766 = vpack.c.bf16 %v1692, %v1690
  %v1767 = vpack.c.bf16 %v1697, %v1695
  %v1768 = vpack.c.bf16 %v1702, %v1700
  %v1769 = vpack.c.bf16 %v1707, %v1705
  %v1770 = vpack.c.bf16 %v1712, %v1710
  %1771 = vmatpush.bf16.msra.mxu0 %v1770
  %1772 = vmatpush.bf16.msra.mxu0 %v1769
  %1773 = vmatpush.bf16.msra.mxu0 %v1768
  %1774 = vmatpush.bf16.msra.mxu0 %v1767
  %1775 = vmatpush.bf16.msra.mxu0 %v1766
  %1776 = vmatpush.bf16.msra.mxu0 %v1765
  %1777 = vmatpush.bf16.msra.mxu0 %v1764
  %1778 = vmatpush.bf16.msra.mxu0 %v1763
  %1779 = vmatmul.bf16.gmra.mxu0 %v365
  %v1780 = vpop.f32.mrf.mxu0
  %v1781 = vadd.f32 %v1724, %v1780
  %v1782 = vpop.f32.mrf.mxu0
  %v1783 = vadd.f32 %v1726, %v1782
  %1784 = vmatmul.bf16.gmra.mxu0 %v366
  %v1785 = vpop.f32.mrf.mxu0
  %v1786 = vadd.f32 %v1729, %v1785
  %v1787 = vpop.f32.mrf.mxu0
  %v1788 = vadd.f32 %v1731, %v1787
  %1789 = vmatmul.bf16.gmra.mxu0 %v367
  %v1790 = vpop.f32.mrf.mxu0
  %v1791 = vadd.f32 %v1734, %v1790
  %v1792 = vpop.f32.mrf.mxu0
  %v1793 = vadd.f32 %v1736, %v1792
  %1794 = vmatmul.bf16.gmra.mxu0 %v368
  %v1795 = vpop.f32.mrf.mxu0
  %v1796 = vadd.f32 %v1739, %v1795
  %v1797 = vpop.f32.mrf.mxu0
  %v1798 = vadd.f32 %v1741, %v1797
  %1799 = vmatmul.bf16.gmra.mxu0 %v369
  %v1800 = vpop.f32.mrf.mxu0
  %v1801 = vadd.f32 %v1744, %v1800
  %v1802 = vpop.f32.mrf.mxu0
  %v1803 = vadd.f32 %v1746, %v1802
  %1804 = vmatmul.bf16.gmra.mxu0 %v370
  %v1805 = vpop.f32.mrf.mxu0
  %v1806 = vadd.f32 %v1749, %v1805
  %v1807 = vpop.f32.mrf.mxu0
  %v1808 = vadd.f32 %v1751, %v1807
  %1809 = vmatmul.bf16.gmra.mxu0 %v371
  %v1810 = vpop.f32.mrf.mxu0
  %v1811 = vadd.f32 %v1754, %v1810
  %v1812 = vpop.f32.mrf.mxu0
  %v1813 = vadd.f32 %v1756, %v1812
  %1814 = vmatmul.bf16.gmra.mxu0 %v372
  %v1815 = vpop.f32.mrf.mxu0
  %v1816 = vadd.f32 %v1759, %v1815
  %v1817 = vpop.f32.mrf.mxu0
  %v1818 = vadd.f32 %v1761, %v1817
  %1819 = vdwg.mxu0
  %v1820 = vperm.slane %v1568, 0
  %v1821 = vadd.f32 %v1781, %v1820
  %v1822 = vadd.f32 %v1783, %v1820
  %v1823 = vadd.f32 %v1786, %v1820
  %v1824 = vadd.f32 %v1788, %v1820
  %v1825 = vadd.f32 %v1791, %v1820
  %v1826 = vadd.f32 %v1793, %v1820
  %v1827 = vadd.f32 %v1796, %v1820
  %v1828 = vadd.f32 %v1798, %v1820
  %v1829 = vadd.f32 %v1801, %v1820
  %v1830 = vadd.f32 %v1803, %v1820
  %v1831 = vadd.f32 %v1806, %v1820
  %v1832 = vadd.f32 %v1808, %v1820
  %v1833 = vadd.f32 %v1811, %v1820
  %v1834 = vadd.f32 %v1813, %v1820
  %v1835 = vadd.f32 %v1816, %v1820
  %v1836 = vadd.f32 %v1818, %v1820
  %1837 = vadd.xlane.f32.xlu0 %v1821
  %v1838 = vpop.xlane.xlu0 %1837
  %1839 = vadd.xlane.f32.xlu0 %v1822
  %v1840 = vpop.xlane.xlu0 %1839
  %1841 = vadd.xlane.f32.xlu0 %v1823
  %v1842 = vpop.xlane.xlu0 %1841
  %1843 = vadd.xlane.f32.xlu0 %v1824
  %v1844 = vpop.xlane.xlu0 %1843
  %1845 = vadd.xlane.f32.xlu0 %v1825
  %v1846 = vpop.xlane.xlu0 %1845
  %1847 = vadd.xlane.f32.xlu0 %v1826
  %v1848 = vpop.xlane.xlu0 %1847
  %1849 = vadd.xlane.f32.xlu0 %v1827
  %v1850 = vpop.xlane.xlu0 %1849
  %1851 = vadd.xlane.f32.xlu0 %v1828
  %v1852 = vpop.xlane.xlu0 %1851
  %1853 = vadd.xlane.f32.xlu0 %v1829
  %v1854 = vpop.xlane.xlu0 %1853
  %1855 = vadd.xlane.f32.xlu0 %v1830
  %v1856 = vpop.xlane.xlu0 %1855
  %1857 = vadd.xlane.f32.xlu0 %v1831
  %v1858 = vpop.xlane.xlu0 %1857
  %1859 = vadd.xlane.f32.xlu0 %v1832
  %v1860 = vpop.xlane.xlu0 %1859
  %1861 = vadd.xlane.f32.xlu0 %v1833
  %v1862 = vpop.xlane.xlu0 %1861
  %1863 = vadd.xlane.f32.xlu0 %v1834
  %v1864 = vpop.xlane.xlu0 %1863
  %1865 = vadd.xlane.f32.xlu0 %v1835
  %v1866 = vpop.xlane.xlu0 %1865
  %1867 = vadd.xlane.f32.xlu0 %v1836
  %v1868 = vpop.xlane.xlu0 %1867
  %v1869 = vmul.f32 %v1838, 0.125
  %v1870 = vmul.f32 %v1840, 0.125
  %v1871 = vmul.f32 %v1842, 0.125
  %v1872 = vmul.f32 %v1844, 0.125
  %v1873 = vmul.f32 %v1846, 0.125
  %v1874 = vmul.f32 %v1848, 0.125
  %v1875 = vmul.f32 %v1850, 0.125
  %v1876 = vmul.f32 %v1852, 0.125
  %v1877 = vmul.f32 %v1854, 0.125
  %v1878 = vmul.f32 %v1856, 0.125
  %v1879 = vmul.f32 %v1858, 0.125
  %v1880 = vmul.f32 %v1860, 0.125
  %v1881 = vmul.f32 %v1862, 0.125
  %v1882 = vmul.f32 %v1864, 0.125
  %v1883 = vmul.f32 %v1866, 0.125
  %v1884 = vmul.f32 %v1868, 0.125
  %v1885 = vmul.f32 %v1821, %v1821
  %v1886 = vmul.f32 %v1822, %v1822
  %v1887 = vmul.f32 %v1823, %v1823
  %v1888 = vmul.f32 %v1824, %v1824
  %v1889 = vmul.f32 %v1825, %v1825
  %v1890 = vmul.f32 %v1826, %v1826
  %v1891 = vmul.f32 %v1827, %v1827
  %v1892 = vmul.f32 %v1828, %v1828
  %v1893 = vmul.f32 %v1829, %v1829
  %v1894 = vmul.f32 %v1830, %v1830
  %v1895 = vmul.f32 %v1831, %v1831
  %v1896 = vmul.f32 %v1832, %v1832
  %v1897 = vmul.f32 %v1833, %v1833
  %v1898 = vmul.f32 %v1834, %v1834
  %v1899 = vmul.f32 %v1835, %v1835
  %v1900 = vmul.f32 %v1836, %v1836
  %1901 = vadd.xlane.f32.xlu0 %v1885
  %v1902 = vpop.xlane.xlu0 %1901
  %1903 = vadd.xlane.f32.xlu0 %v1886
  %v1904 = vpop.xlane.xlu0 %1903
  %1905 = vadd.xlane.f32.xlu0 %v1887
  %v1906 = vpop.xlane.xlu0 %1905
  %1907 = vadd.xlane.f32.xlu0 %v1888
  %v1908 = vpop.xlane.xlu0 %1907
  %1909 = vadd.xlane.f32.xlu0 %v1889
  %v1910 = vpop.xlane.xlu0 %1909
  %1911 = vadd.xlane.f32.xlu0 %v1890
  %v1912 = vpop.xlane.xlu0 %1911
  %1913 = vadd.xlane.f32.xlu0 %v1891
  %v1914 = vpop.xlane.xlu0 %1913
  %1915 = vadd.xlane.f32.xlu0 %v1892
  %v1916 = vpop.xlane.xlu0 %1915
  %1917 = vadd.xlane.f32.xlu0 %v1893
  %v1918 = vpop.xlane.xlu0 %1917
  %1919 = vadd.xlane.f32.xlu0 %v1894
  %v1920 = vpop.xlane.xlu0 %1919
  %1921 = vadd.xlane.f32.xlu0 %v1895
  %v1922 = vpop.xlane.xlu0 %1921
  %1923 = vadd.xlane.f32.xlu0 %v1896
  %v1924 = vpop.xlane.xlu0 %1923
  %1925 = vadd.xlane.f32.xlu0 %v1897
  %v1926 = vpop.xlane.xlu0 %1925
  %1927 = vadd.xlane.f32.xlu0 %v1898
  %v1928 = vpop.xlane.xlu0 %1927
  %1929 = vadd.xlane.f32.xlu0 %v1899
  %v1930 = vpop.xlane.xlu0 %1929
  %1931 = vadd.xlane.f32.xlu0 %v1900
  %v1932 = vpop.xlane.xlu0 %1931
  %v1933 = vmul.f32 %v1902, 0.125
  %v1934 = vmul.f32 %v1904, 0.125
  %v1935 = vmul.f32 %v1906, 0.125
  %v1936 = vmul.f32 %v1908, 0.125
  %v1937 = vmul.f32 %v1910, 0.125
  %v1938 = vmul.f32 %v1912, 0.125
  %v1939 = vmul.f32 %v1914, 0.125
  %v1940 = vmul.f32 %v1916, 0.125
  %v1941 = vmul.f32 %v1918, 0.125
  %v1942 = vmul.f32 %v1920, 0.125
  %v1943 = vmul.f32 %v1922, 0.125
  %v1944 = vmul.f32 %v1924, 0.125
  %v1945 = vmul.f32 %v1926, 0.125
  %v1946 = vmul.f32 %v1928, 0.125
  %v1947 = vmul.f32 %v1930, 0.125
  %v1948 = vmul.f32 %v1932, 0.125
  %v1949 = vmul.f32 %v1869, %v1869
  %v1950 = vmul.f32 %v1870, %v1870
  %v1951 = vmul.f32 %v1871, %v1871
  %v1952 = vmul.f32 %v1872, %v1872
  %v1953 = vmul.f32 %v1873, %v1873
  %v1954 = vmul.f32 %v1874, %v1874
  %v1955 = vmul.f32 %v1875, %v1875
  %v1956 = vmul.f32 %v1876, %v1876
  %v1957 = vmul.f32 %v1877, %v1877
  %v1958 = vmul.f32 %v1878, %v1878
  %v1959 = vmul.f32 %v1879, %v1879
  %v1960 = vmul.f32 %v1880, %v1880
  %v1961 = vmul.f32 %v1881, %v1881
  %v1962 = vmul.f32 %v1882, %v1882
  %v1963 = vmul.f32 %v1883, %v1883
  %v1964 = vmul.f32 %v1884, %v1884
  %v1965 = vsub.f32 %v1933, %v1949
  %v1966 = vsub.f32 %v1934, %v1950
  %v1967 = vsub.f32 %v1935, %v1951
  %v1968 = vsub.f32 %v1936, %v1952
  %v1969 = vsub.f32 %v1937, %v1953
  %v1970 = vsub.f32 %v1938, %v1954
  %v1971 = vsub.f32 %v1939, %v1955
  %v1972 = vsub.f32 %v1940, %v1956
  %v1973 = vsub.f32 %v1941, %v1957
  %v1974 = vsub.f32 %v1942, %v1958
  %v1975 = vsub.f32 %v1943, %v1959
  %v1976 = vsub.f32 %v1944, %v1960
  %v1977 = vsub.f32 %v1945, %v1961
  %v1978 = vsub.f32 %v1946, %v1962
  %v1979 = vsub.f32 %v1947, %v1963
  %v1980 = vsub.f32 %v1948, %v1964
  %v1981 = vmax.f32 %v1965, 0.0
  %v1982 = vmax.f32 %v1966, 0.0
  %v1983 = vmax.f32 %v1967, 0.0
  %v1984 = vmax.f32 %v1968, 0.0
  %v1985 = vmax.f32 %v1969, 0.0
  %v1986 = vmax.f32 %v1970, 0.0
  %v1987 = vmax.f32 %v1971, 0.0
  %v1988 = vmax.f32 %v1972, 0.0
  %v1989 = vmax.f32 %v1973, 0.0
  %v1990 = vmax.f32 %v1974, 0.0
  %v1991 = vmax.f32 %v1975, 0.0
  %v1992 = vmax.f32 %v1976, 0.0
  %v1993 = vmax.f32 %v1977, 0.0
  %v1994 = vmax.f32 %v1978, 0.0
  %v1995 = vmax.f32 %v1979, 0.0
  %v1996 = vmax.f32 %v1980, 0.0
  %v1997 = vsub.f32 %v1821, %v1869
  %v1998 = vsub.f32 %v1822, %v1870
  %v1999 = vsub.f32 %v1823, %v1871
  %v2000 = vsub.f32 %v1824, %v1872
  %v2001 = vsub.f32 %v1825, %v1873
  %v2002 = vsub.f32 %v1826, %v1874
  %v2003 = vsub.f32 %v1827, %v1875
  %v2004 = vsub.f32 %v1828, %v1876
  %v2005 = vsub.f32 %v1829, %v1877
  %v2006 = vsub.f32 %v1830, %v1878
  %v2007 = vsub.f32 %v1831, %v1879
  %v2008 = vsub.f32 %v1832, %v1880
  %v2009 = vsub.f32 %v1833, %v1881
  %v2010 = vsub.f32 %v1834, %v1882
  %v2011 = vsub.f32 %v1835, %v1883
  %v2012 = vsub.f32 %v1836, %v1884
  %v2013 = vadd.f32 %v1981, 1e-05
  %v2014 = vadd.f32 %v1982, 1e-05
  %v2015 = vadd.f32 %v1983, 1e-05
  %v2016 = vadd.f32 %v1984, 1e-05
  %v2017 = vadd.f32 %v1985, 1e-05
  %v2018 = vadd.f32 %v1986, 1e-05
  %v2019 = vadd.f32 %v1987, 1e-05
  %v2020 = vadd.f32 %v1988, 1e-05
  %v2021 = vadd.f32 %v1989, 1e-05
  %v2022 = vadd.f32 %v1990, 1e-05
  %v2023 = vadd.f32 %v1991, 1e-05
  %v2024 = vadd.f32 %v1992, 1e-05
  %v2025 = vadd.f32 %v1993, 1e-05
  %v2026 = vadd.f32 %v1994, 1e-05
  %v2027 = vadd.f32 %v1995, 1e-05
  %v2028 = vadd.f32 %v1996, 1e-05
  %v2029 = vrsqrt.pop %v2013
  %v2030 = vmul.f32 %v2029, %v2013
  %v2031 = vmul.f32 %v2030, %v2029
  %v2032 = vmul.f32 0.5, %v2031
  %v2033 = vsub.f32 1.5, %v2032
  %v2034 = vmul.f32 %v2029, %v2033
  %vm2035 = vweird.f32 %v2013
  %vm2036 = vweird.f32 %v2029
  %vm2037 = vmor %vm2035, %vm2036
  %v2038 = vsel %vm2037, %v2029, %v2034
  %v2039 = vrsqrt.pop %v2014
  %v2040 = vmul.f32 %v2039, %v2014
  %v2041 = vmul.f32 %v2040, %v2039
  %v2042 = vmul.f32 0.5, %v2041
  %v2043 = vsub.f32 1.5, %v2042
  %v2044 = vmul.f32 %v2039, %v2043
  %vm2045 = vweird.f32 %v2014
  %vm2046 = vweird.f32 %v2039
  %vm2047 = vmor %vm2045, %vm2046
  %v2048 = vsel %vm2047, %v2039, %v2044
  %v2049 = vrsqrt.pop %v2015
  %v2050 = vmul.f32 %v2049, %v2015
  %v2051 = vmul.f32 %v2050, %v2049
  %v2052 = vmul.f32 0.5, %v2051
  %v2053 = vsub.f32 1.5, %v2052
  %v2054 = vmul.f32 %v2049, %v2053
  %vm2055 = vweird.f32 %v2015
  %vm2056 = vweird.f32 %v2049
  %vm2057 = vmor %vm2055, %vm2056
  %v2058 = vsel %vm2057, %v2049, %v2054
  %v2059 = vrsqrt.pop %v2016
  %v2060 = vmul.f32 %v2059, %v2016
  %v2061 = vmul.f32 %v2060, %v2059
  %v2062 = vmul.f32 0.5, %v2061
  %v2063 = vsub.f32 1.5, %v2062
  %v2064 = vmul.f32 %v2059, %v2063
  %vm2065 = vweird.f32 %v2016
  %vm2066 = vweird.f32 %v2059
  %vm2067 = vmor %vm2065, %vm2066
  %v2068 = vsel %vm2067, %v2059, %v2064
  %v2069 = vrsqrt.pop %v2017
  %v2070 = vmul.f32 %v2069, %v2017
  %v2071 = vmul.f32 %v2070, %v2069
  %v2072 = vmul.f32 0.5, %v2071
  %v2073 = vsub.f32 1.5, %v2072
  %v2074 = vmul.f32 %v2069, %v2073
  %vm2075 = vweird.f32 %v2017
  %vm2076 = vweird.f32 %v2069
  %vm2077 = vmor %vm2075, %vm2076
  %v2078 = vsel %vm2077, %v2069, %v2074
  %v2079 = vrsqrt.pop %v2018
  %v2080 = vmul.f32 %v2079, %v2018
  %v2081 = vmul.f32 %v2080, %v2079
  %v2082 = vmul.f32 0.5, %v2081
  %v2083 = vsub.f32 1.5, %v2082
  %v2084 = vmul.f32 %v2079, %v2083
  %vm2085 = vweird.f32 %v2018
  %vm2086 = vweird.f32 %v2079
  %vm2087 = vmor %vm2085, %vm2086
  %v2088 = vsel %vm2087, %v2079, %v2084
  %v2089 = vrsqrt.pop %v2019
  %v2090 = vmul.f32 %v2089, %v2019
  %v2091 = vmul.f32 %v2090, %v2089
  %v2092 = vmul.f32 0.5, %v2091
  %v2093 = vsub.f32 1.5, %v2092
  %v2094 = vmul.f32 %v2089, %v2093
  %vm2095 = vweird.f32 %v2019
  %vm2096 = vweird.f32 %v2089
  %vm2097 = vmor %vm2095, %vm2096
  %v2098 = vsel %vm2097, %v2089, %v2094
  %v2099 = vrsqrt.pop %v2020
  %v2100 = vmul.f32 %v2099, %v2020
  %v2101 = vmul.f32 %v2100, %v2099
  %v2102 = vmul.f32 0.5, %v2101
  %v2103 = vsub.f32 1.5, %v2102
  %v2104 = vmul.f32 %v2099, %v2103
  %vm2105 = vweird.f32 %v2020
  %vm2106 = vweird.f32 %v2099
  %vm2107 = vmor %vm2105, %vm2106
  %v2108 = vsel %vm2107, %v2099, %v2104
  %v2109 = vrsqrt.pop %v2021
  %v2110 = vmul.f32 %v2109, %v2021
  %v2111 = vmul.f32 %v2110, %v2109
  %v2112 = vmul.f32 0.5, %v2111
  %v2113 = vsub.f32 1.5, %v2112
  %v2114 = vmul.f32 %v2109, %v2113
  %vm2115 = vweird.f32 %v2021
  %vm2116 = vweird.f32 %v2109
  %vm2117 = vmor %vm2115, %vm2116
  %v2118 = vsel %vm2117, %v2109, %v2114
  %v2119 = vrsqrt.pop %v2022
  %v2120 = vmul.f32 %v2119, %v2022
  %v2121 = vmul.f32 %v2120, %v2119
  %v2122 = vmul.f32 0.5, %v2121
  %v2123 = vsub.f32 1.5, %v2122
  %v2124 = vmul.f32 %v2119, %v2123
  %vm2125 = vweird.f32 %v2022
  %vm2126 = vweird.f32 %v2119
  %vm2127 = vmor %vm2125, %vm2126
  %v2128 = vsel %vm2127, %v2119, %v2124
  %v2129 = vrsqrt.pop %v2023
  %v2130 = vmul.f32 %v2129, %v2023
  %v2131 = vmul.f32 %v2130, %v2129
  %v2132 = vmul.f32 0.5, %v2131
  %v2133 = vsub.f32 1.5, %v2132
  %v2134 = vmul.f32 %v2129, %v2133
  %vm2135 = vweird.f32 %v2023
  %vm2136 = vweird.f32 %v2129
  %vm2137 = vmor %vm2135, %vm2136
  %v2138 = vsel %vm2137, %v2129, %v2134
  %v2139 = vrsqrt.pop %v2024
  %v2140 = vmul.f32 %v2139, %v2024
  %v2141 = vmul.f32 %v2140, %v2139
  %v2142 = vmul.f32 0.5, %v2141
  %v2143 = vsub.f32 1.5, %v2142
  %v2144 = vmul.f32 %v2139, %v2143
  %vm2145 = vweird.f32 %v2024
  %vm2146 = vweird.f32 %v2139
  %vm2147 = vmor %vm2145, %vm2146
  %v2148 = vsel %vm2147, %v2139, %v2144
  %v2149 = vrsqrt.pop %v2025
  %v2150 = vmul.f32 %v2149, %v2025
  %v2151 = vmul.f32 %v2150, %v2149
  %v2152 = vmul.f32 0.5, %v2151
  %v2153 = vsub.f32 1.5, %v2152
  %v2154 = vmul.f32 %v2149, %v2153
  %vm2155 = vweird.f32 %v2025
  %vm2156 = vweird.f32 %v2149
  %vm2157 = vmor %vm2155, %vm2156
  %v2158 = vsel %vm2157, %v2149, %v2154
  %v2159 = vrsqrt.pop %v2026
  %v2160 = vmul.f32 %v2159, %v2026
  %v2161 = vmul.f32 %v2160, %v2159
  %v2162 = vmul.f32 0.5, %v2161
  %v2163 = vsub.f32 1.5, %v2162
  %v2164 = vmul.f32 %v2159, %v2163
  %vm2165 = vweird.f32 %v2026
  %vm2166 = vweird.f32 %v2159
  %vm2167 = vmor %vm2165, %vm2166
  %v2168 = vsel %vm2167, %v2159, %v2164
  %v2169 = vrsqrt.pop %v2027
  %v2170 = vmul.f32 %v2169, %v2027
  %v2171 = vmul.f32 %v2170, %v2169
  %v2172 = vmul.f32 0.5, %v2171
  %v2173 = vsub.f32 1.5, %v2172
  %v2174 = vmul.f32 %v2169, %v2173
  %vm2175 = vweird.f32 %v2027
  %vm2176 = vweird.f32 %v2169
  %vm2177 = vmor %vm2175, %vm2176
  %v2178 = vsel %vm2177, %v2169, %v2174
  %v2179 = vrsqrt.pop %v2028
  %v2180 = vmul.f32 %v2179, %v2028
  %v2181 = vmul.f32 %v2180, %v2179
  %v2182 = vmul.f32 0.5, %v2181
  %v2183 = vsub.f32 1.5, %v2182
  %v2184 = vmul.f32 %v2179, %v2183
  %vm2185 = vweird.f32 %v2028
  %vm2186 = vweird.f32 %v2179
  %vm2187 = vmor %vm2185, %vm2186
  %v2188 = vsel %vm2187, %v2179, %v2184
  %v2189 = vmul.f32 %v1997, %v2038
  %v2190 = vmul.f32 %v1998, %v2048
  %v2191 = vmul.f32 %v1999, %v2058
  %v2192 = vmul.f32 %v2000, %v2068
  %v2193 = vmul.f32 %v2001, %v2078
  %v2194 = vmul.f32 %v2002, %v2088
  %v2195 = vmul.f32 %v2003, %v2098
  %v2196 = vmul.f32 %v2004, %v2108
  %v2197 = vmul.f32 %v2005, %v2118
  %v2198 = vmul.f32 %v2006, %v2128
  %v2199 = vmul.f32 %v2007, %v2138
  %v2200 = vmul.f32 %v2008, %v2148
  %v2201 = vmul.f32 %v2009, %v2158
  %v2202 = vmul.f32 %v2010, %v2168
  %v2203 = vmul.f32 %v2011, %v2178
  %v2204 = vmul.f32 %v2012, %v2188
  %v2205 = vperm.slane %v1568, 1
  %v2206 = vmul.f32 %v2189, %v2205
  %v2207 = vmul.f32 %v2190, %v2205
  %v2208 = vmul.f32 %v2191, %v2205
  %v2209 = vmul.f32 %v2192, %v2205
  %v2210 = vmul.f32 %v2193, %v2205
  %v2211 = vmul.f32 %v2194, %v2205
  %v2212 = vmul.f32 %v2195, %v2205
  %v2213 = vmul.f32 %v2196, %v2205
  %v2214 = vmul.f32 %v2197, %v2205
  %v2215 = vmul.f32 %v2198, %v2205
  %v2216 = vmul.f32 %v2199, %v2205
  %v2217 = vmul.f32 %v2200, %v2205
  %v2218 = vmul.f32 %v2201, %v2205
  %v2219 = vmul.f32 %v2202, %v2205
  %v2220 = vmul.f32 %v2203, %v2205
  %v2221 = vmul.f32 %v2204, %v2205
  %v2222 = vperm.slane %v1568, 2
  %v2223 = vadd.f32 %v2206, %v2222
  %v2224 = vadd.f32 %v2207, %v2222
  %v2225 = vadd.f32 %v2208, %v2222
  %v2226 = vadd.f32 %v2209, %v2222
  %v2227 = vadd.f32 %v2210, %v2222
  %v2228 = vadd.f32 %v2211, %v2222
  %v2229 = vadd.f32 %v2212, %v2222
  %v2230 = vadd.f32 %v2213, %v2222
  %v2231 = vadd.f32 %v2214, %v2222
  %v2232 = vadd.f32 %v2215, %v2222
  %v2233 = vadd.f32 %v2216, %v2222
  %v2234 = vadd.f32 %v2217, %v2222
  %v2235 = vadd.f32 %v2218, %v2222
  %v2236 = vadd.f32 %v2219, %v2222
  %v2237 = vadd.f32 %v2220, %v2222
  %v2238 = vadd.f32 %v2221, %v2222
  %v2239 = vmax.f32 %v2223, 0.0
  %v2240 = vmax.f32 %v2224, 0.0
  %v2241 = vmax.f32 %v2225, 0.0
  %v2242 = vmax.f32 %v2226, 0.0
  %v2243 = vmax.f32 %v2227, 0.0
  %v2244 = vmax.f32 %v2228, 0.0
  %v2245 = vmax.f32 %v2229, 0.0
  %v2246 = vmax.f32 %v2230, 0.0
  %v2247 = vmax.f32 %v2231, 0.0
  %v2248 = vmax.f32 %v2232, 0.0
  %v2249 = vmax.f32 %v2233, 0.0
  %v2250 = vmax.f32 %v2234, 0.0
  %v2251 = vmax.f32 %v2235, 0.0
  %v2252 = vmax.f32 %v2236, 0.0
  %v2253 = vmax.f32 %v2237, 0.0
  %v2254 = vmax.f32 %v2238, 0.0
  %v2255 = vpack.c.bf16 %v2240, %v2239
  %v2256 = vpack.c.bf16 %v2242, %v2241
  %v2257 = vpack.c.bf16 %v2244, %v2243
  %v2258 = vpack.c.bf16 %v2246, %v2245
  %v2259 = vpack.c.bf16 %v2248, %v2247
  %v2260 = vpack.c.bf16 %v2250, %v2249
  %v2261 = vpack.c.bf16 %v2252, %v2251
  %v2262 = vpack.c.bf16 %v2254, %v2253
  %v2263 = vld [vmem:[%s9] sm:$0x7]
  %v2264 = vld [vmem:[%s5] sm:$0xff]
  %v2265 = vld [vmem:[%s5 + $0x8] sm:$0xff]
  %v2266 = vld [vmem:[%s5 + $0x10] sm:$0xff]
  %v2267 = vld [vmem:[%s5 + $0x18] sm:$0xff]
  %v2268 = vld [vmem:[%s5 + $0x20] sm:$0xff]
  %v2269 = vld [vmem:[%s5 + $0x28] sm:$0xff]
  %v2270 = vld [vmem:[%s5 + $0x30] sm:$0xff]
  %v2271 = vld [vmem:[%s5 + $0x38] sm:$0xff]
  %v2272 = vld [vmem:[%s5 + $0x40] sm:$0xff]
  %v2273 = vld [vmem:[%s5 + $0x48] sm:$0xff]
  %v2274 = vld [vmem:[%s5 + $0x50] sm:$0xff]
  %v2275 = vld [vmem:[%s5 + $0x58] sm:$0xff]
  %v2276 = vld [vmem:[%s5 + $0x60] sm:$0xff]
  %v2277 = vld [vmem:[%s5 + $0x68] sm:$0xff]
  %v2278 = vld [vmem:[%s5 + $0x70] sm:$0xff]
  %v2279 = vld [vmem:[%s5 + $0x78] sm:$0xff]
  %v2296 = vunpack.c.l.b16 %v2264
  %v2297 = vunpack.c.h.b16 %v2264
  %v2298 = vunpack.c.l.b16 %v2265
  %v2299 = vunpack.c.h.b16 %v2265
  %v2300 = vunpack.c.l.b16 %v2266
  %v2301 = vunpack.c.h.b16 %v2266
  %v2302 = vunpack.c.l.b16 %v2267
  %v2303 = vunpack.c.h.b16 %v2267
  %v2304 = vunpack.c.l.b16 %v2268
  %v2305 = vunpack.c.h.b16 %v2268
  %v2306 = vunpack.c.l.b16 %v2269
  %v2307 = vunpack.c.h.b16 %v2269
  %v2308 = vunpack.c.l.b16 %v2270
  %v2309 = vunpack.c.h.b16 %v2270
  %v2310 = vunpack.c.l.b16 %v2271
  %v2311 = vunpack.c.h.b16 %v2271
  %v2312 = vunpack.c.l.b16 %v2272
  %v2313 = vunpack.c.h.b16 %v2272
  %v2314 = vunpack.c.l.b16 %v2273
  %v2315 = vunpack.c.h.b16 %v2273
  %v2316 = vunpack.c.l.b16 %v2274
  %v2317 = vunpack.c.h.b16 %v2274
  %v2318 = vunpack.c.l.b16 %v2275
  %v2319 = vunpack.c.h.b16 %v2275
  %v2320 = vunpack.c.l.b16 %v2276
  %v2321 = vunpack.c.h.b16 %v2276
  %v2322 = vunpack.c.l.b16 %v2277
  %v2323 = vunpack.c.h.b16 %v2277
  %v2324 = vunpack.c.l.b16 %v2278
  %v2325 = vunpack.c.h.b16 %v2278
  %v2326 = vunpack.c.l.b16 %v2279
  %v2327 = vunpack.c.h.b16 %v2279
  %v2328 = vpack.c.b16 %v2298, %v2296
  %v2329 = vpack.c.b16 %v2299, %v2297
  %v2330 = vpack.c.b16 %v2302, %v2300
  %v2331 = vpack.c.b16 %v2303, %v2301
  %v2332 = vpack.c.b16 %v2306, %v2304
  %v2333 = vpack.c.b16 %v2307, %v2305
  %v2334 = vpack.c.b16 %v2310, %v2308
  %v2335 = vpack.c.b16 %v2311, %v2309
  %v2336 = vpack.c.b16 %v2314, %v2312
  %v2337 = vpack.c.b16 %v2315, %v2313
  %v2338 = vpack.c.b16 %v2318, %v2316
  %v2339 = vpack.c.b16 %v2319, %v2317
  %v2340 = vpack.c.b16 %v2322, %v2320
  %v2341 = vpack.c.b16 %v2323, %v2321
  %v2342 = vpack.c.b16 %v2326, %v2324
  %v2343 = vpack.c.b16 %v2327, %v2325
  %2360 = vmatpush.bf16.msra.mxu0 %v2342
  %2361 = vmatpush.bf16.msra.mxu0 %v2340
  %2362 = vmatpush.bf16.msra.mxu0 %v2338
  %2363 = vmatpush.bf16.msra.mxu0 %v2336
  %2364 = vmatpush.bf16.msra.mxu0 %v2334
  %2365 = vmatpush.bf16.msra.mxu0 %v2332
  %2366 = vmatpush.bf16.msra.mxu0 %v2330
  %2367 = vmatpush.bf16.msra.mxu0 %v2328
  %2368 = vmatmul.bf16.gmra.mxu0 %v2255
  %v2369 = vpop.f32.mrf.mxu0
  %v2370 = vadd.f32 0.0, %v2369
  %v2371 = vpop.f32.mrf.mxu0
  %v2372 = vadd.f32 0.0, %v2371
  %2373 = vmatmul.bf16.gmra.mxu0 %v2256
  %v2374 = vpop.f32.mrf.mxu0
  %v2375 = vadd.f32 0.0, %v2374
  %v2376 = vpop.f32.mrf.mxu0
  %v2377 = vadd.f32 0.0, %v2376
  %2378 = vmatmul.bf16.gmra.mxu0 %v2257
  %v2379 = vpop.f32.mrf.mxu0
  %v2380 = vadd.f32 0.0, %v2379
  %v2381 = vpop.f32.mrf.mxu0
  %v2382 = vadd.f32 0.0, %v2381
  %2383 = vmatmul.bf16.gmra.mxu0 %v2258
  %v2384 = vpop.f32.mrf.mxu0
  %v2385 = vadd.f32 0.0, %v2384
  %v2386 = vpop.f32.mrf.mxu0
  %v2387 = vadd.f32 0.0, %v2386
  %2388 = vmatmul.bf16.gmra.mxu0 %v2259
  %v2389 = vpop.f32.mrf.mxu0
  %v2390 = vadd.f32 0.0, %v2389
  %v2391 = vpop.f32.mrf.mxu0
  %v2392 = vadd.f32 0.0, %v2391
  %2393 = vmatmul.bf16.gmra.mxu0 %v2260
  %v2394 = vpop.f32.mrf.mxu0
  %v2395 = vadd.f32 0.0, %v2394
  %v2396 = vpop.f32.mrf.mxu0
  %v2397 = vadd.f32 0.0, %v2396
  %2398 = vmatmul.bf16.gmra.mxu0 %v2261
  %v2399 = vpop.f32.mrf.mxu0
  %v2400 = vadd.f32 0.0, %v2399
  %v2401 = vpop.f32.mrf.mxu0
  %v2402 = vadd.f32 0.0, %v2401
  %2403 = vmatmul.bf16.gmra.mxu0 %v2262
  %v2404 = vpop.f32.mrf.mxu0
  %v2405 = vadd.f32 0.0, %v2404
  %v2406 = vpop.f32.mrf.mxu0
  %v2407 = vadd.f32 0.0, %v2406
  %2408 = vdwg.mxu0
  %2409 = vmatpush.bf16.msra.mxu0 %v2343
  %2410 = vmatpush.bf16.msra.mxu0 %v2341
  %2411 = vmatpush.bf16.msra.mxu0 %v2339
  %2412 = vmatpush.bf16.msra.mxu0 %v2337
  %2413 = vmatpush.bf16.msra.mxu0 %v2335
  %2414 = vmatpush.bf16.msra.mxu0 %v2333
  %2415 = vmatpush.bf16.msra.mxu0 %v2331
  %2416 = vmatpush.bf16.msra.mxu0 %v2329
  %2417 = vmatmul.bf16.gmra.mxu0 %v2255
  %v2418 = vpop.f32.mrf.mxu0
  %v2419 = vadd.f32 0.0, %v2418
  %v2420 = vpop.f32.mrf.mxu0
  %v2421 = vadd.f32 0.0, %v2420
  %2422 = vmatmul.bf16.gmra.mxu0 %v2256
  %v2423 = vpop.f32.mrf.mxu0
  %v2424 = vadd.f32 0.0, %v2423
  %v2425 = vpop.f32.mrf.mxu0
  %v2426 = vadd.f32 0.0, %v2425
  %2427 = vmatmul.bf16.gmra.mxu0 %v2257
  %v2428 = vpop.f32.mrf.mxu0
  %v2429 = vadd.f32 0.0, %v2428
  %v2430 = vpop.f32.mrf.mxu0
  %v2431 = vadd.f32 0.0, %v2430
  %2432 = vmatmul.bf16.gmra.mxu0 %v2258
  %v2433 = vpop.f32.mrf.mxu0
  %v2434 = vadd.f32 0.0, %v2433
  %v2435 = vpop.f32.mrf.mxu0
  %v2436 = vadd.f32 0.0, %v2435
  %2437 = vmatmul.bf16.gmra.mxu0 %v2259
  %v2438 = vpop.f32.mrf.mxu0
  %v2439 = vadd.f32 0.0, %v2438
  %v2440 = vpop.f32.mrf.mxu0
  %v2441 = vadd.f32 0.0, %v2440
  %2442 = vmatmul.bf16.gmra.mxu0 %v2260
  %v2443 = vpop.f32.mrf.mxu0
  %v2444 = vadd.f32 0.0, %v2443
  %v2445 = vpop.f32.mrf.mxu0
  %v2446 = vadd.f32 0.0, %v2445
  %2447 = vmatmul.bf16.gmra.mxu0 %v2261
  %v2448 = vpop.f32.mrf.mxu0
  %v2449 = vadd.f32 0.0, %v2448
  %v2450 = vpop.f32.mrf.mxu0
  %v2451 = vadd.f32 0.0, %v2450
  %2452 = vmatmul.bf16.gmra.mxu0 %v2262
  %v2453 = vpop.f32.mrf.mxu0
  %v2454 = vadd.f32 0.0, %v2453
  %v2455 = vpop.f32.mrf.mxu0
  %v2456 = vadd.f32 0.0, %v2455
  %2457 = vdwg.mxu0
  %v2458 = vpack.c.bf16 %v2372, %v2370
  %v2459 = vpack.c.bf16 %v2377, %v2375
  %v2460 = vpack.c.bf16 %v2382, %v2380
  %v2461 = vpack.c.bf16 %v2387, %v2385
  %v2462 = vpack.c.bf16 %v2392, %v2390
  %v2463 = vpack.c.bf16 %v2397, %v2395
  %v2464 = vpack.c.bf16 %v2402, %v2400
  %v2465 = vpack.c.bf16 %v2407, %v2405
  %2466 = vmatpush.bf16.msra.mxu0 %v2465
  %2467 = vmatpush.bf16.msra.mxu0 %v2464
  %2468 = vmatpush.bf16.msra.mxu0 %v2463
  %2469 = vmatpush.bf16.msra.mxu0 %v2462
  %2470 = vmatpush.bf16.msra.mxu0 %v2461
  %2471 = vmatpush.bf16.msra.mxu0 %v2460
  %2472 = vmatpush.bf16.msra.mxu0 %v2459
  %2473 = vmatpush.bf16.msra.mxu0 %v2458
  %2474 = vmatmul.bf16.gmra.mxu0 %v365
  %v2475 = vpop.f32.mrf.mxu0
  %v2476 = vadd.f32 %v2419, %v2475
  %v2477 = vpop.f32.mrf.mxu0
  %v2478 = vadd.f32 %v2421, %v2477
  %2479 = vmatmul.bf16.gmra.mxu0 %v366
  %v2480 = vpop.f32.mrf.mxu0
  %v2481 = vadd.f32 %v2424, %v2480
  %v2482 = vpop.f32.mrf.mxu0
  %v2483 = vadd.f32 %v2426, %v2482
  %2484 = vmatmul.bf16.gmra.mxu0 %v367
  %v2485 = vpop.f32.mrf.mxu0
  %v2486 = vadd.f32 %v2429, %v2485
  %v2487 = vpop.f32.mrf.mxu0
  %v2488 = vadd.f32 %v2431, %v2487
  %2489 = vmatmul.bf16.gmra.mxu0 %v368
  %v2490 = vpop.f32.mrf.mxu0
  %v2491 = vadd.f32 %v2434, %v2490
  %v2492 = vpop.f32.mrf.mxu0
  %v2493 = vadd.f32 %v2436, %v2492
  %2494 = vmatmul.bf16.gmra.mxu0 %v369
  %v2495 = vpop.f32.mrf.mxu0
  %v2496 = vadd.f32 %v2439, %v2495
  %v2497 = vpop.f32.mrf.mxu0
  %v2498 = vadd.f32 %v2441, %v2497
  %2499 = vmatmul.bf16.gmra.mxu0 %v370
  %v2500 = vpop.f32.mrf.mxu0
  %v2501 = vadd.f32 %v2444, %v2500
  %v2502 = vpop.f32.mrf.mxu0
  %v2503 = vadd.f32 %v2446, %v2502
  %2504 = vmatmul.bf16.gmra.mxu0 %v371
  %v2505 = vpop.f32.mrf.mxu0
  %v2506 = vadd.f32 %v2449, %v2505
  %v2507 = vpop.f32.mrf.mxu0
  %v2508 = vadd.f32 %v2451, %v2507
  %2509 = vmatmul.bf16.gmra.mxu0 %v372
  %v2510 = vpop.f32.mrf.mxu0
  %v2511 = vadd.f32 %v2454, %v2510
  %v2512 = vpop.f32.mrf.mxu0
  %v2513 = vadd.f32 %v2456, %v2512
  %2514 = vdwg.mxu0
  %v2515 = vperm.slane %v2263, 0
  %v2516 = vadd.f32 %v2476, %v2515
  %v2517 = vadd.f32 %v2478, %v2515
  %v2518 = vadd.f32 %v2481, %v2515
  %v2519 = vadd.f32 %v2483, %v2515
  %v2520 = vadd.f32 %v2486, %v2515
  %v2521 = vadd.f32 %v2488, %v2515
  %v2522 = vadd.f32 %v2491, %v2515
  %v2523 = vadd.f32 %v2493, %v2515
  %v2524 = vadd.f32 %v2496, %v2515
  %v2525 = vadd.f32 %v2498, %v2515
  %v2526 = vadd.f32 %v2501, %v2515
  %v2527 = vadd.f32 %v2503, %v2515
  %v2528 = vadd.f32 %v2506, %v2515
  %v2529 = vadd.f32 %v2508, %v2515
  %v2530 = vadd.f32 %v2511, %v2515
  %v2531 = vadd.f32 %v2513, %v2515
  %2532 = vadd.xlane.f32.xlu0 %v2516
  %v2533 = vpop.xlane.xlu0 %2532
  %2534 = vadd.xlane.f32.xlu0 %v2517
  %v2535 = vpop.xlane.xlu0 %2534
  %2536 = vadd.xlane.f32.xlu0 %v2518
  %v2537 = vpop.xlane.xlu0 %2536
  %2538 = vadd.xlane.f32.xlu0 %v2519
  %v2539 = vpop.xlane.xlu0 %2538
  %2540 = vadd.xlane.f32.xlu0 %v2520
  %v2541 = vpop.xlane.xlu0 %2540
  %2542 = vadd.xlane.f32.xlu0 %v2521
  %v2543 = vpop.xlane.xlu0 %2542
  %2544 = vadd.xlane.f32.xlu0 %v2522
  %v2545 = vpop.xlane.xlu0 %2544
  %2546 = vadd.xlane.f32.xlu0 %v2523
  %v2547 = vpop.xlane.xlu0 %2546
  %2548 = vadd.xlane.f32.xlu0 %v2524
  %v2549 = vpop.xlane.xlu0 %2548
  %2550 = vadd.xlane.f32.xlu0 %v2525
  %v2551 = vpop.xlane.xlu0 %2550
  %2552 = vadd.xlane.f32.xlu0 %v2526
  %v2553 = vpop.xlane.xlu0 %2552
  %2554 = vadd.xlane.f32.xlu0 %v2527
  %v2555 = vpop.xlane.xlu0 %2554
  %2556 = vadd.xlane.f32.xlu0 %v2528
  %v2557 = vpop.xlane.xlu0 %2556
  %2558 = vadd.xlane.f32.xlu0 %v2529
  %v2559 = vpop.xlane.xlu0 %2558
  %2560 = vadd.xlane.f32.xlu0 %v2530
  %v2561 = vpop.xlane.xlu0 %2560
  %2562 = vadd.xlane.f32.xlu0 %v2531
  %v2563 = vpop.xlane.xlu0 %2562
  %v2564 = vmul.f32 %v2533, 0.125
  %v2565 = vmul.f32 %v2535, 0.125
  %v2566 = vmul.f32 %v2537, 0.125
  %v2567 = vmul.f32 %v2539, 0.125
  %v2568 = vmul.f32 %v2541, 0.125
  %v2569 = vmul.f32 %v2543, 0.125
  %v2570 = vmul.f32 %v2545, 0.125
  %v2571 = vmul.f32 %v2547, 0.125
  %v2572 = vmul.f32 %v2549, 0.125
  %v2573 = vmul.f32 %v2551, 0.125
  %v2574 = vmul.f32 %v2553, 0.125
  %v2575 = vmul.f32 %v2555, 0.125
  %v2576 = vmul.f32 %v2557, 0.125
  %v2577 = vmul.f32 %v2559, 0.125
  %v2578 = vmul.f32 %v2561, 0.125
  %v2579 = vmul.f32 %v2563, 0.125
  %v2580 = vmul.f32 %v2516, %v2516
  %v2581 = vmul.f32 %v2517, %v2517
  %v2582 = vmul.f32 %v2518, %v2518
  %v2583 = vmul.f32 %v2519, %v2519
  %v2584 = vmul.f32 %v2520, %v2520
  %v2585 = vmul.f32 %v2521, %v2521
  %v2586 = vmul.f32 %v2522, %v2522
  %v2587 = vmul.f32 %v2523, %v2523
  %v2588 = vmul.f32 %v2524, %v2524
  %v2589 = vmul.f32 %v2525, %v2525
  %v2590 = vmul.f32 %v2526, %v2526
  %v2591 = vmul.f32 %v2527, %v2527
  %v2592 = vmul.f32 %v2528, %v2528
  %v2593 = vmul.f32 %v2529, %v2529
  %v2594 = vmul.f32 %v2530, %v2530
  %v2595 = vmul.f32 %v2531, %v2531
  %2596 = vadd.xlane.f32.xlu0 %v2580
  %v2597 = vpop.xlane.xlu0 %2596
  %2598 = vadd.xlane.f32.xlu0 %v2581
  %v2599 = vpop.xlane.xlu0 %2598
  %2600 = vadd.xlane.f32.xlu0 %v2582
  %v2601 = vpop.xlane.xlu0 %2600
  %2602 = vadd.xlane.f32.xlu0 %v2583
  %v2603 = vpop.xlane.xlu0 %2602
  %2604 = vadd.xlane.f32.xlu0 %v2584
  %v2605 = vpop.xlane.xlu0 %2604
  %2606 = vadd.xlane.f32.xlu0 %v2585
  %v2607 = vpop.xlane.xlu0 %2606
  %2608 = vadd.xlane.f32.xlu0 %v2586
  %v2609 = vpop.xlane.xlu0 %2608
  %2610 = vadd.xlane.f32.xlu0 %v2587
  %v2611 = vpop.xlane.xlu0 %2610
  %2612 = vadd.xlane.f32.xlu0 %v2588
  %v2613 = vpop.xlane.xlu0 %2612
  %2614 = vadd.xlane.f32.xlu0 %v2589
  %v2615 = vpop.xlane.xlu0 %2614
  %2616 = vadd.xlane.f32.xlu0 %v2590
  %v2617 = vpop.xlane.xlu0 %2616
  %2618 = vadd.xlane.f32.xlu0 %v2591
  %v2619 = vpop.xlane.xlu0 %2618
  %2620 = vadd.xlane.f32.xlu0 %v2592
  %v2621 = vpop.xlane.xlu0 %2620
  %2622 = vadd.xlane.f32.xlu0 %v2593
  %v2623 = vpop.xlane.xlu0 %2622
  %2624 = vadd.xlane.f32.xlu0 %v2594
  %v2625 = vpop.xlane.xlu0 %2624
  %2626 = vadd.xlane.f32.xlu0 %v2595
  %v2627 = vpop.xlane.xlu0 %2626
  %v2628 = vmul.f32 %v2597, 0.125
  %v2629 = vmul.f32 %v2599, 0.125
  %v2630 = vmul.f32 %v2601, 0.125
  %v2631 = vmul.f32 %v2603, 0.125
  %v2632 = vmul.f32 %v2605, 0.125
  %v2633 = vmul.f32 %v2607, 0.125
  %v2634 = vmul.f32 %v2609, 0.125
  %v2635 = vmul.f32 %v2611, 0.125
  %v2636 = vmul.f32 %v2613, 0.125
  %v2637 = vmul.f32 %v2615, 0.125
  %v2638 = vmul.f32 %v2617, 0.125
  %v2639 = vmul.f32 %v2619, 0.125
  %v2640 = vmul.f32 %v2621, 0.125
  %v2641 = vmul.f32 %v2623, 0.125
  %v2642 = vmul.f32 %v2625, 0.125
  %v2643 = vmul.f32 %v2627, 0.125
  %v2644 = vmul.f32 %v2564, %v2564
  %v2645 = vmul.f32 %v2565, %v2565
  %v2646 = vmul.f32 %v2566, %v2566
  %v2647 = vmul.f32 %v2567, %v2567
  %v2648 = vmul.f32 %v2568, %v2568
  %v2649 = vmul.f32 %v2569, %v2569
  %v2650 = vmul.f32 %v2570, %v2570
  %v2651 = vmul.f32 %v2571, %v2571
  %v2652 = vmul.f32 %v2572, %v2572
  %v2653 = vmul.f32 %v2573, %v2573
  %v2654 = vmul.f32 %v2574, %v2574
  %v2655 = vmul.f32 %v2575, %v2575
  %v2656 = vmul.f32 %v2576, %v2576
  %v2657 = vmul.f32 %v2577, %v2577
  %v2658 = vmul.f32 %v2578, %v2578
  %v2659 = vmul.f32 %v2579, %v2579
  %v2660 = vsub.f32 %v2628, %v2644
  %v2661 = vsub.f32 %v2629, %v2645
  %v2662 = vsub.f32 %v2630, %v2646
  %v2663 = vsub.f32 %v2631, %v2647
  %v2664 = vsub.f32 %v2632, %v2648
  %v2665 = vsub.f32 %v2633, %v2649
  %v2666 = vsub.f32 %v2634, %v2650
  %v2667 = vsub.f32 %v2635, %v2651
  %v2668 = vsub.f32 %v2636, %v2652
  %v2669 = vsub.f32 %v2637, %v2653
  %v2670 = vsub.f32 %v2638, %v2654
  %v2671 = vsub.f32 %v2639, %v2655
  %v2672 = vsub.f32 %v2640, %v2656
  %v2673 = vsub.f32 %v2641, %v2657
  %v2674 = vsub.f32 %v2642, %v2658
  %v2675 = vsub.f32 %v2643, %v2659
  %v2676 = vmax.f32 %v2660, 0.0
  %v2677 = vmax.f32 %v2661, 0.0
  %v2678 = vmax.f32 %v2662, 0.0
  %v2679 = vmax.f32 %v2663, 0.0
  %v2680 = vmax.f32 %v2664, 0.0
  %v2681 = vmax.f32 %v2665, 0.0
  %v2682 = vmax.f32 %v2666, 0.0
  %v2683 = vmax.f32 %v2667, 0.0
  %v2684 = vmax.f32 %v2668, 0.0
  %v2685 = vmax.f32 %v2669, 0.0
  %v2686 = vmax.f32 %v2670, 0.0
  %v2687 = vmax.f32 %v2671, 0.0
  %v2688 = vmax.f32 %v2672, 0.0
  %v2689 = vmax.f32 %v2673, 0.0
  %v2690 = vmax.f32 %v2674, 0.0
  %v2691 = vmax.f32 %v2675, 0.0
  %v2692 = vsub.f32 %v2516, %v2564
  %v2693 = vsub.f32 %v2517, %v2565
  %v2694 = vsub.f32 %v2518, %v2566
  %v2695 = vsub.f32 %v2519, %v2567
  %v2696 = vsub.f32 %v2520, %v2568
  %v2697 = vsub.f32 %v2521, %v2569
  %v2698 = vsub.f32 %v2522, %v2570
  %v2699 = vsub.f32 %v2523, %v2571
  %v2700 = vsub.f32 %v2524, %v2572
  %v2701 = vsub.f32 %v2525, %v2573
  %v2702 = vsub.f32 %v2526, %v2574
  %v2703 = vsub.f32 %v2527, %v2575
  %v2704 = vsub.f32 %v2528, %v2576
  %v2705 = vsub.f32 %v2529, %v2577
  %v2706 = vsub.f32 %v2530, %v2578
  %v2707 = vsub.f32 %v2531, %v2579
  %v2708 = vadd.f32 %v2676, 1e-05
  %v2709 = vadd.f32 %v2677, 1e-05
  %v2710 = vadd.f32 %v2678, 1e-05
  %v2711 = vadd.f32 %v2679, 1e-05
  %v2712 = vadd.f32 %v2680, 1e-05
  %v2713 = vadd.f32 %v2681, 1e-05
  %v2714 = vadd.f32 %v2682, 1e-05
  %v2715 = vadd.f32 %v2683, 1e-05
  %v2716 = vadd.f32 %v2684, 1e-05
  %v2717 = vadd.f32 %v2685, 1e-05
  %v2718 = vadd.f32 %v2686, 1e-05
  %v2719 = vadd.f32 %v2687, 1e-05
  %v2720 = vadd.f32 %v2688, 1e-05
  %v2721 = vadd.f32 %v2689, 1e-05
  %v2722 = vadd.f32 %v2690, 1e-05
  %v2723 = vadd.f32 %v2691, 1e-05
  %v2724 = vrsqrt.pop %v2708
  %v2725 = vmul.f32 %v2724, %v2708
  %v2726 = vmul.f32 %v2725, %v2724
  %v2727 = vmul.f32 0.5, %v2726
  %v2728 = vsub.f32 1.5, %v2727
  %v2729 = vmul.f32 %v2724, %v2728
  %vm2730 = vweird.f32 %v2708
  %vm2731 = vweird.f32 %v2724
  %vm2732 = vmor %vm2730, %vm2731
  %v2733 = vsel %vm2732, %v2724, %v2729
  %v2734 = vrsqrt.pop %v2709
  %v2735 = vmul.f32 %v2734, %v2709
  %v2736 = vmul.f32 %v2735, %v2734
  %v2737 = vmul.f32 0.5, %v2736
  %v2738 = vsub.f32 1.5, %v2737
  %v2739 = vmul.f32 %v2734, %v2738
  %vm2740 = vweird.f32 %v2709
  %vm2741 = vweird.f32 %v2734
  %vm2742 = vmor %vm2740, %vm2741
  %v2743 = vsel %vm2742, %v2734, %v2739
  %v2744 = vrsqrt.pop %v2710
  %v2745 = vmul.f32 %v2744, %v2710
  %v2746 = vmul.f32 %v2745, %v2744
  %v2747 = vmul.f32 0.5, %v2746
  %v2748 = vsub.f32 1.5, %v2747
  %v2749 = vmul.f32 %v2744, %v2748
  %vm2750 = vweird.f32 %v2710
  %vm2751 = vweird.f32 %v2744
  %vm2752 = vmor %vm2750, %vm2751
  %v2753 = vsel %vm2752, %v2744, %v2749
  %v2754 = vrsqrt.pop %v2711
  %v2755 = vmul.f32 %v2754, %v2711
  %v2756 = vmul.f32 %v2755, %v2754
  %v2757 = vmul.f32 0.5, %v2756
  %v2758 = vsub.f32 1.5, %v2757
  %v2759 = vmul.f32 %v2754, %v2758
  %vm2760 = vweird.f32 %v2711
  %vm2761 = vweird.f32 %v2754
  %vm2762 = vmor %vm2760, %vm2761
  %v2763 = vsel %vm2762, %v2754, %v2759
  %v2764 = vrsqrt.pop %v2712
  %v2765 = vmul.f32 %v2764, %v2712
  %v2766 = vmul.f32 %v2765, %v2764
  %v2767 = vmul.f32 0.5, %v2766
  %v2768 = vsub.f32 1.5, %v2767
  %v2769 = vmul.f32 %v2764, %v2768
  %vm2770 = vweird.f32 %v2712
  %vm2771 = vweird.f32 %v2764
  %vm2772 = vmor %vm2770, %vm2771
  %v2773 = vsel %vm2772, %v2764, %v2769
  %v2774 = vrsqrt.pop %v2713
  %v2775 = vmul.f32 %v2774, %v2713
  %v2776 = vmul.f32 %v2775, %v2774
  %v2777 = vmul.f32 0.5, %v2776
  %v2778 = vsub.f32 1.5, %v2777
  %v2779 = vmul.f32 %v2774, %v2778
  %vm2780 = vweird.f32 %v2713
  %vm2781 = vweird.f32 %v2774
  %vm2782 = vmor %vm2780, %vm2781
  %v2783 = vsel %vm2782, %v2774, %v2779
  %v2784 = vrsqrt.pop %v2714
  %v2785 = vmul.f32 %v2784, %v2714
  %v2786 = vmul.f32 %v2785, %v2784
  %v2787 = vmul.f32 0.5, %v2786
  %v2788 = vsub.f32 1.5, %v2787
  %v2789 = vmul.f32 %v2784, %v2788
  %vm2790 = vweird.f32 %v2714
  %vm2791 = vweird.f32 %v2784
  %vm2792 = vmor %vm2790, %vm2791
  %v2793 = vsel %vm2792, %v2784, %v2789
  %v2794 = vrsqrt.pop %v2715
  %v2795 = vmul.f32 %v2794, %v2715
  %v2796 = vmul.f32 %v2795, %v2794
  %v2797 = vmul.f32 0.5, %v2796
  %v2798 = vsub.f32 1.5, %v2797
  %v2799 = vmul.f32 %v2794, %v2798
  %vm2800 = vweird.f32 %v2715
  %vm2801 = vweird.f32 %v2794
  %vm2802 = vmor %vm2800, %vm2801
  %v2803 = vsel %vm2802, %v2794, %v2799
  %v2804 = vrsqrt.pop %v2716
  %v2805 = vmul.f32 %v2804, %v2716
  %v2806 = vmul.f32 %v2805, %v2804
  %v2807 = vmul.f32 0.5, %v2806
  %v2808 = vsub.f32 1.5, %v2807
  %v2809 = vmul.f32 %v2804, %v2808
  %vm2810 = vweird.f32 %v2716
  %vm2811 = vweird.f32 %v2804
  %vm2812 = vmor %vm2810, %vm2811
  %v2813 = vsel %vm2812, %v2804, %v2809
  %v2814 = vrsqrt.pop %v2717
  %v2815 = vmul.f32 %v2814, %v2717
  %v2816 = vmul.f32 %v2815, %v2814
  %v2817 = vmul.f32 0.5, %v2816
  %v2818 = vsub.f32 1.5, %v2817
  %v2819 = vmul.f32 %v2814, %v2818
  %vm2820 = vweird.f32 %v2717
  %vm2821 = vweird.f32 %v2814
  %vm2822 = vmor %vm2820, %vm2821
  %v2823 = vsel %vm2822, %v2814, %v2819
  %v2824 = vrsqrt.pop %v2718
  %v2825 = vmul.f32 %v2824, %v2718
  %v2826 = vmul.f32 %v2825, %v2824
  %v2827 = vmul.f32 0.5, %v2826
  %v2828 = vsub.f32 1.5, %v2827
  %v2829 = vmul.f32 %v2824, %v2828
  %vm2830 = vweird.f32 %v2718
  %vm2831 = vweird.f32 %v2824
  %vm2832 = vmor %vm2830, %vm2831
  %v2833 = vsel %vm2832, %v2824, %v2829
  %v2834 = vrsqrt.pop %v2719
  %v2835 = vmul.f32 %v2834, %v2719
  %v2836 = vmul.f32 %v2835, %v2834
  %v2837 = vmul.f32 0.5, %v2836
  %v2838 = vsub.f32 1.5, %v2837
  %v2839 = vmul.f32 %v2834, %v2838
  %vm2840 = vweird.f32 %v2719
  %vm2841 = vweird.f32 %v2834
  %vm2842 = vmor %vm2840, %vm2841
  %v2843 = vsel %vm2842, %v2834, %v2839
  %v2844 = vrsqrt.pop %v2720
  %v2845 = vmul.f32 %v2844, %v2720
  %v2846 = vmul.f32 %v2845, %v2844
  %v2847 = vmul.f32 0.5, %v2846
  %v2848 = vsub.f32 1.5, %v2847
  %v2849 = vmul.f32 %v2844, %v2848
  %vm2850 = vweird.f32 %v2720
  %vm2851 = vweird.f32 %v2844
  %vm2852 = vmor %vm2850, %vm2851
  %v2853 = vsel %vm2852, %v2844, %v2849
  %v2854 = vrsqrt.pop %v2721
  %v2855 = vmul.f32 %v2854, %v2721
  %v2856 = vmul.f32 %v2855, %v2854
  %v2857 = vmul.f32 0.5, %v2856
  %v2858 = vsub.f32 1.5, %v2857
  %v2859 = vmul.f32 %v2854, %v2858
  %vm2860 = vweird.f32 %v2721
  %vm2861 = vweird.f32 %v2854
  %vm2862 = vmor %vm2860, %vm2861
  %v2863 = vsel %vm2862, %v2854, %v2859
  %v2864 = vrsqrt.pop %v2722
  %v2865 = vmul.f32 %v2864, %v2722
  %v2866 = vmul.f32 %v2865, %v2864
  %v2867 = vmul.f32 0.5, %v2866
  %v2868 = vsub.f32 1.5, %v2867
  %v2869 = vmul.f32 %v2864, %v2868
  %vm2870 = vweird.f32 %v2722
  %vm2871 = vweird.f32 %v2864
  %vm2872 = vmor %vm2870, %vm2871
  %v2873 = vsel %vm2872, %v2864, %v2869
  %v2874 = vrsqrt.pop %v2723
  %v2875 = vmul.f32 %v2874, %v2723
  %v2876 = vmul.f32 %v2875, %v2874
  %v2877 = vmul.f32 0.5, %v2876
  %v2878 = vsub.f32 1.5, %v2877
  %v2879 = vmul.f32 %v2874, %v2878
  %vm2880 = vweird.f32 %v2723
  %vm2881 = vweird.f32 %v2874
  %vm2882 = vmor %vm2880, %vm2881
  %v2883 = vsel %vm2882, %v2874, %v2879
  %v2884 = vmul.f32 %v2692, %v2733
  %v2885 = vmul.f32 %v2693, %v2743
  %v2886 = vmul.f32 %v2694, %v2753
  %v2887 = vmul.f32 %v2695, %v2763
  %v2888 = vmul.f32 %v2696, %v2773
  %v2889 = vmul.f32 %v2697, %v2783
  %v2890 = vmul.f32 %v2698, %v2793
  %v2891 = vmul.f32 %v2699, %v2803
  %v2892 = vmul.f32 %v2700, %v2813
  %v2893 = vmul.f32 %v2701, %v2823
  %v2894 = vmul.f32 %v2702, %v2833
  %v2895 = vmul.f32 %v2703, %v2843
  %v2896 = vmul.f32 %v2704, %v2853
  %v2897 = vmul.f32 %v2705, %v2863
  %v2898 = vmul.f32 %v2706, %v2873
  %v2899 = vmul.f32 %v2707, %v2883
  %v2900 = vperm.slane %v2263, 1
  %v2901 = vmul.f32 %v2884, %v2900
  %v2902 = vmul.f32 %v2885, %v2900
  %v2903 = vmul.f32 %v2886, %v2900
  %v2904 = vmul.f32 %v2887, %v2900
  %v2905 = vmul.f32 %v2888, %v2900
  %v2906 = vmul.f32 %v2889, %v2900
  %v2907 = vmul.f32 %v2890, %v2900
  %v2908 = vmul.f32 %v2891, %v2900
  %v2909 = vmul.f32 %v2892, %v2900
  %v2910 = vmul.f32 %v2893, %v2900
  %v2911 = vmul.f32 %v2894, %v2900
  %v2912 = vmul.f32 %v2895, %v2900
  %v2913 = vmul.f32 %v2896, %v2900
  %v2914 = vmul.f32 %v2897, %v2900
  %v2915 = vmul.f32 %v2898, %v2900
  %v2916 = vmul.f32 %v2899, %v2900
  %v2917 = vperm.slane %v2263, 2
  %v2918 = vadd.f32 %v2901, %v2917
  %v2919 = vadd.f32 %v2902, %v2917
  %v2920 = vadd.f32 %v2903, %v2917
  %v2921 = vadd.f32 %v2904, %v2917
  %v2922 = vadd.f32 %v2905, %v2917
  %v2923 = vadd.f32 %v2906, %v2917
  %v2924 = vadd.f32 %v2907, %v2917
  %v2925 = vadd.f32 %v2908, %v2917
  %v2926 = vadd.f32 %v2909, %v2917
  %v2927 = vadd.f32 %v2910, %v2917
  %v2928 = vadd.f32 %v2911, %v2917
  %v2929 = vadd.f32 %v2912, %v2917
  %v2930 = vadd.f32 %v2913, %v2917
  %v2931 = vadd.f32 %v2914, %v2917
  %v2932 = vadd.f32 %v2915, %v2917
  %v2933 = vadd.f32 %v2916, %v2917
  %v2934 = vmax.f32 %v2918, 0.0
  %v2935 = vmax.f32 %v2919, 0.0
  %v2936 = vmax.f32 %v2920, 0.0
  %v2937 = vmax.f32 %v2921, 0.0
  %v2938 = vmax.f32 %v2922, 0.0
  %v2939 = vmax.f32 %v2923, 0.0
  %v2940 = vmax.f32 %v2924, 0.0
  %v2941 = vmax.f32 %v2925, 0.0
  %v2942 = vmax.f32 %v2926, 0.0
  %v2943 = vmax.f32 %v2927, 0.0
  %v2944 = vmax.f32 %v2928, 0.0
  %v2945 = vmax.f32 %v2929, 0.0
  %v2946 = vmax.f32 %v2930, 0.0
  %v2947 = vmax.f32 %v2931, 0.0
  %v2948 = vmax.f32 %v2932, 0.0
  %v2949 = vmax.f32 %v2933, 0.0
  %v2950 = vpack.c.bf16 %v2935, %v2934
  %v2951 = vpack.c.bf16 %v2937, %v2936
  %v2952 = vpack.c.bf16 %v2939, %v2938
  %v2953 = vpack.c.bf16 %v2941, %v2940
  %v2954 = vpack.c.bf16 %v2943, %v2942
  %v2955 = vpack.c.bf16 %v2945, %v2944
  %v2956 = vpack.c.bf16 %v2947, %v2946
  %v2957 = vpack.c.bf16 %v2949, %v2948
  %v2958 = vld [vmem:[%s10] sm:$0xf]
  %v2959 = vld [vmem:[%s10 + $0x4] sm:$0xf]
  %v2962 = vunpack.c.l.b16 %v2958
  %v2963 = vunpack.c.l.b16 %v2959
  %v2964 = vpack.c.b16 %v2963, %v2962
  %2966 = vmatpush.bf16.msra.mxu0 %v2957
  %2967 = vmatpush.bf16.msra.mxu0 %v2956
  %2968 = vmatpush.bf16.msra.mxu0 %v2955
  %2969 = vmatpush.bf16.msra.mxu0 %v2954
  %2970 = vmatpush.bf16.msra.mxu0 %v2953
  %2971 = vmatpush.bf16.msra.mxu0 %v2952
  %2972 = vmatpush.bf16.msra.mxu0 %v2951
  %2973 = vmatpush.bf16.msra.mxu0 %v2950
  %2974 = vmatmul.bf16.gmra.mxu0 %v2964
  %v2975 = vpop.f32.mrf.mxu0
  %v2976 = vadd.f32 0.0, %v2975
  %v2977 = vpop.f32.mrf.mxu0
  %v2978 = vadd.f32 0.0, %v2977
  %2979 = vdwg.mxu0
  %v2980 = vld [vmem:[%s11] sm:$0xff]
  %v2981 = vld [vmem:[%s11 + $0x8] sm:$0xff]
  %v2982 = vmul.f32 %v2976, %v2980
  %v2983 = vmul.f32 %v2978, %v2981
  %v2984 = vld [vmem:[%s12] sm:$0xf]
  %v2985 = vld [vmem:[%s12 + $0x4] sm:$0xf]
  %v2986 = vld [vmem:[%s12 + $0x8] sm:$0xf]
  %v2987 = vld [vmem:[%s12 + $0xc] sm:$0xf]
  %v2988 = vld [vmem:[%s12 + $0x10] sm:$0xf]
  %v2989 = vld [vmem:[%s12 + $0x14] sm:$0xf]
  %v2990 = vld [vmem:[%s12 + $0x18] sm:$0xf]
  %v2991 = vld [vmem:[%s12 + $0x1c] sm:$0xf]
  %v2992 = vld [vmem:[%s12 + $0x20] sm:$0xf]
  %v2993 = vld [vmem:[%s12 + $0x24] sm:$0xf]
  %v2994 = vld [vmem:[%s12 + $0x28] sm:$0xf]
  %v2995 = vld [vmem:[%s12 + $0x2c] sm:$0xf]
  %v2996 = vld [vmem:[%s12 + $0x30] sm:$0xf]
  %v2997 = vld [vmem:[%s12 + $0x34] sm:$0xf]
  %v2998 = vld [vmem:[%s12 + $0x38] sm:$0xf]
  %v2999 = vld [vmem:[%s12 + $0x3c] sm:$0xf]
  %v3000 = vld [vmem:[%s12 + $0x40] sm:$0xf]
  %v3001 = vld [vmem:[%s12 + $0x44] sm:$0xf]
  %v3002 = vld [vmem:[%s12 + $0x48] sm:$0xf]
  %v3003 = vld [vmem:[%s12 + $0x4c] sm:$0xf]
  %v3004 = vld [vmem:[%s12 + $0x50] sm:$0xf]
  %v3005 = vld [vmem:[%s12 + $0x54] sm:$0xf]
  %v3006 = vld [vmem:[%s12 + $0x58] sm:$0xf]
  %v3007 = vld [vmem:[%s12 + $0x5c] sm:$0xf]
  %v3008 = vld [vmem:[%s12 + $0x60] sm:$0xf]
  %v3009 = vld [vmem:[%s12 + $0x64] sm:$0xf]
  %v3010 = vld [vmem:[%s12 + $0x68] sm:$0xf]
  %v3011 = vld [vmem:[%s12 + $0x6c] sm:$0xf]
  %v3012 = vld [vmem:[%s12 + $0x70] sm:$0xf]
  %v3013 = vld [vmem:[%s12 + $0x74] sm:$0xf]
  %v3014 = vld [vmem:[%s12 + $0x78] sm:$0xf]
  %v3015 = vld [vmem:[%s12 + $0x7c] sm:$0xf]
  %v3016 = vld [vmem:[%s13] sm:$0xf]
  %v3017 = vld [vmem:[%s13 + $0x4] sm:$0xf]
  %v3018 = vld [vmem:[%s13 + $0x8] sm:$0xf]
  %v3019 = vld [vmem:[%s13 + $0xc] sm:$0xf]
  %v3020 = vld [vmem:[%s13 + $0x10] sm:$0xf]
  %v3021 = vld [vmem:[%s13 + $0x14] sm:$0xf]
  %v3022 = vld [vmem:[%s13 + $0x18] sm:$0xf]
  %v3023 = vld [vmem:[%s13 + $0x1c] sm:$0xf]
  %v3024 = vld [vmem:[%s13 + $0x20] sm:$0xf]
  %v3025 = vld [vmem:[%s13 + $0x24] sm:$0xf]
  %v3026 = vld [vmem:[%s13 + $0x28] sm:$0xf]
  %v3027 = vld [vmem:[%s13 + $0x2c] sm:$0xf]
  %v3028 = vld [vmem:[%s13 + $0x30] sm:$0xf]
  %v3029 = vld [vmem:[%s13 + $0x34] sm:$0xf]
  %v3030 = vld [vmem:[%s13 + $0x38] sm:$0xf]
  %v3031 = vld [vmem:[%s13 + $0x3c] sm:$0xf]
  %v3032 = vld [vmem:[%s14] sm:$0xf]
  %v3033 = vpack.c.bf16 %v2982, %v2982
  %v3034 = vpack.c.bf16 %v2983, %v2983
  %v3051 = vunpack.c.l.b16 %v3000
  %v3052 = vunpack.c.l.b16 %v3001
  %v3053 = vunpack.c.l.b16 %v3002
  %v3054 = vunpack.c.l.b16 %v3003
  %v3055 = vunpack.c.l.b16 %v3004
  %v3056 = vunpack.c.l.b16 %v3005
  %v3057 = vunpack.c.l.b16 %v3006
  %v3058 = vunpack.c.l.b16 %v3007
  %v3059 = vunpack.c.l.b16 %v3008
  %v3060 = vunpack.c.l.b16 %v3009
  %v3061 = vunpack.c.l.b16 %v3010
  %v3062 = vunpack.c.l.b16 %v3011
  %v3063 = vunpack.c.l.b16 %v3012
  %v3064 = vunpack.c.l.b16 %v3013
  %v3065 = vunpack.c.l.b16 %v3014
  %v3066 = vunpack.c.l.b16 %v3015
  %v3067 = vpack.c.b16 %v3052, %v3051
  %v3068 = vpack.c.b16 %v3054, %v3053
  %v3069 = vpack.c.b16 %v3056, %v3055
  %v3070 = vpack.c.b16 %v3058, %v3057
  %v3071 = vpack.c.b16 %v3060, %v3059
  %v3072 = vpack.c.b16 %v3062, %v3061
  %v3073 = vpack.c.b16 %v3064, %v3063
  %v3074 = vpack.c.b16 %v3066, %v3065
  %3083 = vmatpush.bf16.msra.mxu0 %v3074
  %3084 = vmatpush.bf16.msra.mxu0 %v3073
  %3085 = vmatpush.bf16.msra.mxu0 %v3072
  %3086 = vmatpush.bf16.msra.mxu0 %v3071
  %3087 = vmatpush.bf16.msra.mxu0 %v3070
  %3088 = vmatpush.bf16.msra.mxu0 %v3069
  %3089 = vmatpush.bf16.msra.mxu0 %v3068
  %3090 = vmatpush.bf16.msra.mxu0 %v3067
  %3091 = vmatmul.bf16.gmra.mxu0 %v3034
  %v3092 = vpop.f32.mrf.mxu0
  %v3093 = vadd.f32 0.0, %v3092
  %v3094 = vpop.f32.mrf.mxu0
  %3095 = vdwg.mxu0
  %v3112 = vunpack.c.l.b16 %v2984
  %v3113 = vunpack.c.l.b16 %v2985
  %v3114 = vunpack.c.l.b16 %v2986
  %v3115 = vunpack.c.l.b16 %v2987
  %v3116 = vunpack.c.l.b16 %v2988
  %v3117 = vunpack.c.l.b16 %v2989
  %v3118 = vunpack.c.l.b16 %v2990
  %v3119 = vunpack.c.l.b16 %v2991
  %v3120 = vunpack.c.l.b16 %v2992
  %v3121 = vunpack.c.l.b16 %v2993
  %v3122 = vunpack.c.l.b16 %v2994
  %v3123 = vunpack.c.l.b16 %v2995
  %v3124 = vunpack.c.l.b16 %v2996
  %v3125 = vunpack.c.l.b16 %v2997
  %v3126 = vunpack.c.l.b16 %v2998
  %v3127 = vunpack.c.l.b16 %v2999
  %v3128 = vpack.c.b16 %v3113, %v3112
  %v3129 = vpack.c.b16 %v3115, %v3114
  %v3130 = vpack.c.b16 %v3117, %v3116
  %v3131 = vpack.c.b16 %v3119, %v3118
  %v3132 = vpack.c.b16 %v3121, %v3120
  %v3133 = vpack.c.b16 %v3123, %v3122
  %v3134 = vpack.c.b16 %v3125, %v3124
  %v3135 = vpack.c.b16 %v3127, %v3126
  %3144 = vmatpush.bf16.msra.mxu0 %v3135
  %3145 = vmatpush.bf16.msra.mxu0 %v3134
  %3146 = vmatpush.bf16.msra.mxu0 %v3133
  %3147 = vmatpush.bf16.msra.mxu0 %v3132
  %3148 = vmatpush.bf16.msra.mxu0 %v3131
  %3149 = vmatpush.bf16.msra.mxu0 %v3130
  %3150 = vmatpush.bf16.msra.mxu0 %v3129
  %3151 = vmatpush.bf16.msra.mxu0 %v3128
  %3152 = vmatmul.bf16.gmra.mxu0 %v3033
  %v3153 = vpop.f32.mrf.mxu0
  %v3154 = vadd.f32 %v3093, %v3153
  %v3155 = vpop.f32.mrf.mxu0
  %3156 = vdwg.mxu0
  %v3157 = vperm.slane %v3032, 0
  %v3158 = vadd.f32 %v3154, %v3157
  %v3159 = vmax.f32 %v3158, 0.0
  %v3160 = vpack.c.bf16 %v3159, %v3159
  %v3161 = vperm.slane %v3032, 1
  %v3178 = vunpack.c.l.b16 %v3016
  %v3179 = vunpack.c.l.b16 %v3017
  %v3180 = vunpack.c.l.b16 %v3018
  %v3181 = vunpack.c.l.b16 %v3019
  %v3182 = vunpack.c.l.b16 %v3020
  %v3183 = vunpack.c.l.b16 %v3021
  %v3184 = vunpack.c.l.b16 %v3022
  %v3185 = vunpack.c.l.b16 %v3023
  %v3186 = vunpack.c.l.b16 %v3024
  %v3187 = vunpack.c.l.b16 %v3025
  %v3188 = vunpack.c.l.b16 %v3026
  %v3189 = vunpack.c.l.b16 %v3027
  %v3190 = vunpack.c.l.b16 %v3028
  %v3191 = vunpack.c.l.b16 %v3029
  %v3192 = vunpack.c.l.b16 %v3030
  %v3193 = vunpack.c.l.b16 %v3031
  %v3194 = vpack.c.b16 %v3179, %v3178
  %v3195 = vpack.c.b16 %v3181, %v3180
  %v3196 = vpack.c.b16 %v3183, %v3182
  %v3197 = vpack.c.b16 %v3185, %v3184
  %v3198 = vpack.c.b16 %v3187, %v3186
  %v3199 = vpack.c.b16 %v3189, %v3188
  %v3200 = vpack.c.b16 %v3191, %v3190
  %v3201 = vpack.c.b16 %v3193, %v3192
  %3210 = vmatpush.bf16.msra.mxu0 %v3201
  %3211 = vmatpush.bf16.msra.mxu0 %v3200
  %3212 = vmatpush.bf16.msra.mxu0 %v3199
  %3213 = vmatpush.bf16.msra.mxu0 %v3198
  %3214 = vmatpush.bf16.msra.mxu0 %v3197
  %3215 = vmatpush.bf16.msra.mxu0 %v3196
  %3216 = vmatpush.bf16.msra.mxu0 %v3195
  %3217 = vmatpush.bf16.msra.mxu0 %v3194
  %3218 = vmatmul.bf16.gmra.mxu0 %v3160
  %v3219 = vpop.f32.mrf.mxu0
  %v3220 = vadd.f32 %v3161, %v3219
  %v3221 = vpop.f32.mrf.mxu0
  %3222 = vdwg.mxu0
  %v3223 = vmax.f32 %v3220, 0.0
  %v3224 = vperm.slane %v3032, 2
  %v3225 = vmul.f32 %v3223, %v3224
  %3226 = vadd.xlane.f32.xlu0 %v3225
  %v3227 = vpop.xlane.xlu0 %3226
  %v3228 = vperm.slane %v3032, 3
  %v3229 = vadd.f32 %v3227, %v3228
  %v3230 = vxor.u32 %v3229, 2147483648
  %v3231 = vmul.f32 %v3230, 1.442695
  %v3232 = vpow.pop %v3231
  %v3233 = vadd.f32 %v3232, 1.0
  %v3234 = vrcp.pop %v3233
  %v3235 = vmul.f32 %v3233, %v3234
  %v3236 = vsub.f32 1.0, %v3235
  %v3237 = vmul.f32 %v3234, %v3236
  %v3238 = vadd.f32 %v3234, %v3237
  %vm3239 = vweird.f32 %v3233
  %vm3240 = vweird.f32 %v3234
  %vm3241 = vmor %vm3239, %vm3240
  %v3242 = vsel %vm3241, %v3234, %v3238
  %v3243 = vand.u32 2147483647, %v3233
  %vm3244 = vcmp.eq.f32.partialorder %v3243, 8.507059e+37
  %v3245 = vand.u32 %v3233, 2147483648
  %v3246 = vor.u32 1.1754944e-38, %v3245
  %v3247 = vsel %vm3244, %v3246, %v3242
  %v3248 = vmul.f32 1.0, %v3247
  %3249 = vst [vmem:[%s15] sm:$0xff] %v3248
  // Predicated region
  $region62: #{improved_seal_forward.1} parent=0 // pred_check
    _
  $region63: #{improved_seal_forward.1} parent=0 // pred_check_branch
    %3251 = sbr.rel (0) target = $region65
  $region64: #{improved_seal_forward.1} parent=0 // pred_region
    _
  $region65: #{improved_seal_forward.1} parent=0 // pred_fallthru
    _
  // Predicated region
  $region66: #{improved_seal_forward.1} parent=0 // pred_check
    _
  $region67: #{improved_seal_forward.1} parent=0 // pred_check_branch
    %3253 = sbr.rel (0) target = $region69
  $region68: #{improved_seal_forward.1} parent=0 // pred_region
    _
  $region69: #{improved_seal_forward.1} parent=0 // pred_fallthru
    _

</llo_original>
